<compile_context>
chip_gen: v5e
topology: v5e:2x2
jax: 0.10.0
libtpu: 0.0.40
codegen_flags: <defaults>
</compile_context>

<pallas_src>
import functools

import jax
import jax.numpy as jnp
from jax import lax
from jax.experimental import pallas as pl
from jax.experimental.pallas import tpu as pltpu

_HIGHEST = jax.lax.Precision.HIGHEST


def _masked_attn_kernel(x_ref, wqkv_ref, o_ref,
                        *, n_nodes: int, seq_len: int,
                        n_heads: int, per_head_dim: int):
    NT = n_nodes * seq_len
    D = n_heads * per_head_dim

    x = x_ref[...]                      # (N*T, F) f32
    w = wqkv_ref[...]                   # (F, 3*D) f32; 1/sqrt(dh) folded into Wq

    # Fused QKV projection: one MXU push with M = N*T rows, N-dim = 3*D lanes.
    qkv = jnp.dot(x, w, preferred_element_type=jnp.float32,
                  precision=_HIGHEST)                          # (N*T, 3*D)
    q = qkv[:, :D]
    k = qkv[:, D:2 * D]
    v = qkv[:, 2 * D:]

    # Block-diagonal causal mask over the flattened (node, time) row axis:
    # flat row i = (n_i, t_i), flat col j = (n_j, t_j);
    # attend iff n_i == n_j and t_j <= t_i.
    # (Node index derived with unrolled compares -> no integer division.)
    ri = lax.broadcasted_iota(jnp.int32, (NT, NT), 0)
    ci = lax.broadcasted_iota(jnp.int32, (NT, NT), 1)
    node_r = jnp.zeros((NT, NT), jnp.int32)
    node_c = jnp.zeros((NT, NT), jnp.int32)
    for n in range(1, n_nodes):
        node_r = node_r + (ri >= n * seq_len).astype(jnp.int32)
        node_c = node_c + (ci >= n * seq_len).astype(jnp.int32)
    allowed = jnp.logical_and(node_r == node_c, ci <= ri)
    # Diagonal is always allowed -> no fully-masked softmax row -> -inf is
    # safe (matches the PyTorch module exactly).
    mask = jnp.where(allowed, jnp.float32(0.0), jnp.float32(-jnp.inf))

    # Per-head attention. n_heads is small & static; each iteration is a full
    # (N*T)-row 2-D matmul (scores already scaled via the folded Wq scale).
    head_outs = []
    for h in range(n_heads):
        lo = h * per_head_dim
        q_h = q[:, lo:lo + per_head_dim]            # (N*T, dh)
        k_h = k[:, lo:lo + per_head_dim]            # (N*T, dh)
        v_h = v[:, lo:lo + per_head_dim]            # (N*T, dh)

        # q_h @ k_h^T via dot_general (contract last dims; no explicit .T).
        s = lax.dot_general(q_h, k_h, (((1,), (1,)), ((), ())),
                            preferred_element_type=jnp.float32,
                            precision=_HIGHEST)                 # (N*T, N*T)
        s = s + mask

        # Numerically-stable softmax along the last axis (exact reciprocal:
        # one divide per row, then a broadcast multiply).
        m = jnp.max(s, axis=-1, keepdims=True)
        e = jnp.exp(s - m)
        denom = jnp.sum(e, axis=-1, keepdims=True)
        p = e * (jnp.float32(1.0) / denom)

        head_outs.append(jnp.dot(p, v_h, preferred_element_type=jnp.float32,
                                 precision=_HIGHEST))

    # Concatenate heads along lanes and emit ONE lane-dense store.
    out = jnp.concatenate(head_outs, axis=-1)       # (N*T, D)
    o_ref[...] = out.astype(o_ref.dtype)


def masked_self_attention_pallas(x, wq_t, wk_t, wv_t, *, n_heads: int):
    """x: (N, T, F); w*_t: (F, n_heads*per_head_dim) already transposed."""
    N, T, F = x.shape
    D = wq_t.shape[1]
    per_head_dim = D // n_heads

    # Fold the 1/sqrt(per_head_dim) score scale into Wq and fuse QKV weights
    # into a single (F, 3*D) slab (host-side, outside the kernel).
    scale = jnp.float32(per_head_dim) ** -0.5
    wqkv = jnp.concatenate([wq_t.astype(jnp.float32) * scale,
                            wk_t.astype(jnp.float32),
                            wv_t.astype(jnp.float32)], axis=1)         # (F, 3*D)

    # Flatten nodes into the matmul M-dim; the kernel handles the per-node
    # causal structure with a block-diagonal mask.
    x2 = x.reshape(N * T, F)

    kernel = functools.partial(_masked_attn_kernel,
                               n_nodes=N, seq_len=T,
                               n_heads=n_heads, per_head_dim=per_head_dim)

    out2 = pl.pallas_call(
        kernel,
        out_shape=jax.ShapeDtypeStruct((N * T, D), x.dtype),
        in_specs=[
            pl.BlockSpec(memory_space=pltpu.MemorySpace.VMEM),   # x (N*T, F)
            pl.BlockSpec(memory_space=pltpu.MemorySpace.VMEM),   # Wqkv (F, 3*D)
        ],
        out_specs=pl.BlockSpec(memory_space=pltpu.MemorySpace.VMEM),
    )(x2, wqkv)

    return out2.reshape(N, T, D)


def masked_self_attention_ref(x, wq_t, wk_t, wv_t, *, n_heads: int):
    """Pure-JAX reference mirroring the PyTorch forward (concat aggregate)."""
    N, T, F = x.shape
    D = wq_t.shape[1]
    dh = D // n_heads
    Q = jnp.matmul(x, wq_t, precision=_HIGHEST)
    K = jnp.matmul(x, wk_t, precision=_HIGHEST)
    V = jnp.matmul(x, wv_t, precision=_HIGHEST)
    Q = Q.reshape(N, T, n_heads, dh).transpose(0, 2, 1, 3)             # (N,H,T,dh)
    K = K.reshape(N, T, n_heads, dh).transpose(0, 2, 3, 1)             # (N,H,dh,T)
    V = V.reshape(N, T, n_heads, dh).transpose(0, 2, 1, 3)             # (N,H,T,dh)
    scores = jnp.einsum('nhtd,nhds->nhts', Q, K,
                        precision=_HIGHEST) / jnp.sqrt(jnp.float32(dh))
    mask = jnp.where(jnp.triu(jnp.ones((T, T), bool), k=1), -jnp.inf, 0.0)
    scores = scores + mask
    p = jax.nn.softmax(scores, axis=-1)
    out = jnp.einsum('nhts,nhsd->nhtd', p, V, precision=_HIGHEST)      # (N,H,T,dh)
    return out.transpose(0, 2, 1, 3).reshape(N, T, D)


if __name__ == "__main__":
    # Small shapes consistent with the module's forward:
    # nodes_num=4, T_max=8, input_dim=32, output_dim=32, n_heads=4 -> per_head_dim=8
    N, T, F = 4, 8, 32
    output_dim, n_heads = 32, 4

    key = jax.random.PRNGKey(0)
    kx, kq, kk, kv = jax.random.split(key, 4)
    x = jax.random.normal(kx, (N, T, F), dtype=jnp.float32)
    # Deterministic "Linear(no bias)" weights, stored pre-transposed as (F, D).
    wq_t = jax.random.normal(kq, (F, output_dim), dtype=jnp.float32) * 0.1
    wk_t = jax.random.normal(kk, (F, output_dim), dtype=jnp.float32) * 0.1
    wv_t = jax.random.normal(kv, (F, output_dim), dtype=jnp.float32) * 0.1

    out = masked_self_attention_pallas(x, wq_t, wk_t, wv_t, n_heads=n_heads)
    out = jax.block_until_ready(out)

    ref = masked_self_attention_ref(x, wq_t, wk_t, wv_t, n_heads=n_heads)
    assert out.shape == (N, T, output_dim)
    assert bool(jnp.all(jnp.isfinite(out))), "non-finite values in output"
    assert jnp.allclose(out, ref, atol=1e-3, rtol=1e-3), "mismatch vs reference"

    print("KERNEL_OK")
</pallas_src>

<mosaic_0001>
module attributes {stable_mosaic.version = 11 : i64} {
  func.func @_masked_attn_kernel(%arg0: memref<32x32xf32, #tpu.memory_space<vmem>>, %arg1: memref<32x96xf32, #tpu.memory_space<vmem>>, %arg2: memref<32x32xf32, #tpu.memory_space<vmem>>) attributes {dimension_semantics = [], scalar_prefetch = 0 : i64, scratch_operands = 0 : i64, tpu.core_type = #tpu.core_type<tc>} {
    %c0 = arith.constant 0 : index
    %c0_0 = arith.constant 0 : index
    %0 = vector.load %arg0[%c0, %c0_0] : memref<32x32xf32, #tpu.memory_space<vmem>>, vector<32x32xf32>
    %c0_1 = arith.constant 0 : index
    %c0_2 = arith.constant 0 : index
    %1 = vector.load %arg1[%c0_1, %c0_2] : memref<32x96xf32, #tpu.memory_space<vmem>>, vector<32x96xf32>
    %cst = arith.constant dense<0.000000e+00> : vector<32x96xf32>
    %2 = tpu.matmul %0, %1, %cst {dimension_numbers = #tpu.dot_dimension_numbers<[1], [0], [0], [1], [0, 0, 1, 1], [], []>, precision = #tpu.contract_precision<fp32>} : vector<32x32xf32>, vector<32x96xf32>, vector<32x96xf32> -> vector<32x96xf32>
    %3 = vector.extract_strided_slice %2 {offsets = [0, 0], sizes = [32, 32], strides = [1, 1]} : vector<32x96xf32> to vector<32x32xf32>
    %4 = vector.extract_strided_slice %2 {offsets = [0, 32], sizes = [32, 32], strides = [1, 1]} : vector<32x96xf32> to vector<32x32xf32>
    %5 = vector.extract_strided_slice %2 {offsets = [0, 64], sizes = [32, 32], strides = [1, 1]} : vector<32x96xf32> to vector<32x32xf32>
    %6 = tpu.iota {dimensions = array<i32: 0>} : vector<32x32xi32>
    %7 = tpu.iota {dimensions = array<i32: 1>} : vector<32x32xi32>
    %c0_i32 = arith.constant 0 : i32
    %8 = vector.broadcast %c0_i32 : i32 to vector<32x32xi32>
    %c0_i32_3 = arith.constant 0 : i32
    %9 = vector.broadcast %c0_i32_3 : i32 to vector<32x32xi32>
    %c8_i32 = arith.constant 8 : i32
    %10 = vector.broadcast %c8_i32 : i32 to vector<32x32xi32>
    %11 = arith.cmpi sge, %6, %10 : vector<32x32xi32>
    %12 = arith.extui %11 : vector<32x32xi1> to vector<32x32xi32>
    %13 = arith.addi %8, %12 : vector<32x32xi32>
    %c8_i32_4 = arith.constant 8 : i32
    %14 = vector.broadcast %c8_i32_4 : i32 to vector<32x32xi32>
    %15 = arith.cmpi sge, %7, %14 : vector<32x32xi32>
    %16 = arith.extui %15 : vector<32x32xi1> to vector<32x32xi32>
    %17 = arith.addi %9, %16 : vector<32x32xi32>
    %c16_i32 = arith.constant 16 : i32
    %18 = vector.broadcast %c16_i32 : i32 to vector<32x32xi32>
    %19 = arith.cmpi sge, %6, %18 : vector<32x32xi32>
    %20 = arith.extui %19 : vector<32x32xi1> to vector<32x32xi32>
    %21 = arith.addi %13, %20 : vector<32x32xi32>
    %c16_i32_5 = arith.constant 16 : i32
    %22 = vector.broadcast %c16_i32_5 : i32 to vector<32x32xi32>
    %23 = arith.cmpi sge, %7, %22 : vector<32x32xi32>
    %24 = arith.extui %23 : vector<32x32xi1> to vector<32x32xi32>
    %25 = arith.addi %17, %24 : vector<32x32xi32>
    %c24_i32 = arith.constant 24 : i32
    %26 = vector.broadcast %c24_i32 : i32 to vector<32x32xi32>
    %27 = arith.cmpi sge, %6, %26 : vector<32x32xi32>
    %28 = arith.extui %27 : vector<32x32xi1> to vector<32x32xi32>
    %29 = arith.addi %21, %28 : vector<32x32xi32>
    %c24_i32_6 = arith.constant 24 : i32
    %30 = vector.broadcast %c24_i32_6 : i32 to vector<32x32xi32>
    %31 = arith.cmpi sge, %7, %30 : vector<32x32xi32>
    %32 = arith.extui %31 : vector<32x32xi1> to vector<32x32xi32>
    %33 = arith.addi %25, %32 : vector<32x32xi32>
    %34 = arith.cmpi eq, %29, %33 : vector<32x32xi32>
    %35 = arith.cmpi sle, %7, %6 : vector<32x32xi32>
    %36 = arith.andi %34, %35 : vector<32x32xi1>
    %cst_7 = arith.constant 0.000000e+00 : f32
    %cst_8 = arith.constant 0xFF800000 : f32
    %37 = vector.broadcast %cst_7 : f32 to vector<32x32xf32>
    %38 = vector.broadcast %cst_8 : f32 to vector<32x32xf32>
    %39 = arith.select %36, %37, %38 : vector<32x32xi1>, vector<32x32xf32>
    %40 = vector.extract_strided_slice %3 {offsets = [0, 0], sizes = [32, 8], strides = [1, 1]} : vector<32x32xf32> to vector<32x8xf32>
    %41 = vector.extract_strided_slice %4 {offsets = [0, 0], sizes = [32, 8], strides = [1, 1]} : vector<32x32xf32> to vector<32x8xf32>
    %42 = vector.extract_strided_slice %5 {offsets = [0, 0], sizes = [32, 8], strides = [1, 1]} : vector<32x32xf32> to vector<32x8xf32>
    %cst_9 = arith.constant dense<0.000000e+00> : vector<32x32xf32>
    %43 = tpu.matmul %40, %41, %cst_9 {dimension_numbers = #tpu.dot_dimension_numbers<[1], [1], [0], [0], [0, 0, 1, 0], [], []>, precision = #tpu.contract_precision<fp32>} : vector<32x8xf32>, vector<32x8xf32>, vector<32x32xf32> -> vector<32x32xf32>
    %44 = arith.addf %43, %39 : vector<32x32xf32>
    %cst_10 = arith.constant dense<0xFF800000> : vector<32xf32>
    %45 = vector.multi_reduction <maximumf>, %44, %cst_10 [1] : vector<32x32xf32> to vector<32xf32>
    %46 = vector.shape_cast %45 : vector<32xf32> to vector<32x1xf32>
    %47 = vector.broadcast %46 : vector<32x1xf32> to vector<32x32xf32>
    %48 = arith.subf %44, %47 : vector<32x32xf32>
    %49 = math.exp %48 : vector<32x32xf32>
    %cst_11 = arith.constant dense<0.000000e+00> : vector<32xf32>
    %50 = vector.multi_reduction <add>, %49, %cst_11 [1] : vector<32x32xf32> to vector<32xf32>
    %51 = vector.shape_cast %50 : vector<32xf32> to vector<32x1xf32>
    %cst_12 = arith.constant 1.000000e+00 : f32
    %52 = vector.broadcast %cst_12 : f32 to vector<32x1xf32>
    %53 = arith.divf %52, %51 : vector<32x1xf32>
    %54 = vector.broadcast %53 : vector<32x1xf32> to vector<32x32xf32>
    %55 = arith.mulf %49, %54 : vector<32x32xf32>
    %cst_13 = arith.constant dense<0.000000e+00> : vector<32x8xf32>
    %56 = tpu.matmul %55, %42, %cst_13 {dimension_numbers = #tpu.dot_dimension_numbers<[1], [0], [0], [1], [0, 0, 1, 1], [], []>, precision = #tpu.contract_precision<fp32>} : vector<32x32xf32>, vector<32x8xf32>, vector<32x8xf32> -> vector<32x8xf32>
    %57 = vector.extract_strided_slice %3 {offsets = [0, 8], sizes = [32, 8], strides = [1, 1]} : vector<32x32xf32> to vector<32x8xf32>
    %58 = vector.extract_strided_slice %4 {offsets = [0, 8], sizes = [32, 8], strides = [1, 1]} : vector<32x32xf32> to vector<32x8xf32>
    %59 = vector.extract_strided_slice %5 {offsets = [0, 8], sizes = [32, 8], strides = [1, 1]} : vector<32x32xf32> to vector<32x8xf32>
    %cst_14 = arith.constant dense<0.000000e+00> : vector<32x32xf32>
    %60 = tpu.matmul %57, %58, %cst_14 {dimension_numbers = #tpu.dot_dimension_numbers<[1], [1], [0], [0], [0, 0, 1, 0], [], []>, precision = #tpu.contract_precision<fp32>} : vector<32x8xf32>, vector<32x8xf32>, vector<32x32xf32> -> vector<32x32xf32>
    %61 = arith.addf %60, %39 : vector<32x32xf32>
    %cst_15 = arith.constant dense<0xFF800000> : vector<32xf32>
    %62 = vector.multi_reduction <maximumf>, %61, %cst_15 [1] : vector<32x32xf32> to vector<32xf32>
    %63 = vector.shape_cast %62 : vector<32xf32> to vector<32x1xf32>
    %64 = vector.broadcast %63 : vector<32x1xf32> to vector<32x32xf32>
    %65 = arith.subf %61, %64 : vector<32x32xf32>
    %66 = math.exp %65 : vector<32x32xf32>
    %cst_16 = arith.constant dense<0.000000e+00> : vector<32xf32>
    %67 = vector.multi_reduction <add>, %66, %cst_16 [1] : vector<32x32xf32> to vector<32xf32>
    %68 = vector.shape_cast %67 : vector<32xf32> to vector<32x1xf32>
    %cst_17 = arith.constant 1.000000e+00 : f32
    %69 = vector.broadcast %cst_17 : f32 to vector<32x1xf32>
    %70 = arith.divf %69, %68 : vector<32x1xf32>
    %71 = vector.broadcast %70 : vector<32x1xf32> to vector<32x32xf32>
    %72 = arith.mulf %66, %71 : vector<32x32xf32>
    %cst_18 = arith.constant dense<0.000000e+00> : vector<32x8xf32>
    %73 = tpu.matmul %72, %59, %cst_18 {dimension_numbers = #tpu.dot_dimension_numbers<[1], [0], [0], [1], [0, 0, 1, 1], [], []>, precision = #tpu.contract_precision<fp32>} : vector<32x32xf32>, vector<32x8xf32>, vector<32x8xf32> -> vector<32x8xf32>
    %74 = vector.extract_strided_slice %3 {offsets = [0, 16], sizes = [32, 8], strides = [1, 1]} : vector<32x32xf32> to vector<32x8xf32>
    %75 = vector.extract_strided_slice %4 {offsets = [0, 16], sizes = [32, 8], strides = [1, 1]} : vector<32x32xf32> to vector<32x8xf32>
    %76 = vector.extract_strided_slice %5 {offsets = [0, 16], sizes = [32, 8], strides = [1, 1]} : vector<32x32xf32> to vector<32x8xf32>
    %cst_19 = arith.constant dense<0.000000e+00> : vector<32x32xf32>
    %77 = tpu.matmul %74, %75, %cst_19 {dimension_numbers = #tpu.dot_dimension_numbers<[1], [1], [0], [0], [0, 0, 1, 0], [], []>, precision = #tpu.contract_precision<fp32>} : vector<32x8xf32>, vector<32x8xf32>, vector<32x32xf32> -> vector<32x32xf32>
    %78 = arith.addf %77, %39 : vector<32x32xf32>
    %cst_20 = arith.constant dense<0xFF800000> : vector<32xf32>
    %79 = vector.multi_reduction <maximumf>, %78, %cst_20 [1] : vector<32x32xf32> to vector<32xf32>
    %80 = vector.shape_cast %79 : vector<32xf32> to vector<32x1xf32>
    %81 = vector.broadcast %80 : vector<32x1xf32> to vector<32x32xf32>
    %82 = arith.subf %78, %81 : vector<32x32xf32>
    %83 = math.exp %82 : vector<32x32xf32>
    %cst_21 = arith.constant dense<0.000000e+00> : vector<32xf32>
    %84 = vector.multi_reduction <add>, %83, %cst_21 [1] : vector<32x32xf32> to vector<32xf32>
    %85 = vector.shape_cast %84 : vector<32xf32> to vector<32x1xf32>
    %cst_22 = arith.constant 1.000000e+00 : f32
    %86 = vector.broadcast %cst_22 : f32 to vector<32x1xf32>
    %87 = arith.divf %86, %85 : vector<32x1xf32>
    %88 = vector.broadcast %87 : vector<32x1xf32> to vector<32x32xf32>
    %89 = arith.mulf %83, %88 : vector<32x32xf32>
    %cst_23 = arith.constant dense<0.000000e+00> : vector<32x8xf32>
    %90 = tpu.matmul %89, %76, %cst_23 {dimension_numbers = #tpu.dot_dimension_numbers<[1], [0], [0], [1], [0, 0, 1, 1], [], []>, precision = #tpu.contract_precision<fp32>} : vector<32x32xf32>, vector<32x8xf32>, vector<32x8xf32> -> vector<32x8xf32>
    %91 = vector.extract_strided_slice %3 {offsets = [0, 24], sizes = [32, 8], strides = [1, 1]} : vector<32x32xf32> to vector<32x8xf32>
    %92 = vector.extract_strided_slice %4 {offsets = [0, 24], sizes = [32, 8], strides = [1, 1]} : vector<32x32xf32> to vector<32x8xf32>
    %93 = vector.extract_strided_slice %5 {offsets = [0, 24], sizes = [32, 8], strides = [1, 1]} : vector<32x32xf32> to vector<32x8xf32>
    %cst_24 = arith.constant dense<0.000000e+00> : vector<32x32xf32>
    %94 = tpu.matmul %91, %92, %cst_24 {dimension_numbers = #tpu.dot_dimension_numbers<[1], [1], [0], [0], [0, 0, 1, 0], [], []>, precision = #tpu.contract_precision<fp32>} : vector<32x8xf32>, vector<32x8xf32>, vector<32x32xf32> -> vector<32x32xf32>
    %95 = arith.addf %94, %39 : vector<32x32xf32>
    %cst_25 = arith.constant dense<0xFF800000> : vector<32xf32>
    %96 = vector.multi_reduction <maximumf>, %95, %cst_25 [1] : vector<32x32xf32> to vector<32xf32>
    %97 = vector.shape_cast %96 : vector<32xf32> to vector<32x1xf32>
    %98 = vector.broadcast %97 : vector<32x1xf32> to vector<32x32xf32>
    %99 = arith.subf %95, %98 : vector<32x32xf32>
    %100 = math.exp %99 : vector<32x32xf32>
    %cst_26 = arith.constant dense<0.000000e+00> : vector<32xf32>
    %101 = vector.multi_reduction <add>, %100, %cst_26 [1] : vector<32x32xf32> to vector<32xf32>
    %102 = vector.shape_cast %101 : vector<32xf32> to vector<32x1xf32>
    %cst_27 = arith.constant 1.000000e+00 : f32
    %103 = vector.broadcast %cst_27 : f32 to vector<32x1xf32>
    %104 = arith.divf %103, %102 : vector<32x1xf32>
    %105 = vector.broadcast %104 : vector<32x1xf32> to vector<32x32xf32>
    %106 = arith.mulf %100, %105 : vector<32x32xf32>
    %cst_28 = arith.constant dense<0.000000e+00> : vector<32x8xf32>
    %107 = tpu.matmul %106, %93, %cst_28 {dimension_numbers = #tpu.dot_dimension_numbers<[1], [0], [0], [1], [0, 0, 1, 1], [], []>, precision = #tpu.contract_precision<fp32>} : vector<32x32xf32>, vector<32x8xf32>, vector<32x8xf32> -> vector<32x8xf32>
    %108 = tpu.concatenate %56, %73, %90, %107 in 1 : vector<32x8xf32>, vector<32x8xf32>, vector<32x8xf32>, vector<32x8xf32> -> vector<32x32xf32>
    %c0_29 = arith.constant 0 : index
    %c0_30 = arith.constant 0 : index
    %109 = vector.load %arg2[%c0_29, %c0_30] : memref<32x32xf32, #tpu.memory_space<vmem>>, vector<32x32xf32>
    tpu.vector_store %arg2[%c0_29, %c0_30], %108 {strides = array<i32>} : memref<32x32xf32, #tpu.memory_space<vmem>>, vector<32x32xf32>,
    return
  }
}

</mosaic_0001>

<llo_original>
// kernel: tpu_custom_call.1
$region0: #{tpu_custom_call.1}
  #allocation0 [shape = 'u32[]', space=smem, size = 0x4, offset = 0x4, fixed_abs, tag = 'smem constant byte address 0x4 - core index']
  #allocation1 [shape = 'u32[72,128]{1,0:T(1,128)}', space=vmem, size = 0x9000, scoped, tag = 'internal scratch']
  %s0 = inlined_call_operand.hbm [shape: f32[32,32], index: 0, kind: input, shape index: {}]
  %s1 = inlined_call_operand.hbm [shape: f32[32,96], index: 1, kind: input, shape index: {}]
  %s2 = inlined_call_operand.hbm [shape: f32[32,32], index: 2, kind: output, shape index: {}]
  %s3 = sld [smem:[#allocation0]]
  $region26: #{tpu_custom_call.1} parent=0
    _
  %s5 = ssub.s32 1, %s3
  %s6 = scalar_select 0, %s5, %s3
  $region1: #{tpu_custom_call.1} parent=0
    #allocation2 [shape = 'u8[16384]{0}', space=vmem, size = 0x4000, scoped, tag = 'input window, operand 0, single buffered']
    #allocation3 [shape = 's32[1]{0}', space=sflag, size = 0x4, scoped, tag = 'scoped memory for tpu_custom_call.1']
    #allocation4 [shape = 's32[1]{0}', space=sflag, size = 0x4, scoped, tag = 'scoped memory for tpu_custom_call.1']
    #allocation5 [shape = 'u8[16384]{0}', space=vmem, size = 0x4000, scoped, tag = 'input window, operand 1, single buffered']
    #allocation6 [shape = 's32[1]{0}', space=sflag, size = 0x4, scoped, tag = 'scoped memory for tpu_custom_call.1']
    #allocation7 [shape = 'u8[16384]{0}', space=vmem, size = 0x4000, scoped, tag = 'output window, operand 0, single buffered']
    %7 = vsyncpa [#allocation3], 0
    %8 = vsyncpa [#allocation6], 0
    %9 = vsyncpa [#allocation4], 0
    // Predicated region
    $region2: #{tpu_custom_call.1} parent=1 // pred_check
      _
    $region3: #{tpu_custom_call.1} parent=1 // pred_check_branch
      %11 = sbr.rel (0) target = $region5
    $region4: #{tpu_custom_call.1} parent=1 // pred_region
      %13 = vsyncadd [#allocation3], 0
      %s14 = sshll.u32 %s0, 4
      %s15 = int_to_ptr.hbm [resolvable:$true] %s14
      %s16 = sshll.u32 [#allocation2], 4
      %s17 = int_to_ptr.vmem [resolvable:$true] %s16
      %22 = dma.hbm_to_vmem [thread:$0]  %s15, 512, %s17, [#allocation3], 128, 128, 8
    $region5: #{tpu_custom_call.1} parent=1 // pred_fallthru
      _
    // Predicated region
    $region6: #{tpu_custom_call.1} parent=1 // pred_check
      _
    $region7: #{tpu_custom_call.1} parent=1 // pred_check_branch
      %24 = sbr.rel (0) target = $region9
    $region8: #{tpu_custom_call.1} parent=1 // pred_region
      %26 = vsyncadd [#allocation6], 0
      %s27 = sshll.u32 %s1, 4
      %s28 = int_to_ptr.hbm [resolvable:$true] %s27
      %s29 = sshll.u32 [#allocation5], 4
      %s30 = int_to_ptr.vmem [resolvable:$true] %s29
      %35 = dma.hbm_to_vmem [thread:$0]  %s28, 512, %s30, [#allocation6], 128, 128, 8
    $region9: #{tpu_custom_call.1} parent=1 // pred_fallthru
      _
    // Predicated region
    $region10: #{tpu_custom_call.1} parent=1 // pred_check
      _
    $region11: #{tpu_custom_call.1} parent=1 // pred_check_branch
      %37 = sbr.rel (0) target = $region13
    $region12: #{tpu_custom_call.1} parent=1 // pred_region
      %39 = dma.done [#allocation3], 512
    $region13: #{tpu_custom_call.1} parent=1 // pred_fallthru
      _
    // Predicated region
    $region14: #{tpu_custom_call.1} parent=1 // pred_check
      _
    $region15: #{tpu_custom_call.1} parent=1 // pred_check_branch
      %41 = sbr.rel (0) target = $region17
    $region16: #{tpu_custom_call.1} parent=1 // pred_region
      %43 = dma.done [#allocation6], 512
    $region17: #{tpu_custom_call.1} parent=1 // pred_fallthru
      _
    %v44 = vld [vmem:[#allocation2] sm:$0xff]
    %v45 = vld [vmem:[#allocation2 + $0x8] sm:$0xff]
    %v46 = vld [vmem:[#allocation2 + $0x10] sm:$0xff]
    %v47 = vld [vmem:[#allocation2 + $0x18] sm:$0xff]
    %v48 = vld [vmem:[#allocation5] sm:$0xff]
    %v49 = vld [vmem:[#allocation5 + $0x8] sm:$0xff]
    %v50 = vld [vmem:[#allocation5 + $0x10] sm:$0xff]
    %v51 = vld [vmem:[#allocation5 + $0x18] sm:$0xff]
    %vm52 = vcmask 261120
    %v54 = vsel %vm52, %v44, 0
    %v57 = vsel %vm52, %v45, 0
    %v60 = vsel %vm52, %v46, 0
    %v63 = vsel %vm52, %v47, 0
    %65 = vmatpush.msra.mxu0 0.0
    %66 = vmatpush.msra.mxu0 0.0
    %67 = vmatpush.msra.mxu0 0.0
    %68 = vmatpush.msra.mxu0 0.0
    %69 = vmatpush.msra.mxu0 0.0
    %70 = vmatpush.msra.mxu0 0.0
    %71 = vmatpush.msra.mxu0 0.0
    %72 = vmatpush.msra.mxu0 0.0
    %73 = vmatpush.msra.mxu0 0.0
    %74 = vmatpush.msra.mxu0 0.0
    %75 = vmatpush.msra.mxu0 0.0
    %76 = vmatpush.msra.mxu0 0.0
    %v77 = vand.u32 %v51, 4294901760
    %78 = vmatpush.msra.mxu0 %v77
    %v79 = vand.u32 %v50, 4294901760
    %80 = vmatpush.msra.mxu0 %v79
    %v81 = vand.u32 %v49, 4294901760
    %82 = vmatpush.msra.mxu0 %v81
    %v83 = vand.u32 %v48, 4294901760
    %84 = vmatpush.msra.mxu0 %v83
    %v85 = vand.u32 %v54, 4294901760
    %v86 = vsub.f32 %v54, %v85
    %v87 = vand.u32 %v86, 4294901760
    %v88 = vsub.f32 %v86, %v87
    %v89 = vand.u32 %v88, 4294901760
    %90 = vmatmul.f32.gmra.mxu0 %v89
    %v91 = vpop.f32.mrf.mxu0
    %v92 = vadd.f32 0.0, %v91
    %v93 = vand.u32 %v57, 4294901760
    %v94 = vsub.f32 %v57, %v93
    %v95 = vand.u32 %v94, 4294901760
    %v96 = vsub.f32 %v94, %v95
    %v97 = vand.u32 %v96, 4294901760
    %98 = vmatmul.f32.gmra.mxu0 %v97
    %v99 = vpop.f32.mrf.mxu0
    %v100 = vadd.f32 0.0, %v99
    %v101 = vand.u32 %v60, 4294901760
    %v102 = vsub.f32 %v60, %v101
    %v103 = vand.u32 %v102, 4294901760
    %v104 = vsub.f32 %v102, %v103
    %v105 = vand.u32 %v104, 4294901760
    %106 = vmatmul.f32.gmra.mxu0 %v105
    %v107 = vpop.f32.mrf.mxu0
    %v108 = vadd.f32 0.0, %v107
    %v109 = vand.u32 %v63, 4294901760
    %v110 = vsub.f32 %v63, %v109
    %v111 = vand.u32 %v110, 4294901760
    %v112 = vsub.f32 %v110, %v111
    %v113 = vand.u32 %v112, 4294901760
    %114 = vmatmul.f32.gmra.mxu0 %v113
    %v115 = vpop.f32.mrf.mxu0
    %v116 = vadd.f32 0.0, %v115
    %117 = vdwg.mxu0
    %118 = vmatpush.msra.mxu0 0.0
    %119 = vmatpush.msra.mxu0 0.0
    %120 = vmatpush.msra.mxu0 0.0
    %121 = vmatpush.msra.mxu0 0.0
    %122 = vmatpush.msra.mxu0 0.0
    %123 = vmatpush.msra.mxu0 0.0
    %124 = vmatpush.msra.mxu0 0.0
    %125 = vmatpush.msra.mxu0 0.0
    %126 = vmatpush.msra.mxu0 0.0
    %127 = vmatpush.msra.mxu0 0.0
    %128 = vmatpush.msra.mxu0 0.0
    %129 = vmatpush.msra.mxu0 0.0
    %v130 = vand.u32 %v51, 4294901760
    %v131 = vsub.f32 %v51, %v130
    %v132 = vand.u32 %v131, 4294901760
    %v133 = vsub.f32 %v131, %v132
    %v134 = vand.u32 %v133, 4294901760
    %135 = vmatpush.msra.mxu0 %v134
    %v136 = vand.u32 %v50, 4294901760
    %v137 = vsub.f32 %v50, %v136
    %v138 = vand.u32 %v137, 4294901760
    %v139 = vsub.f32 %v137, %v138
    %v140 = vand.u32 %v139, 4294901760
    %141 = vmatpush.msra.mxu0 %v140
    %v142 = vand.u32 %v49, 4294901760
    %v143 = vsub.f32 %v49, %v142
    %v144 = vand.u32 %v143, 4294901760
    %v145 = vsub.f32 %v143, %v144
    %v146 = vand.u32 %v145, 4294901760
    %147 = vmatpush.msra.mxu0 %v146
    %v148 = vand.u32 %v48, 4294901760
    %v149 = vsub.f32 %v48, %v148
    %v150 = vand.u32 %v149, 4294901760
    %v151 = vsub.f32 %v149, %v150
    %v152 = vand.u32 %v151, 4294901760
    %153 = vmatpush.msra.mxu0 %v152
    %v154 = vand.u32 %v54, 4294901760
    %155 = vmatmul.f32.gmra.mxu0 %v154
    %v156 = vpop.f32.mrf.mxu0
    %v157 = vadd.f32 %v92, %v156
    %v158 = vand.u32 %v57, 4294901760
    %159 = vmatmul.f32.gmra.mxu0 %v158
    %v160 = vpop.f32.mrf.mxu0
    %v161 = vadd.f32 %v100, %v160
    %v162 = vand.u32 %v60, 4294901760
    %163 = vmatmul.f32.gmra.mxu0 %v162
    %v164 = vpop.f32.mrf.mxu0
    %v165 = vadd.f32 %v108, %v164
    %v166 = vand.u32 %v63, 4294901760
    %167 = vmatmul.f32.gmra.mxu0 %v166
    %v168 = vpop.f32.mrf.mxu0
    %v169 = vadd.f32 %v116, %v168
    %170 = vdwg.mxu0
    %171 = vmatpush.msra.mxu0 0.0
    %172 = vmatpush.msra.mxu0 0.0
    %173 = vmatpush.msra.mxu0 0.0
    %174 = vmatpush.msra.mxu0 0.0
    %175 = vmatpush.msra.mxu0 0.0
    %176 = vmatpush.msra.mxu0 0.0
    %177 = vmatpush.msra.mxu0 0.0
    %178 = vmatpush.msra.mxu0 0.0
    %179 = vmatpush.msra.mxu0 0.0
    %180 = vmatpush.msra.mxu0 0.0
    %181 = vmatpush.msra.mxu0 0.0
    %182 = vmatpush.msra.mxu0 0.0
    %v183 = vand.u32 %v51, 4294901760
    %v184 = vsub.f32 %v51, %v183
    %185 = vmatpush.msra.mxu0 %v184
    %v186 = vand.u32 %v50, 4294901760
    %v187 = vsub.f32 %v50, %v186
    %188 = vmatpush.msra.mxu0 %v187
    %v189 = vand.u32 %v49, 4294901760
    %v190 = vsub.f32 %v49, %v189
    %191 = vmatpush.msra.mxu0 %v190
    %v192 = vand.u32 %v48, 4294901760
    %v193 = vsub.f32 %v48, %v192
    %194 = vmatpush.msra.mxu0 %v193
    %v195 = vand.u32 %v54, 4294901760
    %v196 = vsub.f32 %v54, %v195
    %197 = vmatmul.f32.gmra.mxu0 %v196
    %v198 = vpop.f32.mrf.mxu0
    %v199 = vadd.f32 %v157, %v198
    %v200 = vand.u32 %v57, 4294901760
    %v201 = vsub.f32 %v57, %v200
    %202 = vmatmul.f32.gmra.mxu0 %v201
    %v203 = vpop.f32.mrf.mxu0
    %v204 = vadd.f32 %v161, %v203
    %v205 = vand.u32 %v60, 4294901760
    %v206 = vsub.f32 %v60, %v205
    %207 = vmatmul.f32.gmra.mxu0 %v206
    %v208 = vpop.f32.mrf.mxu0
    %v209 = vadd.f32 %v165, %v208
    %v210 = vand.u32 %v63, 4294901760
    %v211 = vsub.f32 %v63, %v210
    %212 = vmatmul.f32.gmra.mxu0 %v211
    %v213 = vpop.f32.mrf.mxu0
    %v214 = vadd.f32 %v169, %v213
    %215 = vdwg.mxu0
    %216 = vmatpush.msra.mxu0 0.0
    %217 = vmatpush.msra.mxu0 0.0
    %218 = vmatpush.msra.mxu0 0.0
    %219 = vmatpush.msra.mxu0 0.0
    %220 = vmatpush.msra.mxu0 0.0
    %221 = vmatpush.msra.mxu0 0.0
    %222 = vmatpush.msra.mxu0 0.0
    %223 = vmatpush.msra.mxu0 0.0
    %224 = vmatpush.msra.mxu0 0.0
    %225 = vmatpush.msra.mxu0 0.0
    %226 = vmatpush.msra.mxu0 0.0
    %227 = vmatpush.msra.mxu0 0.0
    %v228 = vand.u32 %v51, 4294901760
    %229 = vmatpush.msra.mxu0 %v228
    %v230 = vand.u32 %v50, 4294901760
    %231 = vmatpush.msra.mxu0 %v230
    %v232 = vand.u32 %v49, 4294901760
    %233 = vmatpush.msra.mxu0 %v232
    %v234 = vand.u32 %v48, 4294901760
    %235 = vmatpush.msra.mxu0 %v234
    %v236 = vand.u32 %v54, 4294901760
    %v237 = vsub.f32 %v54, %v236
    %v238 = vand.u32 %v237, 4294901760
    %239 = vmatmul.f32.gmra.mxu0 %v238
    %v240 = vpop.f32.mrf.mxu0
    %v241 = vadd.f32 %v199, %v240
    %v242 = vand.u32 %v57, 4294901760
    %v243 = vsub.f32 %v57, %v242
    %v244 = vand.u32 %v243, 4294901760
    %245 = vmatmul.f32.gmra.mxu0 %v244
    %v246 = vpop.f32.mrf.mxu0
    %v247 = vadd.f32 %v204, %v246
    %v248 = vand.u32 %v60, 4294901760
    %v249 = vsub.f32 %v60, %v248
    %v250 = vand.u32 %v249, 4294901760
    %251 = vmatmul.f32.gmra.mxu0 %v250
    %v252 = vpop.f32.mrf.mxu0
    %v253 = vadd.f32 %v209, %v252
    %v254 = vand.u32 %v63, 4294901760
    %v255 = vsub.f32 %v63, %v254
    %v256 = vand.u32 %v255, 4294901760
    %257 = vmatmul.f32.gmra.mxu0 %v256
    %v258 = vpop.f32.mrf.mxu0
    %v259 = vadd.f32 %v214, %v258
    %260 = vdwg.mxu0
    %261 = vmatpush.msra.mxu0 0.0
    %262 = vmatpush.msra.mxu0 0.0
    %263 = vmatpush.msra.mxu0 0.0
    %264 = vmatpush.msra.mxu0 0.0
    %265 = vmatpush.msra.mxu0 0.0
    %266 = vmatpush.msra.mxu0 0.0
    %267 = vmatpush.msra.mxu0 0.0
    %268 = vmatpush.msra.mxu0 0.0
    %269 = vmatpush.msra.mxu0 0.0
    %270 = vmatpush.msra.mxu0 0.0
    %271 = vmatpush.msra.mxu0 0.0
    %272 = vmatpush.msra.mxu0 0.0
    %v273 = vand.u32 %v51, 4294901760
    %v274 = vsub.f32 %v51, %v273
    %v275 = vand.u32 %v274, 4294901760
    %276 = vmatpush.msra.mxu0 %v275
    %v277 = vand.u32 %v50, 4294901760
    %v278 = vsub.f32 %v50, %v277
    %v279 = vand.u32 %v278, 4294901760
    %280 = vmatpush.msra.mxu0 %v279
    %v281 = vand.u32 %v49, 4294901760
    %v282 = vsub.f32 %v49, %v281
    %v283 = vand.u32 %v282, 4294901760
    %284 = vmatpush.msra.mxu0 %v283
    %v285 = vand.u32 %v48, 4294901760
    %v286 = vsub.f32 %v48, %v285
    %v287 = vand.u32 %v286, 4294901760
    %288 = vmatpush.msra.mxu0 %v287
    %v289 = vand.u32 %v54, 4294901760
    %290 = vmatmul.f32.gmra.mxu0 %v289
    %v291 = vpop.f32.mrf.mxu0
    %v292 = vadd.f32 %v241, %v291
    %v293 = vand.u32 %v57, 4294901760
    %294 = vmatmul.f32.gmra.mxu0 %v293
    %v295 = vpop.f32.mrf.mxu0
    %v296 = vadd.f32 %v247, %v295
    %v297 = vand.u32 %v60, 4294901760
    %298 = vmatmul.f32.gmra.mxu0 %v297
    %v299 = vpop.f32.mrf.mxu0
    %v300 = vadd.f32 %v253, %v299
    %v301 = vand.u32 %v63, 4294901760
    %302 = vmatmul.f32.gmra.mxu0 %v301
    %v303 = vpop.f32.mrf.mxu0
    %v304 = vadd.f32 %v259, %v303
    %305 = vdwg.mxu0
    %306 = vmatpush.msra.mxu0 0.0
    %307 = vmatpush.msra.mxu0 0.0
    %308 = vmatpush.msra.mxu0 0.0
    %309 = vmatpush.msra.mxu0 0.0
    %310 = vmatpush.msra.mxu0 0.0
    %311 = vmatpush.msra.mxu0 0.0
    %312 = vmatpush.msra.mxu0 0.0
    %313 = vmatpush.msra.mxu0 0.0
    %314 = vmatpush.msra.mxu0 0.0
    %315 = vmatpush.msra.mxu0 0.0
    %316 = vmatpush.msra.mxu0 0.0
    %317 = vmatpush.msra.mxu0 0.0
    %v318 = vand.u32 %v51, 4294901760
    %319 = vmatpush.msra.mxu0 %v318
    %v320 = vand.u32 %v50, 4294901760
    %321 = vmatpush.msra.mxu0 %v320
    %v322 = vand.u32 %v49, 4294901760
    %323 = vmatpush.msra.mxu0 %v322
    %v324 = vand.u32 %v48, 4294901760
    %325 = vmatpush.msra.mxu0 %v324
    %v326 = vand.u32 %v54, 4294901760
    %327 = vmatmul.f32.gmra.mxu0 %v326
    %v328 = vpop.f32.mrf.mxu0
    %v329 = vadd.f32 %v292, %v328
    %v330 = vand.u32 %v57, 4294901760
    %331 = vmatmul.f32.gmra.mxu0 %v330
    %v332 = vpop.f32.mrf.mxu0
    %v333 = vadd.f32 %v296, %v332
    %v334 = vand.u32 %v60, 4294901760
    %335 = vmatmul.f32.gmra.mxu0 %v334
    %v336 = vpop.f32.mrf.mxu0
    %v337 = vadd.f32 %v300, %v336
    %v338 = vand.u32 %v63, 4294901760
    %339 = vmatmul.f32.gmra.mxu0 %v338
    %v340 = vpop.f32.mrf.mxu0
    %v341 = vadd.f32 %v304, %v340
    %342 = vdwg.mxu0
    %v343 = vlaneseq
    %v344 = vshrl.u32 %v343, 7
    %v345 = vadd.s32 %v344, 8
    %v346 = vadd.s32 %v344, 16
    %v347 = vadd.s32 %v344, 24
    %v348 = vlaneseq
    %v349 = vand.u32 %v348, 127
    %vm350 = vcmp.ge.s32.totalorder %v344, 8
    %vm351 = vcmp.ge.s32.totalorder %v345, 8
    %vm352 = vcmp.ge.s32.totalorder %v346, 8
    %vm353 = vcmp.ge.s32.totalorder %v347, 8
    %v354 = vsel %vm350, 1, 0
    %v355 = vsel %vm351, 1, 0
    %v356 = vsel %vm352, 1, 0
    %v357 = vsel %vm353, 1, 0
    %vm358 = vcmp.ge.s32.totalorder %v349, 8
    %v359 = vsel %vm358, 1, 0
    %vm360 = vcmp.ge.s32.totalorder %v344, 16
    %vm361 = vcmp.ge.s32.totalorder %v345, 16
    %vm362 = vcmp.ge.s32.totalorder %v346, 16
    %vm363 = vcmp.ge.s32.totalorder %v347, 16
    %v364 = vsel %vm360, 1, 0
    %v365 = vsel %vm361, 1, 0
    %v366 = vsel %vm362, 1, 0
    %v367 = vsel %vm363, 1, 0
    %v368 = vadd.s32 %v354, %v364
    %v369 = vadd.s32 %v355, %v365
    %v370 = vadd.s32 %v356, %v366
    %v371 = vadd.s32 %v357, %v367
    %vm372 = vcmp.ge.s32.totalorder %v349, 16
    %v373 = vsel %vm372, 1, 0
    %v374 = vadd.s32 %v359, %v373
    %vm375 = vcmp.ge.s32.totalorder %v344, 24
    %vm376 = vcmp.ge.s32.totalorder %v345, 24
    %vm377 = vcmp.ge.s32.totalorder %v346, 24
    %vm378 = vcmp.ge.s32.totalorder %v347, 24
    %v379 = vsel %vm375, 1, 0
    %v380 = vsel %vm376, 1, 0
    %v381 = vsel %vm377, 1, 0
    %v382 = vsel %vm378, 1, 0
    %v383 = vadd.s32 %v368, %v379
    %v384 = vadd.s32 %v369, %v380
    %v385 = vadd.s32 %v370, %v381
    %v386 = vadd.s32 %v371, %v382
    %vm387 = vcmp.ge.s32.totalorder %v349, 24
    %v388 = vsel %vm387, 1, 0
    %v389 = vadd.s32 %v374, %v388
    %vm390 = vcmp.eq.s32.totalorder %v383, %v389
    %vm391 = vcmp.eq.s32.totalorder %v384, %v389
    %vm392 = vcmp.eq.s32.totalorder %v385, %v389
    %vm393 = vcmp.eq.s32.totalorder %v386, %v389
    %vm394 = vcmp.le.s32.totalorder %v349, %v344
    %vm395 = vcmp.le.s32.totalorder %v349, %v345
    %vm396 = vcmp.le.s32.totalorder %v349, %v346
    %vm397 = vcmp.le.s32.totalorder %v349, %v347
    %vm398 = vmand %vm390, %vm394
    %vm399 = vmand %vm391, %vm395
    %vm400 = vmand %vm392, %vm396
    %vm401 = vmand %vm393, %vm397
    %v402 = vsel %vm398, 0.0, -inf
    %v403 = vsel %vm399, 0.0, -inf
    %v404 = vsel %vm400, 0.0, -inf
    %v405 = vsel %vm401, 0.0, -inf
    %410 = vrot.lane.b32.xlu0 %v329, 96
    %v411 = vpop.permute.xlu0 %410
    %412 = vrot.lane.b32.xlu0 %v333, 96
    %v413 = vpop.permute.xlu0 %412
    %414 = vrot.lane.b32.xlu0 %v337, 96
    %v415 = vpop.permute.xlu0 %414
    %416 = vrot.lane.b32.xlu0 %v341, 96
    %v417 = vpop.permute.xlu0 %416
    %vm418 = vcmask 64512
    %v419 = vsel %vm418, %v329, 0
    %v421 = vsel %vm418, %v333, 0
    %v423 = vsel %vm418, %v337, 0
    %v425 = vsel %vm418, %v341, 0
    %v427 = vsel %vm418, %v411, 0
    %v429 = vsel %vm418, %v413, 0
    %v431 = vsel %vm418, %v415, 0
    %v433 = vsel %vm418, %v417, 0
    %435 = vmatpush.xpose.msra.mxu0 0.0
    %436 = vmatpush.xpose.msra.mxu0 0.0
    %437 = vmatpush.xpose.msra.mxu0 0.0
    %438 = vmatpush.xpose.msra.mxu0 0.0
    %439 = vmatpush.xpose.msra.mxu0 0.0
    %440 = vmatpush.xpose.msra.mxu0 0.0
    %441 = vmatpush.xpose.msra.mxu0 0.0
    %442 = vmatpush.xpose.msra.mxu0 0.0
    %443 = vmatpush.xpose.msra.mxu0 0.0
    %444 = vmatpush.xpose.msra.mxu0 0.0
    %445 = vmatpush.xpose.msra.mxu0 0.0
    %446 = vmatpush.xpose.msra.mxu0 0.0
    %v447 = vand.u32 %v433, 4294901760
    %448 = vmatpush.xpose.msra.mxu0 %v447
    %v449 = vand.u32 %v431, 4294901760
    %450 = vmatpush.xpose.msra.mxu0 %v449
    %v451 = vand.u32 %v429, 4294901760
    %452 = vmatpush.xpose.msra.mxu0 %v451
    %v453 = vand.u32 %v427, 4294901760
    %454 = vmatpush.xpose.msra.mxu0 %v453
    %v455 = vand.u32 %v419, 4294901760
    %v456 = vsub.f32 %v419, %v455
    %v457 = vand.u32 %v456, 4294901760
    %v458 = vsub.f32 %v456, %v457
    %v459 = vand.u32 %v458, 4294901760
    %460 = vmatmul.f32.gmra.mxu0 %v459
    %v461 = vpop.f32.mrf.mxu0
    %v462 = vadd.f32 %v402, %v461
    %v463 = vand.u32 %v421, 4294901760
    %v464 = vsub.f32 %v421, %v463
    %v465 = vand.u32 %v464, 4294901760
    %v466 = vsub.f32 %v464, %v465
    %v467 = vand.u32 %v466, 4294901760
    %468 = vmatmul.f32.gmra.mxu0 %v467
    %v469 = vpop.f32.mrf.mxu0
    %v470 = vadd.f32 %v403, %v469
    %v471 = vand.u32 %v423, 4294901760
    %v472 = vsub.f32 %v423, %v471
    %v473 = vand.u32 %v472, 4294901760
    %v474 = vsub.f32 %v472, %v473
    %v475 = vand.u32 %v474, 4294901760
    %476 = vmatmul.f32.gmra.mxu0 %v475
    %v477 = vpop.f32.mrf.mxu0
    %v478 = vadd.f32 %v404, %v477
    %v479 = vand.u32 %v425, 4294901760
    %v480 = vsub.f32 %v425, %v479
    %v481 = vand.u32 %v480, 4294901760
    %v482 = vsub.f32 %v480, %v481
    %v483 = vand.u32 %v482, 4294901760
    %484 = vmatmul.f32.gmra.mxu0 %v483
    %v485 = vpop.f32.mrf.mxu0
    %v486 = vadd.f32 %v405, %v485
    %487 = vdwg.mxu0
    %488 = vmatpush.xpose.msra.mxu0 0.0
    %489 = vmatpush.xpose.msra.mxu0 0.0
    %490 = vmatpush.xpose.msra.mxu0 0.0
    %491 = vmatpush.xpose.msra.mxu0 0.0
    %492 = vmatpush.xpose.msra.mxu0 0.0
    %493 = vmatpush.xpose.msra.mxu0 0.0
    %494 = vmatpush.xpose.msra.mxu0 0.0
    %495 = vmatpush.xpose.msra.mxu0 0.0
    %496 = vmatpush.xpose.msra.mxu0 0.0
    %497 = vmatpush.xpose.msra.mxu0 0.0
    %498 = vmatpush.xpose.msra.mxu0 0.0
    %499 = vmatpush.xpose.msra.mxu0 0.0
    %v500 = vand.u32 %v433, 4294901760
    %v501 = vsub.f32 %v433, %v500
    %v502 = vand.u32 %v501, 4294901760
    %v503 = vsub.f32 %v501, %v502
    %v504 = vand.u32 %v503, 4294901760
    %505 = vmatpush.xpose.msra.mxu0 %v504
    %v506 = vand.u32 %v431, 4294901760
    %v507 = vsub.f32 %v431, %v506
    %v508 = vand.u32 %v507, 4294901760
    %v509 = vsub.f32 %v507, %v508
    %v510 = vand.u32 %v509, 4294901760
    %511 = vmatpush.xpose.msra.mxu0 %v510
    %v512 = vand.u32 %v429, 4294901760
    %v513 = vsub.f32 %v429, %v512
    %v514 = vand.u32 %v513, 4294901760
    %v515 = vsub.f32 %v513, %v514
    %v516 = vand.u32 %v515, 4294901760
    %517 = vmatpush.xpose.msra.mxu0 %v516
    %v518 = vand.u32 %v427, 4294901760
    %v519 = vsub.f32 %v427, %v518
    %v520 = vand.u32 %v519, 4294901760
    %v521 = vsub.f32 %v519, %v520
    %v522 = vand.u32 %v521, 4294901760
    %523 = vmatpush.xpose.msra.mxu0 %v522
    %v524 = vand.u32 %v419, 4294901760
    %525 = vmatmul.f32.gmra.mxu0 %v524
    %v526 = vpop.f32.mrf.mxu0
    %v527 = vadd.f32 %v462, %v526
    %v528 = vand.u32 %v421, 4294901760
    %529 = vmatmul.f32.gmra.mxu0 %v528
    %v530 = vpop.f32.mrf.mxu0
    %v531 = vadd.f32 %v470, %v530
    %v532 = vand.u32 %v423, 4294901760
    %533 = vmatmul.f32.gmra.mxu0 %v532
    %v534 = vpop.f32.mrf.mxu0
    %v535 = vadd.f32 %v478, %v534
    %v536 = vand.u32 %v425, 4294901760
    %537 = vmatmul.f32.gmra.mxu0 %v536
    %v538 = vpop.f32.mrf.mxu0
    %v539 = vadd.f32 %v486, %v538
    %540 = vdwg.mxu0
    %541 = vmatpush.xpose.msra.mxu0 0.0
    %542 = vmatpush.xpose.msra.mxu0 0.0
    %543 = vmatpush.xpose.msra.mxu0 0.0
    %544 = vmatpush.xpose.msra.mxu0 0.0
    %545 = vmatpush.xpose.msra.mxu0 0.0
    %546 = vmatpush.xpose.msra.mxu0 0.0
    %547 = vmatpush.xpose.msra.mxu0 0.0
    %548 = vmatpush.xpose.msra.mxu0 0.0
    %549 = vmatpush.xpose.msra.mxu0 0.0
    %550 = vmatpush.xpose.msra.mxu0 0.0
    %551 = vmatpush.xpose.msra.mxu0 0.0
    %552 = vmatpush.xpose.msra.mxu0 0.0
    %v553 = vand.u32 %v433, 4294901760
    %v554 = vsub.f32 %v433, %v553
    %555 = vmatpush.xpose.msra.mxu0 %v554
    %v556 = vand.u32 %v431, 4294901760
    %v557 = vsub.f32 %v431, %v556
    %558 = vmatpush.xpose.msra.mxu0 %v557
    %v559 = vand.u32 %v429, 4294901760
    %v560 = vsub.f32 %v429, %v559
    %561 = vmatpush.xpose.msra.mxu0 %v560
    %v562 = vand.u32 %v427, 4294901760
    %v563 = vsub.f32 %v427, %v562
    %564 = vmatpush.xpose.msra.mxu0 %v563
    %v565 = vand.u32 %v419, 4294901760
    %v566 = vsub.f32 %v419, %v565
    %567 = vmatmul.f32.gmra.mxu0 %v566
    %v568 = vpop.f32.mrf.mxu0
    %v569 = vadd.f32 %v527, %v568
    %v570 = vand.u32 %v421, 4294901760
    %v571 = vsub.f32 %v421, %v570
    %572 = vmatmul.f32.gmra.mxu0 %v571
    %v573 = vpop.f32.mrf.mxu0
    %v574 = vadd.f32 %v531, %v573
    %v575 = vand.u32 %v423, 4294901760
    %v576 = vsub.f32 %v423, %v575
    %577 = vmatmul.f32.gmra.mxu0 %v576
    %v578 = vpop.f32.mrf.mxu0
    %v579 = vadd.f32 %v535, %v578
    %v580 = vand.u32 %v425, 4294901760
    %v581 = vsub.f32 %v425, %v580
    %582 = vmatmul.f32.gmra.mxu0 %v581
    %v583 = vpop.f32.mrf.mxu0
    %v584 = vadd.f32 %v539, %v583
    %585 = vdwg.mxu0
    %586 = vmatpush.xpose.msra.mxu0 0.0
    %587 = vmatpush.xpose.msra.mxu0 0.0
    %588 = vmatpush.xpose.msra.mxu0 0.0
    %589 = vmatpush.xpose.msra.mxu0 0.0
    %590 = vmatpush.xpose.msra.mxu0 0.0
    %591 = vmatpush.xpose.msra.mxu0 0.0
    %592 = vmatpush.xpose.msra.mxu0 0.0
    %593 = vmatpush.xpose.msra.mxu0 0.0
    %594 = vmatpush.xpose.msra.mxu0 0.0
    %595 = vmatpush.xpose.msra.mxu0 0.0
    %596 = vmatpush.xpose.msra.mxu0 0.0
    %597 = vmatpush.xpose.msra.mxu0 0.0
    %v598 = vand.u32 %v433, 4294901760
    %599 = vmatpush.xpose.msra.mxu0 %v598
    %v600 = vand.u32 %v431, 4294901760
    %601 = vmatpush.xpose.msra.mxu0 %v600
    %v602 = vand.u32 %v429, 4294901760
    %603 = vmatpush.xpose.msra.mxu0 %v602
    %v604 = vand.u32 %v427, 4294901760
    %605 = vmatpush.xpose.msra.mxu0 %v604
    %v606 = vand.u32 %v419, 4294901760
    %v607 = vsub.f32 %v419, %v606
    %v608 = vand.u32 %v607, 4294901760
    %609 = vmatmul.f32.gmra.mxu0 %v608
    %v610 = vpop.f32.mrf.mxu0
    %v611 = vadd.f32 %v569, %v610
    %v612 = vand.u32 %v421, 4294901760
    %v613 = vsub.f32 %v421, %v612
    %v614 = vand.u32 %v613, 4294901760
    %615 = vmatmul.f32.gmra.mxu0 %v614
    %v616 = vpop.f32.mrf.mxu0
    %v617 = vadd.f32 %v574, %v616
    %v618 = vand.u32 %v423, 4294901760
    %v619 = vsub.f32 %v423, %v618
    %v620 = vand.u32 %v619, 4294901760
    %621 = vmatmul.f32.gmra.mxu0 %v620
    %v622 = vpop.f32.mrf.mxu0
    %v623 = vadd.f32 %v579, %v622
    %v624 = vand.u32 %v425, 4294901760
    %v625 = vsub.f32 %v425, %v624
    %v626 = vand.u32 %v625, 4294901760
    %627 = vmatmul.f32.gmra.mxu0 %v626
    %v628 = vpop.f32.mrf.mxu0
    %v629 = vadd.f32 %v584, %v628
    %630 = vdwg.mxu0
    %631 = vmatpush.xpose.msra.mxu0 0.0
    %632 = vmatpush.xpose.msra.mxu0 0.0
    %633 = vmatpush.xpose.msra.mxu0 0.0
    %634 = vmatpush.xpose.msra.mxu0 0.0
    %635 = vmatpush.xpose.msra.mxu0 0.0
    %636 = vmatpush.xpose.msra.mxu0 0.0
    %637 = vmatpush.xpose.msra.mxu0 0.0
    %638 = vmatpush.xpose.msra.mxu0 0.0
    %639 = vmatpush.xpose.msra.mxu0 0.0
    %640 = vmatpush.xpose.msra.mxu0 0.0
    %641 = vmatpush.xpose.msra.mxu0 0.0
    %642 = vmatpush.xpose.msra.mxu0 0.0
    %v643 = vand.u32 %v433, 4294901760
    %v644 = vsub.f32 %v433, %v643
    %v645 = vand.u32 %v644, 4294901760
    %646 = vmatpush.xpose.msra.mxu0 %v645
    %v647 = vand.u32 %v431, 4294901760
    %v648 = vsub.f32 %v431, %v647
    %v649 = vand.u32 %v648, 4294901760
    %650 = vmatpush.xpose.msra.mxu0 %v649
    %v651 = vand.u32 %v429, 4294901760
    %v652 = vsub.f32 %v429, %v651
    %v653 = vand.u32 %v652, 4294901760
    %654 = vmatpush.xpose.msra.mxu0 %v653
    %v655 = vand.u32 %v427, 4294901760
    %v656 = vsub.f32 %v427, %v655
    %v657 = vand.u32 %v656, 4294901760
    %658 = vmatpush.xpose.msra.mxu0 %v657
    %v659 = vand.u32 %v419, 4294901760
    %660 = vmatmul.f32.gmra.mxu0 %v659
    %v661 = vpop.f32.mrf.mxu0
    %v662 = vadd.f32 %v611, %v661
    %v663 = vand.u32 %v421, 4294901760
    %664 = vmatmul.f32.gmra.mxu0 %v663
    %v665 = vpop.f32.mrf.mxu0
    %v666 = vadd.f32 %v617, %v665
    %v667 = vand.u32 %v423, 4294901760
    %668 = vmatmul.f32.gmra.mxu0 %v667
    %v669 = vpop.f32.mrf.mxu0
    %v670 = vadd.f32 %v623, %v669
    %v671 = vand.u32 %v425, 4294901760
    %672 = vmatmul.f32.gmra.mxu0 %v671
    %v673 = vpop.f32.mrf.mxu0
    %v674 = vadd.f32 %v629, %v673
    %675 = vdwg.mxu0
    %676 = vmatpush.xpose.msra.mxu0 0.0
    %677 = vmatpush.xpose.msra.mxu0 0.0
    %678 = vmatpush.xpose.msra.mxu0 0.0
    %679 = vmatpush.xpose.msra.mxu0 0.0
    %680 = vmatpush.xpose.msra.mxu0 0.0
    %681 = vmatpush.xpose.msra.mxu0 0.0
    %682 = vmatpush.xpose.msra.mxu0 0.0
    %683 = vmatpush.xpose.msra.mxu0 0.0
    %684 = vmatpush.xpose.msra.mxu0 0.0
    %685 = vmatpush.xpose.msra.mxu0 0.0
    %686 = vmatpush.xpose.msra.mxu0 0.0
    %687 = vmatpush.xpose.msra.mxu0 0.0
    %v688 = vand.u32 %v433, 4294901760
    %689 = vmatpush.xpose.msra.mxu0 %v688
    %v690 = vand.u32 %v431, 4294901760
    %691 = vmatpush.xpose.msra.mxu0 %v690
    %v692 = vand.u32 %v429, 4294901760
    %693 = vmatpush.xpose.msra.mxu0 %v692
    %v694 = vand.u32 %v427, 4294901760
    %695 = vmatpush.xpose.msra.mxu0 %v694
    %v696 = vand.u32 %v419, 4294901760
    %697 = vmatmul.f32.gmra.mxu0 %v696
    %v698 = vpop.f32.mrf.mxu0
    %v699 = vadd.f32 %v662, %v698
    %v700 = vand.u32 %v421, 4294901760
    %701 = vmatmul.f32.gmra.mxu0 %v700
    %v702 = vpop.f32.mrf.mxu0
    %v703 = vadd.f32 %v666, %v702
    %v704 = vand.u32 %v423, 4294901760
    %705 = vmatmul.f32.gmra.mxu0 %v704
    %v706 = vpop.f32.mrf.mxu0
    %v707 = vadd.f32 %v670, %v706
    %v708 = vand.u32 %v425, 4294901760
    %709 = vmatmul.f32.gmra.mxu0 %v708
    %v710 = vpop.f32.mrf.mxu0
    %v711 = vadd.f32 %v674, %v710
    %712 = vdwg.mxu0
    %v713 = vsel %vm52, %v699, -inf
    %714 = vmax.xlane.f32.xlu0 %v713
    %v715 = vpop.xlane.xlu0 %714
    %v716 = vsel %vm52, %v703, -inf
    %717 = vmax.xlane.f32.xlu0 %v716
    %v718 = vpop.xlane.xlu0 %717
    %v719 = vsel %vm52, %v707, -inf
    %720 = vmax.xlane.f32.xlu0 %v719
    %v721 = vpop.xlane.xlu0 %720
    %v722 = vsel %vm52, %v711, -inf
    %723 = vmax.xlane.f32.xlu0 %v722
    %v724 = vpop.xlane.xlu0 %723
    %v725 = vsub.f32 %v699, %v715
    %v726 = vsub.f32 %v703, %v718
    %v727 = vsub.f32 %v707, %v721
    %v728 = vsub.f32 %v711, %v724
    %v729 = vmul.f32 %v725, 1.442695
    %v730 = vpow.pop %v729
    %v731 = vmul.f32 %v726, 1.442695
    %v732 = vpow.pop %v731
    %v733 = vmul.f32 %v727, 1.442695
    %v734 = vpow.pop %v733
    %v735 = vmul.f32 %v728, 1.442695
    %v736 = vpow.pop %v735
    %v737 = vsel %vm52, %v730, 0.0
    %738 = vadd.xlane.f32.xlu0 %v737
    %v739 = vpop.xlane.xlu0 %738
    %v740 = vsel %vm52, %v732, 0.0
    %741 = vadd.xlane.f32.xlu0 %v740
    %v742 = vpop.xlane.xlu0 %741
    %v743 = vsel %vm52, %v734, 0.0
    %744 = vadd.xlane.f32.xlu0 %v743
    %v745 = vpop.xlane.xlu0 %744
    %v746 = vsel %vm52, %v736, 0.0
    %747 = vadd.xlane.f32.xlu0 %v746
    %v748 = vpop.xlane.xlu0 %747
    %v749 = vrcp.pop %v739
    %v750 = vmul.f32 %v739, %v749
    %v751 = vsub.f32 1.0, %v750
    %v752 = vmul.f32 %v749, %v751
    %v753 = vadd.f32 %v749, %v752
    %vm754 = vweird.f32 %v739
    %vm755 = vweird.f32 %v749
    %vm756 = vmor %vm754, %vm755
    %v757 = vsel %vm756, %v749, %v753
    %v758 = vand.u32 2147483647, %v739
    %vm759 = vcmp.eq.f32.partialorder %v758, 8.507059e+37
    %v760 = vand.u32 %v739, 2147483648
    %v761 = vor.u32 1.1754944e-38, %v760
    %v762 = vsel %vm759, %v761, %v757
    %v763 = vmul.f32 1.0, %v762
    %v764 = vrcp.pop %v742
    %v765 = vmul.f32 %v742, %v764
    %v766 = vsub.f32 1.0, %v765
    %v767 = vmul.f32 %v764, %v766
    %v768 = vadd.f32 %v764, %v767
    %vm769 = vweird.f32 %v742
    %vm770 = vweird.f32 %v764
    %vm771 = vmor %vm769, %vm770
    %v772 = vsel %vm771, %v764, %v768
    %v773 = vand.u32 2147483647, %v742
    %vm774 = vcmp.eq.f32.partialorder %v773, 8.507059e+37
    %v775 = vand.u32 %v742, 2147483648
    %v776 = vor.u32 1.1754944e-38, %v775
    %v777 = vsel %vm774, %v776, %v772
    %v778 = vmul.f32 1.0, %v777
    %v779 = vrcp.pop %v745
    %v780 = vmul.f32 %v745, %v779
    %v781 = vsub.f32 1.0, %v780
    %v782 = vmul.f32 %v779, %v781
    %v783 = vadd.f32 %v779, %v782
    %vm784 = vweird.f32 %v745
    %vm785 = vweird.f32 %v779
    %vm786 = vmor %vm784, %vm785
    %v787 = vsel %vm786, %v779, %v783
    %v788 = vand.u32 2147483647, %v745
    %vm789 = vcmp.eq.f32.partialorder %v788, 8.507059e+37
    %v790 = vand.u32 %v745, 2147483648
    %v791 = vor.u32 1.1754944e-38, %v790
    %v792 = vsel %vm789, %v791, %v787
    %v793 = vmul.f32 1.0, %v792
    %v794 = vrcp.pop %v748
    %v795 = vmul.f32 %v748, %v794
    %v796 = vsub.f32 1.0, %v795
    %v797 = vmul.f32 %v794, %v796
    %v798 = vadd.f32 %v794, %v797
    %vm799 = vweird.f32 %v748
    %vm800 = vweird.f32 %v794
    %vm801 = vmor %vm799, %vm800
    %v802 = vsel %vm801, %v794, %v798
    %v803 = vand.u32 2147483647, %v748
    %vm804 = vcmp.eq.f32.partialorder %v803, 8.507059e+37
    %v805 = vand.u32 %v748, 2147483648
    %v806 = vor.u32 1.1754944e-38, %v805
    %v807 = vsel %vm804, %v806, %v802
    %v808 = vmul.f32 1.0, %v807
    %v809 = vmul.f32 %v730, %v763
    %v810 = vmul.f32 %v732, %v778
    %v811 = vmul.f32 %v734, %v793
    %v812 = vmul.f32 %v736, %v808
    %813 = vrot.lane.b32.xlu0 %v329, 64
    %v814 = vpop.permute.xlu0 %813
    %815 = vrot.lane.b32.xlu0 %v333, 64
    %v816 = vpop.permute.xlu0 %815
    %817 = vrot.lane.b32.xlu0 %v337, 64
    %v818 = vpop.permute.xlu0 %817
    %819 = vrot.lane.b32.xlu0 %v341, 64
    %v820 = vpop.permute.xlu0 %819
    %v826 = vsel %vm52, %v809, 0
    %v829 = vsel %vm52, %v810, 0
    %v832 = vsel %vm52, %v811, 0
    %v835 = vsel %vm52, %v812, 0
    %837 = vmatpush.msra.mxu0 0.0
    %838 = vmatpush.msra.mxu0 0.0
    %839 = vmatpush.msra.mxu0 0.0
    %840 = vmatpush.msra.mxu0 0.0
    %841 = vmatpush.msra.mxu0 0.0
    %842 = vmatpush.msra.mxu0 0.0
    %843 = vmatpush.msra.mxu0 0.0
    %844 = vmatpush.msra.mxu0 0.0
    %845 = vmatpush.msra.mxu0 0.0
    %846 = vmatpush.msra.mxu0 0.0
    %847 = vmatpush.msra.mxu0 0.0
    %848 = vmatpush.msra.mxu0 0.0
    %v849 = vand.u32 %v820, 4294901760
    %850 = vmatpush.msra.mxu0 %v849
    %v851 = vand.u32 %v818, 4294901760
    %852 = vmatpush.msra.mxu0 %v851
    %v853 = vand.u32 %v816, 4294901760
    %854 = vmatpush.msra.mxu0 %v853
    %v855 = vand.u32 %v814, 4294901760
    %856 = vmatpush.msra.mxu0 %v855
    %v857 = vand.u32 %v826, 4294901760
    %v858 = vsub.f32 %v826, %v857
    %v859 = vand.u32 %v858, 4294901760
    %v860 = vsub.f32 %v858, %v859
    %v861 = vand.u32 %v860, 4294901760
    %862 = vmatmul.f32.gmra.mxu0 %v861
    %v863 = vpop.f32.mrf.mxu0
    %v864 = vadd.f32 0.0, %v863
    %v865 = vand.u32 %v829, 4294901760
    %v866 = vsub.f32 %v829, %v865
    %v867 = vand.u32 %v866, 4294901760
    %v868 = vsub.f32 %v866, %v867
    %v869 = vand.u32 %v868, 4294901760
    %870 = vmatmul.f32.gmra.mxu0 %v869
    %v871 = vpop.f32.mrf.mxu0
    %v872 = vadd.f32 0.0, %v871
    %v873 = vand.u32 %v832, 4294901760
    %v874 = vsub.f32 %v832, %v873
    %v875 = vand.u32 %v874, 4294901760
    %v876 = vsub.f32 %v874, %v875
    %v877 = vand.u32 %v876, 4294901760
    %878 = vmatmul.f32.gmra.mxu0 %v877
    %v879 = vpop.f32.mrf.mxu0
    %v880 = vadd.f32 0.0, %v879
    %v881 = vand.u32 %v835, 4294901760
    %v882 = vsub.f32 %v835, %v881
    %v883 = vand.u32 %v882, 4294901760
    %v884 = vsub.f32 %v882, %v883
    %v885 = vand.u32 %v884, 4294901760
    %886 = vmatmul.f32.gmra.mxu0 %v885
    %v887 = vpop.f32.mrf.mxu0
    %v888 = vadd.f32 0.0, %v887
    %889 = vdwg.mxu0
    %890 = vmatpush.msra.mxu0 0.0
    %891 = vmatpush.msra.mxu0 0.0
    %892 = vmatpush.msra.mxu0 0.0
    %893 = vmatpush.msra.mxu0 0.0
    %894 = vmatpush.msra.mxu0 0.0
    %895 = vmatpush.msra.mxu0 0.0
    %896 = vmatpush.msra.mxu0 0.0
    %897 = vmatpush.msra.mxu0 0.0
    %898 = vmatpush.msra.mxu0 0.0
    %899 = vmatpush.msra.mxu0 0.0
    %900 = vmatpush.msra.mxu0 0.0
    %901 = vmatpush.msra.mxu0 0.0
    %v902 = vand.u32 %v820, 4294901760
    %v903 = vsub.f32 %v820, %v902
    %v904 = vand.u32 %v903, 4294901760
    %v905 = vsub.f32 %v903, %v904
    %v906 = vand.u32 %v905, 4294901760
    %907 = vmatpush.msra.mxu0 %v906
    %v908 = vand.u32 %v818, 4294901760
    %v909 = vsub.f32 %v818, %v908
    %v910 = vand.u32 %v909, 4294901760
    %v911 = vsub.f32 %v909, %v910
    %v912 = vand.u32 %v911, 4294901760
    %913 = vmatpush.msra.mxu0 %v912
    %v914 = vand.u32 %v816, 4294901760
    %v915 = vsub.f32 %v816, %v914
    %v916 = vand.u32 %v915, 4294901760
    %v917 = vsub.f32 %v915, %v916
    %v918 = vand.u32 %v917, 4294901760
    %919 = vmatpush.msra.mxu0 %v918
    %v920 = vand.u32 %v814, 4294901760
    %v921 = vsub.f32 %v814, %v920
    %v922 = vand.u32 %v921, 4294901760
    %v923 = vsub.f32 %v921, %v922
    %v924 = vand.u32 %v923, 4294901760
    %925 = vmatpush.msra.mxu0 %v924
    %v926 = vand.u32 %v826, 4294901760
    %927 = vmatmul.f32.gmra.mxu0 %v926
    %v928 = vpop.f32.mrf.mxu0
    %v929 = vadd.f32 %v864, %v928
    %v930 = vand.u32 %v829, 4294901760
    %931 = vmatmul.f32.gmra.mxu0 %v930
    %v932 = vpop.f32.mrf.mxu0
    %v933 = vadd.f32 %v872, %v932
    %v934 = vand.u32 %v832, 4294901760
    %935 = vmatmul.f32.gmra.mxu0 %v934
    %v936 = vpop.f32.mrf.mxu0
    %v937 = vadd.f32 %v880, %v936
    %v938 = vand.u32 %v835, 4294901760
    %939 = vmatmul.f32.gmra.mxu0 %v938
    %v940 = vpop.f32.mrf.mxu0
    %v941 = vadd.f32 %v888, %v940
    %942 = vdwg.mxu0
    %943 = vmatpush.msra.mxu0 0.0
    %944 = vmatpush.msra.mxu0 0.0
    %945 = vmatpush.msra.mxu0 0.0
    %946 = vmatpush.msra.mxu0 0.0
    %947 = vmatpush.msra.mxu0 0.0
    %948 = vmatpush.msra.mxu0 0.0
    %949 = vmatpush.msra.mxu0 0.0
    %950 = vmatpush.msra.mxu0 0.0
    %951 = vmatpush.msra.mxu0 0.0
    %952 = vmatpush.msra.mxu0 0.0
    %953 = vmatpush.msra.mxu0 0.0
    %954 = vmatpush.msra.mxu0 0.0
    %v955 = vand.u32 %v820, 4294901760
    %v956 = vsub.f32 %v820, %v955
    %957 = vmatpush.msra.mxu0 %v956
    %v958 = vand.u32 %v818, 4294901760
    %v959 = vsub.f32 %v818, %v958
    %960 = vmatpush.msra.mxu0 %v959
    %v961 = vand.u32 %v816, 4294901760
    %v962 = vsub.f32 %v816, %v961
    %963 = vmatpush.msra.mxu0 %v962
    %v964 = vand.u32 %v814, 4294901760
    %v965 = vsub.f32 %v814, %v964
    %966 = vmatpush.msra.mxu0 %v965
    %v967 = vand.u32 %v826, 4294901760
    %v968 = vsub.f32 %v826, %v967
    %969 = vmatmul.f32.gmra.mxu0 %v968
    %v970 = vpop.f32.mrf.mxu0
    %v971 = vadd.f32 %v929, %v970
    %v972 = vand.u32 %v829, 4294901760
    %v973 = vsub.f32 %v829, %v972
    %974 = vmatmul.f32.gmra.mxu0 %v973
    %v975 = vpop.f32.mrf.mxu0
    %v976 = vadd.f32 %v933, %v975
    %v977 = vand.u32 %v832, 4294901760
    %v978 = vsub.f32 %v832, %v977
    %979 = vmatmul.f32.gmra.mxu0 %v978
    %v980 = vpop.f32.mrf.mxu0
    %v981 = vadd.f32 %v937, %v980
    %v982 = vand.u32 %v835, 4294901760
    %v983 = vsub.f32 %v835, %v982
    %984 = vmatmul.f32.gmra.mxu0 %v983
    %v985 = vpop.f32.mrf.mxu0
    %v986 = vadd.f32 %v941, %v985
    %987 = vdwg.mxu0
    %988 = vmatpush.msra.mxu0 0.0
    %989 = vmatpush.msra.mxu0 0.0
    %990 = vmatpush.msra.mxu0 0.0
    %991 = vmatpush.msra.mxu0 0.0
    %992 = vmatpush.msra.mxu0 0.0
    %993 = vmatpush.msra.mxu0 0.0
    %994 = vmatpush.msra.mxu0 0.0
    %995 = vmatpush.msra.mxu0 0.0
    %996 = vmatpush.msra.mxu0 0.0
    %997 = vmatpush.msra.mxu0 0.0
    %998 = vmatpush.msra.mxu0 0.0
    %999 = vmatpush.msra.mxu0 0.0
    %v1000 = vand.u32 %v820, 4294901760
    %1001 = vmatpush.msra.mxu0 %v1000
    %v1002 = vand.u32 %v818, 4294901760
    %1003 = vmatpush.msra.mxu0 %v1002
    %v1004 = vand.u32 %v816, 4294901760
    %1005 = vmatpush.msra.mxu0 %v1004
    %v1006 = vand.u32 %v814, 4294901760
    %1007 = vmatpush.msra.mxu0 %v1006
    %v1008 = vand.u32 %v826, 4294901760
    %v1009 = vsub.f32 %v826, %v1008
    %v1010 = vand.u32 %v1009, 4294901760
    %1011 = vmatmul.f32.gmra.mxu0 %v1010
    %v1012 = vpop.f32.mrf.mxu0
    %v1013 = vadd.f32 %v971, %v1012
    %v1014 = vand.u32 %v829, 4294901760
    %v1015 = vsub.f32 %v829, %v1014
    %v1016 = vand.u32 %v1015, 4294901760
    %1017 = vmatmul.f32.gmra.mxu0 %v1016
    %v1018 = vpop.f32.mrf.mxu0
    %v1019 = vadd.f32 %v976, %v1018
    %v1020 = vand.u32 %v832, 4294901760
    %v1021 = vsub.f32 %v832, %v1020
    %v1022 = vand.u32 %v1021, 4294901760
    %1023 = vmatmul.f32.gmra.mxu0 %v1022
    %v1024 = vpop.f32.mrf.mxu0
    %v1025 = vadd.f32 %v981, %v1024
    %v1026 = vand.u32 %v835, 4294901760
    %v1027 = vsub.f32 %v835, %v1026
    %v1028 = vand.u32 %v1027, 4294901760
    %1029 = vmatmul.f32.gmra.mxu0 %v1028
    %v1030 = vpop.f32.mrf.mxu0
    %v1031 = vadd.f32 %v986, %v1030
    %1032 = vdwg.mxu0
    %1033 = vmatpush.msra.mxu0 0.0
    %1034 = vmatpush.msra.mxu0 0.0
    %1035 = vmatpush.msra.mxu0 0.0
    %1036 = vmatpush.msra.mxu0 0.0
    %1037 = vmatpush.msra.mxu0 0.0
    %1038 = vmatpush.msra.mxu0 0.0
    %1039 = vmatpush.msra.mxu0 0.0
    %1040 = vmatpush.msra.mxu0 0.0
    %1041 = vmatpush.msra.mxu0 0.0
    %1042 = vmatpush.msra.mxu0 0.0
    %1043 = vmatpush.msra.mxu0 0.0
    %1044 = vmatpush.msra.mxu0 0.0
    %v1045 = vand.u32 %v820, 4294901760
    %v1046 = vsub.f32 %v820, %v1045
    %v1047 = vand.u32 %v1046, 4294901760
    %1048 = vmatpush.msra.mxu0 %v1047
    %v1049 = vand.u32 %v818, 4294901760
    %v1050 = vsub.f32 %v818, %v1049
    %v1051 = vand.u32 %v1050, 4294901760
    %1052 = vmatpush.msra.mxu0 %v1051
    %v1053 = vand.u32 %v816, 4294901760
    %v1054 = vsub.f32 %v816, %v1053
    %v1055 = vand.u32 %v1054, 4294901760
    %1056 = vmatpush.msra.mxu0 %v1055
    %v1057 = vand.u32 %v814, 4294901760
    %v1058 = vsub.f32 %v814, %v1057
    %v1059 = vand.u32 %v1058, 4294901760
    %1060 = vmatpush.msra.mxu0 %v1059
    %v1061 = vand.u32 %v826, 4294901760
    %1062 = vmatmul.f32.gmra.mxu0 %v1061
    %v1063 = vpop.f32.mrf.mxu0
    %v1064 = vadd.f32 %v1013, %v1063
    %v1065 = vand.u32 %v829, 4294901760
    %1066 = vmatmul.f32.gmra.mxu0 %v1065
    %v1067 = vpop.f32.mrf.mxu0
    %v1068 = vadd.f32 %v1019, %v1067
    %v1069 = vand.u32 %v832, 4294901760
    %1070 = vmatmul.f32.gmra.mxu0 %v1069
    %v1071 = vpop.f32.mrf.mxu0
    %v1072 = vadd.f32 %v1025, %v1071
    %v1073 = vand.u32 %v835, 4294901760
    %1074 = vmatmul.f32.gmra.mxu0 %v1073
    %v1075 = vpop.f32.mrf.mxu0
    %v1076 = vadd.f32 %v1031, %v1075
    %1077 = vdwg.mxu0
    %1078 = vmatpush.msra.mxu0 0.0
    %1079 = vmatpush.msra.mxu0 0.0
    %1080 = vmatpush.msra.mxu0 0.0
    %1081 = vmatpush.msra.mxu0 0.0
    %1082 = vmatpush.msra.mxu0 0.0
    %1083 = vmatpush.msra.mxu0 0.0
    %1084 = vmatpush.msra.mxu0 0.0
    %1085 = vmatpush.msra.mxu0 0.0
    %1086 = vmatpush.msra.mxu0 0.0
    %1087 = vmatpush.msra.mxu0 0.0
    %1088 = vmatpush.msra.mxu0 0.0
    %1089 = vmatpush.msra.mxu0 0.0
    %v1090 = vand.u32 %v820, 4294901760
    %1091 = vmatpush.msra.mxu0 %v1090
    %v1092 = vand.u32 %v818, 4294901760
    %1093 = vmatpush.msra.mxu0 %v1092
    %v1094 = vand.u32 %v816, 4294901760
    %1095 = vmatpush.msra.mxu0 %v1094
    %v1096 = vand.u32 %v814, 4294901760
    %1097 = vmatpush.msra.mxu0 %v1096
    %v1098 = vand.u32 %v826, 4294901760
    %1099 = vmatmul.f32.gmra.mxu0 %v1098
    %v1100 = vpop.f32.mrf.mxu0
    %v1101 = vadd.f32 %v1064, %v1100
    %v1102 = vand.u32 %v829, 4294901760
    %1103 = vmatmul.f32.gmra.mxu0 %v1102
    %v1104 = vpop.f32.mrf.mxu0
    %v1105 = vadd.f32 %v1068, %v1104
    %v1106 = vand.u32 %v832, 4294901760
    %1107 = vmatmul.f32.gmra.mxu0 %v1106
    %v1108 = vpop.f32.mrf.mxu0
    %v1109 = vadd.f32 %v1072, %v1108
    %v1110 = vand.u32 %v835, 4294901760
    %1111 = vmatmul.f32.gmra.mxu0 %v1110
    %v1112 = vpop.f32.mrf.mxu0
    %v1113 = vadd.f32 %v1076, %v1112
    %1114 = vdwg.mxu0
    %1115 = vrot.lane.b32.xlu0 %v329, 120
    %v1116 = vpop.permute.xlu0 %1115
    %1117 = vrot.lane.b32.xlu0 %v333, 120
    %v1118 = vpop.permute.xlu0 %1117
    %1119 = vrot.lane.b32.xlu0 %v337, 120
    %v1120 = vpop.permute.xlu0 %1119
    %1121 = vrot.lane.b32.xlu0 %v341, 120
    %v1122 = vpop.permute.xlu0 %1121
    %1123 = vrot.lane.b32.xlu0 %v329, 88
    %v1124 = vpop.permute.xlu0 %1123
    %1125 = vrot.lane.b32.xlu0 %v333, 88
    %v1126 = vpop.permute.xlu0 %1125
    %1127 = vrot.lane.b32.xlu0 %v337, 88
    %v1128 = vpop.permute.xlu0 %1127
    %1129 = vrot.lane.b32.xlu0 %v341, 88
    %v1130 = vpop.permute.xlu0 %1129
    %v1131 = vsel %vm418, %v1116, 0
    %v1133 = vsel %vm418, %v1118, 0
    %v1135 = vsel %vm418, %v1120, 0
    %v1137 = vsel %vm418, %v1122, 0
    %v1139 = vsel %vm418, %v1124, 0
    %v1141 = vsel %vm418, %v1126, 0
    %v1143 = vsel %vm418, %v1128, 0
    %v1145 = vsel %vm418, %v1130, 0
    %1147 = vmatpush.xpose.msra.mxu0 0.0
    %1148 = vmatpush.xpose.msra.mxu0 0.0
    %1149 = vmatpush.xpose.msra.mxu0 0.0
    %1150 = vmatpush.xpose.msra.mxu0 0.0
    %1151 = vmatpush.xpose.msra.mxu0 0.0
    %1152 = vmatpush.xpose.msra.mxu0 0.0
    %1153 = vmatpush.xpose.msra.mxu0 0.0
    %1154 = vmatpush.xpose.msra.mxu0 0.0
    %1155 = vmatpush.xpose.msra.mxu0 0.0
    %1156 = vmatpush.xpose.msra.mxu0 0.0
    %1157 = vmatpush.xpose.msra.mxu0 0.0
    %1158 = vmatpush.xpose.msra.mxu0 0.0
    %v1159 = vand.u32 %v1145, 4294901760
    %1160 = vmatpush.xpose.msra.mxu0 %v1159
    %v1161 = vand.u32 %v1143, 4294901760
    %1162 = vmatpush.xpose.msra.mxu0 %v1161
    %v1163 = vand.u32 %v1141, 4294901760
    %1164 = vmatpush.xpose.msra.mxu0 %v1163
    %v1165 = vand.u32 %v1139, 4294901760
    %1166 = vmatpush.xpose.msra.mxu0 %v1165
    %v1167 = vand.u32 %v1131, 4294901760
    %v1168 = vsub.f32 %v1131, %v1167
    %v1169 = vand.u32 %v1168, 4294901760
    %v1170 = vsub.f32 %v1168, %v1169
    %v1171 = vand.u32 %v1170, 4294901760
    %1172 = vmatmul.f32.gmra.mxu0 %v1171
    %v1173 = vpop.f32.mrf.mxu0
    %v1174 = vadd.f32 %v402, %v1173
    %v1175 = vand.u32 %v1133, 4294901760
    %v1176 = vsub.f32 %v1133, %v1175
    %v1177 = vand.u32 %v1176, 4294901760
    %v1178 = vsub.f32 %v1176, %v1177
    %v1179 = vand.u32 %v1178, 4294901760
    %1180 = vmatmul.f32.gmra.mxu0 %v1179
    %v1181 = vpop.f32.mrf.mxu0
    %v1182 = vadd.f32 %v403, %v1181
    %v1183 = vand.u32 %v1135, 4294901760
    %v1184 = vsub.f32 %v1135, %v1183
    %v1185 = vand.u32 %v1184, 4294901760
    %v1186 = vsub.f32 %v1184, %v1185
    %v1187 = vand.u32 %v1186, 4294901760
    %1188 = vmatmul.f32.gmra.mxu0 %v1187
    %v1189 = vpop.f32.mrf.mxu0
    %v1190 = vadd.f32 %v404, %v1189
    %v1191 = vand.u32 %v1137, 4294901760
    %v1192 = vsub.f32 %v1137, %v1191
    %v1193 = vand.u32 %v1192, 4294901760
    %v1194 = vsub.f32 %v1192, %v1193
    %v1195 = vand.u32 %v1194, 4294901760
    %1196 = vmatmul.f32.gmra.mxu0 %v1195
    %v1197 = vpop.f32.mrf.mxu0
    %v1198 = vadd.f32 %v405, %v1197
    %1199 = vdwg.mxu0
    %1200 = vmatpush.xpose.msra.mxu0 0.0
    %1201 = vmatpush.xpose.msra.mxu0 0.0
    %1202 = vmatpush.xpose.msra.mxu0 0.0
    %1203 = vmatpush.xpose.msra.mxu0 0.0
    %1204 = vmatpush.xpose.msra.mxu0 0.0
    %1205 = vmatpush.xpose.msra.mxu0 0.0
    %1206 = vmatpush.xpose.msra.mxu0 0.0
    %1207 = vmatpush.xpose.msra.mxu0 0.0
    %1208 = vmatpush.xpose.msra.mxu0 0.0
    %1209 = vmatpush.xpose.msra.mxu0 0.0
    %1210 = vmatpush.xpose.msra.mxu0 0.0
    %1211 = vmatpush.xpose.msra.mxu0 0.0
    %v1212 = vand.u32 %v1145, 4294901760
    %v1213 = vsub.f32 %v1145, %v1212
    %v1214 = vand.u32 %v1213, 4294901760
    %v1215 = vsub.f32 %v1213, %v1214
    %v1216 = vand.u32 %v1215, 4294901760
    %1217 = vmatpush.xpose.msra.mxu0 %v1216
    %v1218 = vand.u32 %v1143, 4294901760
    %v1219 = vsub.f32 %v1143, %v1218
    %v1220 = vand.u32 %v1219, 4294901760
    %v1221 = vsub.f32 %v1219, %v1220
    %v1222 = vand.u32 %v1221, 4294901760
    %1223 = vmatpush.xpose.msra.mxu0 %v1222
    %v1224 = vand.u32 %v1141, 4294901760
    %v1225 = vsub.f32 %v1141, %v1224
    %v1226 = vand.u32 %v1225, 4294901760
    %v1227 = vsub.f32 %v1225, %v1226
    %v1228 = vand.u32 %v1227, 4294901760
    %1229 = vmatpush.xpose.msra.mxu0 %v1228
    %v1230 = vand.u32 %v1139, 4294901760
    %v1231 = vsub.f32 %v1139, %v1230
    %v1232 = vand.u32 %v1231, 4294901760
    %v1233 = vsub.f32 %v1231, %v1232
    %v1234 = vand.u32 %v1233, 4294901760
    %1235 = vmatpush.xpose.msra.mxu0 %v1234
    %v1236 = vand.u32 %v1131, 4294901760
    %1237 = vmatmul.f32.gmra.mxu0 %v1236
    %v1238 = vpop.f32.mrf.mxu0
    %v1239 = vadd.f32 %v1174, %v1238
    %v1240 = vand.u32 %v1133, 4294901760
    %1241 = vmatmul.f32.gmra.mxu0 %v1240
    %v1242 = vpop.f32.mrf.mxu0
    %v1243 = vadd.f32 %v1182, %v1242
    %v1244 = vand.u32 %v1135, 4294901760
    %1245 = vmatmul.f32.gmra.mxu0 %v1244
    %v1246 = vpop.f32.mrf.mxu0
    %v1247 = vadd.f32 %v1190, %v1246
    %v1248 = vand.u32 %v1137, 4294901760
    %1249 = vmatmul.f32.gmra.mxu0 %v1248
    %v1250 = vpop.f32.mrf.mxu0
    %v1251 = vadd.f32 %v1198, %v1250
    %1252 = vdwg.mxu0
    %1253 = vmatpush.xpose.msra.mxu0 0.0
    %1254 = vmatpush.xpose.msra.mxu0 0.0
    %1255 = vmatpush.xpose.msra.mxu0 0.0
    %1256 = vmatpush.xpose.msra.mxu0 0.0
    %1257 = vmatpush.xpose.msra.mxu0 0.0
    %1258 = vmatpush.xpose.msra.mxu0 0.0
    %1259 = vmatpush.xpose.msra.mxu0 0.0
    %1260 = vmatpush.xpose.msra.mxu0 0.0
    %1261 = vmatpush.xpose.msra.mxu0 0.0
    %1262 = vmatpush.xpose.msra.mxu0 0.0
    %1263 = vmatpush.xpose.msra.mxu0 0.0
    %1264 = vmatpush.xpose.msra.mxu0 0.0
    %v1265 = vand.u32 %v1145, 4294901760
    %v1266 = vsub.f32 %v1145, %v1265
    %1267 = vmatpush.xpose.msra.mxu0 %v1266
    %v1268 = vand.u32 %v1143, 4294901760
    %v1269 = vsub.f32 %v1143, %v1268
    %1270 = vmatpush.xpose.msra.mxu0 %v1269
    %v1271 = vand.u32 %v1141, 4294901760
    %v1272 = vsub.f32 %v1141, %v1271
    %1273 = vmatpush.xpose.msra.mxu0 %v1272
    %v1274 = vand.u32 %v1139, 4294901760
    %v1275 = vsub.f32 %v1139, %v1274
    %1276 = vmatpush.xpose.msra.mxu0 %v1275
    %v1277 = vand.u32 %v1131, 4294901760
    %v1278 = vsub.f32 %v1131, %v1277
    %1279 = vmatmul.f32.gmra.mxu0 %v1278
    %v1280 = vpop.f32.mrf.mxu0
    %v1281 = vadd.f32 %v1239, %v1280
    %v1282 = vand.u32 %v1133, 4294901760
    %v1283 = vsub.f32 %v1133, %v1282
    %1284 = vmatmul.f32.gmra.mxu0 %v1283
    %v1285 = vpop.f32.mrf.mxu0
    %v1286 = vadd.f32 %v1243, %v1285
    %v1287 = vand.u32 %v1135, 4294901760
    %v1288 = vsub.f32 %v1135, %v1287
    %1289 = vmatmul.f32.gmra.mxu0 %v1288
    %v1290 = vpop.f32.mrf.mxu0
    %v1291 = vadd.f32 %v1247, %v1290
    %v1292 = vand.u32 %v1137, 4294901760
    %v1293 = vsub.f32 %v1137, %v1292
    %1294 = vmatmul.f32.gmra.mxu0 %v1293
    %v1295 = vpop.f32.mrf.mxu0
    %v1296 = vadd.f32 %v1251, %v1295
    %1297 = vdwg.mxu0
    %1298 = vmatpush.xpose.msra.mxu0 0.0
    %1299 = vmatpush.xpose.msra.mxu0 0.0
    %1300 = vmatpush.xpose.msra.mxu0 0.0
    %1301 = vmatpush.xpose.msra.mxu0 0.0
    %1302 = vmatpush.xpose.msra.mxu0 0.0
    %1303 = vmatpush.xpose.msra.mxu0 0.0
    %1304 = vmatpush.xpose.msra.mxu0 0.0
    %1305 = vmatpush.xpose.msra.mxu0 0.0
    %1306 = vmatpush.xpose.msra.mxu0 0.0
    %1307 = vmatpush.xpose.msra.mxu0 0.0
    %1308 = vmatpush.xpose.msra.mxu0 0.0
    %1309 = vmatpush.xpose.msra.mxu0 0.0
    %v1310 = vand.u32 %v1145, 4294901760
    %1311 = vmatpush.xpose.msra.mxu0 %v1310
    %v1312 = vand.u32 %v1143, 4294901760
    %1313 = vmatpush.xpose.msra.mxu0 %v1312
    %v1314 = vand.u32 %v1141, 4294901760
    %1315 = vmatpush.xpose.msra.mxu0 %v1314
    %v1316 = vand.u32 %v1139, 4294901760
    %1317 = vmatpush.xpose.msra.mxu0 %v1316
    %v1318 = vand.u32 %v1131, 4294901760
    %v1319 = vsub.f32 %v1131, %v1318
    %v1320 = vand.u32 %v1319, 4294901760
    %1321 = vmatmul.f32.gmra.mxu0 %v1320
    %v1322 = vpop.f32.mrf.mxu0
    %v1323 = vadd.f32 %v1281, %v1322
    %v1324 = vand.u32 %v1133, 4294901760
    %v1325 = vsub.f32 %v1133, %v1324
    %v1326 = vand.u32 %v1325, 4294901760
    %1327 = vmatmul.f32.gmra.mxu0 %v1326
    %v1328 = vpop.f32.mrf.mxu0
    %v1329 = vadd.f32 %v1286, %v1328
    %v1330 = vand.u32 %v1135, 4294901760
    %v1331 = vsub.f32 %v1135, %v1330
    %v1332 = vand.u32 %v1331, 4294901760
    %1333 = vmatmul.f32.gmra.mxu0 %v1332
    %v1334 = vpop.f32.mrf.mxu0
    %v1335 = vadd.f32 %v1291, %v1334
    %v1336 = vand.u32 %v1137, 4294901760
    %v1337 = vsub.f32 %v1137, %v1336
    %v1338 = vand.u32 %v1337, 4294901760
    %1339 = vmatmul.f32.gmra.mxu0 %v1338
    %v1340 = vpop.f32.mrf.mxu0
    %v1341 = vadd.f32 %v1296, %v1340
    %1342 = vdwg.mxu0
    %1343 = vmatpush.xpose.msra.mxu0 0.0
    %1344 = vmatpush.xpose.msra.mxu0 0.0
    %1345 = vmatpush.xpose.msra.mxu0 0.0
    %1346 = vmatpush.xpose.msra.mxu0 0.0
    %1347 = vmatpush.xpose.msra.mxu0 0.0
    %1348 = vmatpush.xpose.msra.mxu0 0.0
    %1349 = vmatpush.xpose.msra.mxu0 0.0
    %1350 = vmatpush.xpose.msra.mxu0 0.0
    %1351 = vmatpush.xpose.msra.mxu0 0.0
    %1352 = vmatpush.xpose.msra.mxu0 0.0
    %1353 = vmatpush.xpose.msra.mxu0 0.0
    %1354 = vmatpush.xpose.msra.mxu0 0.0
    %v1355 = vand.u32 %v1145, 4294901760
    %v1356 = vsub.f32 %v1145, %v1355
    %v1357 = vand.u32 %v1356, 4294901760
    %1358 = vmatpush.xpose.msra.mxu0 %v1357
    %v1359 = vand.u32 %v1143, 4294901760
    %v1360 = vsub.f32 %v1143, %v1359
    %v1361 = vand.u32 %v1360, 4294901760
    %1362 = vmatpush.xpose.msra.mxu0 %v1361
    %v1363 = vand.u32 %v1141, 4294901760
    %v1364 = vsub.f32 %v1141, %v1363
    %v1365 = vand.u32 %v1364, 4294901760
    %1366 = vmatpush.xpose.msra.mxu0 %v1365
    %v1367 = vand.u32 %v1139, 4294901760
    %v1368 = vsub.f32 %v1139, %v1367
    %v1369 = vand.u32 %v1368, 4294901760
    %1370 = vmatpush.xpose.msra.mxu0 %v1369
    %v1371 = vand.u32 %v1131, 4294901760
    %1372 = vmatmul.f32.gmra.mxu0 %v1371
    %v1373 = vpop.f32.mrf.mxu0
    %v1374 = vadd.f32 %v1323, %v1373
    %v1375 = vand.u32 %v1133, 4294901760
    %1376 = vmatmul.f32.gmra.mxu0 %v1375
    %v1377 = vpop.f32.mrf.mxu0
    %v1378 = vadd.f32 %v1329, %v1377
    %v1379 = vand.u32 %v1135, 4294901760
    %1380 = vmatmul.f32.gmra.mxu0 %v1379
    %v1381 = vpop.f32.mrf.mxu0
    %v1382 = vadd.f32 %v1335, %v1381
    %v1383 = vand.u32 %v1137, 4294901760
    %1384 = vmatmul.f32.gmra.mxu0 %v1383
    %v1385 = vpop.f32.mrf.mxu0
    %v1386 = vadd.f32 %v1341, %v1385
    %1387 = vdwg.mxu0
    %1388 = vmatpush.xpose.msra.mxu0 0.0
    %1389 = vmatpush.xpose.msra.mxu0 0.0
    %1390 = vmatpush.xpose.msra.mxu0 0.0
    %1391 = vmatpush.xpose.msra.mxu0 0.0
    %1392 = vmatpush.xpose.msra.mxu0 0.0
    %1393 = vmatpush.xpose.msra.mxu0 0.0
    %1394 = vmatpush.xpose.msra.mxu0 0.0
    %1395 = vmatpush.xpose.msra.mxu0 0.0
    %1396 = vmatpush.xpose.msra.mxu0 0.0
    %1397 = vmatpush.xpose.msra.mxu0 0.0
    %1398 = vmatpush.xpose.msra.mxu0 0.0
    %1399 = vmatpush.xpose.msra.mxu0 0.0
    %v1400 = vand.u32 %v1145, 4294901760
    %1401 = vmatpush.xpose.msra.mxu0 %v1400
    %v1402 = vand.u32 %v1143, 4294901760
    %1403 = vmatpush.xpose.msra.mxu0 %v1402
    %v1404 = vand.u32 %v1141, 4294901760
    %1405 = vmatpush.xpose.msra.mxu0 %v1404
    %v1406 = vand.u32 %v1139, 4294901760
    %1407 = vmatpush.xpose.msra.mxu0 %v1406
    %v1408 = vand.u32 %v1131, 4294901760
    %1409 = vmatmul.f32.gmra.mxu0 %v1408
    %v1410 = vpop.f32.mrf.mxu0
    %v1411 = vadd.f32 %v1374, %v1410
    %v1412 = vand.u32 %v1133, 4294901760
    %1413 = vmatmul.f32.gmra.mxu0 %v1412
    %v1414 = vpop.f32.mrf.mxu0
    %v1415 = vadd.f32 %v1378, %v1414
    %v1416 = vand.u32 %v1135, 4294901760
    %1417 = vmatmul.f32.gmra.mxu0 %v1416
    %v1418 = vpop.f32.mrf.mxu0
    %v1419 = vadd.f32 %v1382, %v1418
    %v1420 = vand.u32 %v1137, 4294901760
    %1421 = vmatmul.f32.gmra.mxu0 %v1420
    %v1422 = vpop.f32.mrf.mxu0
    %v1423 = vadd.f32 %v1386, %v1422
    %1424 = vdwg.mxu0
    %v1425 = vsel %vm52, %v1411, -inf
    %1426 = vmax.xlane.f32.xlu0 %v1425
    %v1427 = vpop.xlane.xlu0 %1426
    %v1428 = vsel %vm52, %v1415, -inf
    %1429 = vmax.xlane.f32.xlu0 %v1428
    %v1430 = vpop.xlane.xlu0 %1429
    %v1431 = vsel %vm52, %v1419, -inf
    %1432 = vmax.xlane.f32.xlu0 %v1431
    %v1433 = vpop.xlane.xlu0 %1432
    %v1434 = vsel %vm52, %v1423, -inf
    %1435 = vmax.xlane.f32.xlu0 %v1434
    %v1436 = vpop.xlane.xlu0 %1435
    %v1437 = vsub.f32 %v1411, %v1427
    %v1438 = vsub.f32 %v1415, %v1430
    %v1439 = vsub.f32 %v1419, %v1433
    %v1440 = vsub.f32 %v1423, %v1436
    %v1441 = vmul.f32 %v1437, 1.442695
    %v1442 = vpow.pop %v1441
    %v1443 = vmul.f32 %v1438, 1.442695
    %v1444 = vpow.pop %v1443
    %v1445 = vmul.f32 %v1439, 1.442695
    %v1446 = vpow.pop %v1445
    %v1447 = vmul.f32 %v1440, 1.442695
    %v1448 = vpow.pop %v1447
    %v1449 = vsel %vm52, %v1442, 0.0
    %1450 = vadd.xlane.f32.xlu0 %v1449
    %v1451 = vpop.xlane.xlu0 %1450
    %v1452 = vsel %vm52, %v1444, 0.0
    %1453 = vadd.xlane.f32.xlu0 %v1452
    %v1454 = vpop.xlane.xlu0 %1453
    %v1455 = vsel %vm52, %v1446, 0.0
    %1456 = vadd.xlane.f32.xlu0 %v1455
    %v1457 = vpop.xlane.xlu0 %1456
    %v1458 = vsel %vm52, %v1448, 0.0
    %1459 = vadd.xlane.f32.xlu0 %v1458
    %v1460 = vpop.xlane.xlu0 %1459
    %v1461 = vrcp.pop %v1451
    %v1462 = vmul.f32 %v1451, %v1461
    %v1463 = vsub.f32 1.0, %v1462
    %v1464 = vmul.f32 %v1461, %v1463
    %v1465 = vadd.f32 %v1461, %v1464
    %vm1466 = vweird.f32 %v1451
    %vm1467 = vweird.f32 %v1461
    %vm1468 = vmor %vm1466, %vm1467
    %v1469 = vsel %vm1468, %v1461, %v1465
    %v1470 = vand.u32 2147483647, %v1451
    %vm1471 = vcmp.eq.f32.partialorder %v1470, 8.507059e+37
    %v1472 = vand.u32 %v1451, 2147483648
    %v1473 = vor.u32 1.1754944e-38, %v1472
    %v1474 = vsel %vm1471, %v1473, %v1469
    %v1475 = vmul.f32 1.0, %v1474
    %v1476 = vrcp.pop %v1454
    %v1477 = vmul.f32 %v1454, %v1476
    %v1478 = vsub.f32 1.0, %v1477
    %v1479 = vmul.f32 %v1476, %v1478
    %v1480 = vadd.f32 %v1476, %v1479
    %vm1481 = vweird.f32 %v1454
    %vm1482 = vweird.f32 %v1476
    %vm1483 = vmor %vm1481, %vm1482
    %v1484 = vsel %vm1483, %v1476, %v1480
    %v1485 = vand.u32 2147483647, %v1454
    %vm1486 = vcmp.eq.f32.partialorder %v1485, 8.507059e+37
    %v1487 = vand.u32 %v1454, 2147483648
    %v1488 = vor.u32 1.1754944e-38, %v1487
    %v1489 = vsel %vm1486, %v1488, %v1484
    %v1490 = vmul.f32 1.0, %v1489
    %v1491 = vrcp.pop %v1457
    %v1492 = vmul.f32 %v1457, %v1491
    %v1493 = vsub.f32 1.0, %v1492
    %v1494 = vmul.f32 %v1491, %v1493
    %v1495 = vadd.f32 %v1491, %v1494
    %vm1496 = vweird.f32 %v1457
    %vm1497 = vweird.f32 %v1491
    %vm1498 = vmor %vm1496, %vm1497
    %v1499 = vsel %vm1498, %v1491, %v1495
    %v1500 = vand.u32 2147483647, %v1457
    %vm1501 = vcmp.eq.f32.partialorder %v1500, 8.507059e+37
    %v1502 = vand.u32 %v1457, 2147483648
    %v1503 = vor.u32 1.1754944e-38, %v1502
    %v1504 = vsel %vm1501, %v1503, %v1499
    %v1505 = vmul.f32 1.0, %v1504
    %v1506 = vrcp.pop %v1460
    %v1507 = vmul.f32 %v1460, %v1506
    %v1508 = vsub.f32 1.0, %v1507
    %v1509 = vmul.f32 %v1506, %v1508
    %v1510 = vadd.f32 %v1506, %v1509
    %vm1511 = vweird.f32 %v1460
    %vm1512 = vweird.f32 %v1506
    %vm1513 = vmor %vm1511, %vm1512
    %v1514 = vsel %vm1513, %v1506, %v1510
    %v1515 = vand.u32 2147483647, %v1460
    %vm1516 = vcmp.eq.f32.partialorder %v1515, 8.507059e+37
    %v1517 = vand.u32 %v1460, 2147483648
    %v1518 = vor.u32 1.1754944e-38, %v1517
    %v1519 = vsel %vm1516, %v1518, %v1514
    %v1520 = vmul.f32 1.0, %v1519
    %v1521 = vmul.f32 %v1442, %v1475
    %v1522 = vmul.f32 %v1444, %v1490
    %v1523 = vmul.f32 %v1446, %v1505
    %v1524 = vmul.f32 %v1448, %v1520
    %1525 = vrot.lane.b32.xlu0 %v329, 56
    %v1526 = vpop.permute.xlu0 %1525
    %1527 = vrot.lane.b32.xlu0 %v333, 56
    %v1528 = vpop.permute.xlu0 %1527
    %1529 = vrot.lane.b32.xlu0 %v337, 56
    %v1530 = vpop.permute.xlu0 %1529
    %1531 = vrot.lane.b32.xlu0 %v341, 56
    %v1532 = vpop.permute.xlu0 %1531
    %v1538 = vsel %vm52, %v1521, 0
    %v1541 = vsel %vm52, %v1522, 0
    %v1544 = vsel %vm52, %v1523, 0
    %v1547 = vsel %vm52, %v1524, 0
    %1549 = vmatpush.msra.mxu0 0.0
    %1550 = vmatpush.msra.mxu0 0.0
    %1551 = vmatpush.msra.mxu0 0.0
    %1552 = vmatpush.msra.mxu0 0.0
    %1553 = vmatpush.msra.mxu0 0.0
    %1554 = vmatpush.msra.mxu0 0.0
    %1555 = vmatpush.msra.mxu0 0.0
    %1556 = vmatpush.msra.mxu0 0.0
    %1557 = vmatpush.msra.mxu0 0.0
    %1558 = vmatpush.msra.mxu0 0.0
    %1559 = vmatpush.msra.mxu0 0.0
    %1560 = vmatpush.msra.mxu0 0.0
    %v1561 = vand.u32 %v1532, 4294901760
    %1562 = vmatpush.msra.mxu0 %v1561
    %v1563 = vand.u32 %v1530, 4294901760
    %1564 = vmatpush.msra.mxu0 %v1563
    %v1565 = vand.u32 %v1528, 4294901760
    %1566 = vmatpush.msra.mxu0 %v1565
    %v1567 = vand.u32 %v1526, 4294901760
    %1568 = vmatpush.msra.mxu0 %v1567
    %v1569 = vand.u32 %v1538, 4294901760
    %v1570 = vsub.f32 %v1538, %v1569
    %v1571 = vand.u32 %v1570, 4294901760
    %v1572 = vsub.f32 %v1570, %v1571
    %v1573 = vand.u32 %v1572, 4294901760
    %1574 = vmatmul.f32.gmra.mxu0 %v1573
    %v1575 = vpop.f32.mrf.mxu0
    %v1576 = vadd.f32 0.0, %v1575
    %v1577 = vand.u32 %v1541, 4294901760
    %v1578 = vsub.f32 %v1541, %v1577
    %v1579 = vand.u32 %v1578, 4294901760
    %v1580 = vsub.f32 %v1578, %v1579
    %v1581 = vand.u32 %v1580, 4294901760
    %1582 = vmatmul.f32.gmra.mxu0 %v1581
    %v1583 = vpop.f32.mrf.mxu0
    %v1584 = vadd.f32 0.0, %v1583
    %v1585 = vand.u32 %v1544, 4294901760
    %v1586 = vsub.f32 %v1544, %v1585
    %v1587 = vand.u32 %v1586, 4294901760
    %v1588 = vsub.f32 %v1586, %v1587
    %v1589 = vand.u32 %v1588, 4294901760
    %1590 = vmatmul.f32.gmra.mxu0 %v1589
    %v1591 = vpop.f32.mrf.mxu0
    %v1592 = vadd.f32 0.0, %v1591
    %v1593 = vand.u32 %v1547, 4294901760
    %v1594 = vsub.f32 %v1547, %v1593
    %v1595 = vand.u32 %v1594, 4294901760
    %v1596 = vsub.f32 %v1594, %v1595
    %v1597 = vand.u32 %v1596, 4294901760
    %1598 = vmatmul.f32.gmra.mxu0 %v1597
    %v1599 = vpop.f32.mrf.mxu0
    %v1600 = vadd.f32 0.0, %v1599
    %1601 = vdwg.mxu0
    %1602 = vmatpush.msra.mxu0 0.0
    %1603 = vmatpush.msra.mxu0 0.0
    %1604 = vmatpush.msra.mxu0 0.0
    %1605 = vmatpush.msra.mxu0 0.0
    %1606 = vmatpush.msra.mxu0 0.0
    %1607 = vmatpush.msra.mxu0 0.0
    %1608 = vmatpush.msra.mxu0 0.0
    %1609 = vmatpush.msra.mxu0 0.0
    %1610 = vmatpush.msra.mxu0 0.0
    %1611 = vmatpush.msra.mxu0 0.0
    %1612 = vmatpush.msra.mxu0 0.0
    %1613 = vmatpush.msra.mxu0 0.0
    %v1614 = vand.u32 %v1532, 4294901760
    %v1615 = vsub.f32 %v1532, %v1614
    %v1616 = vand.u32 %v1615, 4294901760
    %v1617 = vsub.f32 %v1615, %v1616
    %v1618 = vand.u32 %v1617, 4294901760
    %1619 = vmatpush.msra.mxu0 %v1618
    %v1620 = vand.u32 %v1530, 4294901760
    %v1621 = vsub.f32 %v1530, %v1620
    %v1622 = vand.u32 %v1621, 4294901760
    %v1623 = vsub.f32 %v1621, %v1622
    %v1624 = vand.u32 %v1623, 4294901760
    %1625 = vmatpush.msra.mxu0 %v1624
    %v1626 = vand.u32 %v1528, 4294901760
    %v1627 = vsub.f32 %v1528, %v1626
    %v1628 = vand.u32 %v1627, 4294901760
    %v1629 = vsub.f32 %v1627, %v1628
    %v1630 = vand.u32 %v1629, 4294901760
    %1631 = vmatpush.msra.mxu0 %v1630
    %v1632 = vand.u32 %v1526, 4294901760
    %v1633 = vsub.f32 %v1526, %v1632
    %v1634 = vand.u32 %v1633, 4294901760
    %v1635 = vsub.f32 %v1633, %v1634
    %v1636 = vand.u32 %v1635, 4294901760
    %1637 = vmatpush.msra.mxu0 %v1636
    %v1638 = vand.u32 %v1538, 4294901760
    %1639 = vmatmul.f32.gmra.mxu0 %v1638
    %v1640 = vpop.f32.mrf.mxu0
    %v1641 = vadd.f32 %v1576, %v1640
    %v1642 = vand.u32 %v1541, 4294901760
    %1643 = vmatmul.f32.gmra.mxu0 %v1642
    %v1644 = vpop.f32.mrf.mxu0
    %v1645 = vadd.f32 %v1584, %v1644
    %v1646 = vand.u32 %v1544, 4294901760
    %1647 = vmatmul.f32.gmra.mxu0 %v1646
    %v1648 = vpop.f32.mrf.mxu0
    %v1649 = vadd.f32 %v1592, %v1648
    %v1650 = vand.u32 %v1547, 4294901760
    %1651 = vmatmul.f32.gmra.mxu0 %v1650
    %v1652 = vpop.f32.mrf.mxu0
    %v1653 = vadd.f32 %v1600, %v1652
    %1654 = vdwg.mxu0
    %1655 = vmatpush.msra.mxu0 0.0
    %1656 = vmatpush.msra.mxu0 0.0
    %1657 = vmatpush.msra.mxu0 0.0
    %1658 = vmatpush.msra.mxu0 0.0
    %1659 = vmatpush.msra.mxu0 0.0
    %1660 = vmatpush.msra.mxu0 0.0
    %1661 = vmatpush.msra.mxu0 0.0
    %1662 = vmatpush.msra.mxu0 0.0
    %1663 = vmatpush.msra.mxu0 0.0
    %1664 = vmatpush.msra.mxu0 0.0
    %1665 = vmatpush.msra.mxu0 0.0
    %1666 = vmatpush.msra.mxu0 0.0
    %v1667 = vand.u32 %v1532, 4294901760
    %v1668 = vsub.f32 %v1532, %v1667
    %1669 = vmatpush.msra.mxu0 %v1668
    %v1670 = vand.u32 %v1530, 4294901760
    %v1671 = vsub.f32 %v1530, %v1670
    %1672 = vmatpush.msra.mxu0 %v1671
    %v1673 = vand.u32 %v1528, 4294901760
    %v1674 = vsub.f32 %v1528, %v1673
    %1675 = vmatpush.msra.mxu0 %v1674
    %v1676 = vand.u32 %v1526, 4294901760
    %v1677 = vsub.f32 %v1526, %v1676
    %1678 = vmatpush.msra.mxu0 %v1677
    %v1679 = vand.u32 %v1538, 4294901760
    %v1680 = vsub.f32 %v1538, %v1679
    %1681 = vmatmul.f32.gmra.mxu0 %v1680
    %v1682 = vpop.f32.mrf.mxu0
    %v1683 = vadd.f32 %v1641, %v1682
    %v1684 = vand.u32 %v1541, 4294901760
    %v1685 = vsub.f32 %v1541, %v1684
    %1686 = vmatmul.f32.gmra.mxu0 %v1685
    %v1687 = vpop.f32.mrf.mxu0
    %v1688 = vadd.f32 %v1645, %v1687
    %v1689 = vand.u32 %v1544, 4294901760
    %v1690 = vsub.f32 %v1544, %v1689
    %1691 = vmatmul.f32.gmra.mxu0 %v1690
    %v1692 = vpop.f32.mrf.mxu0
    %v1693 = vadd.f32 %v1649, %v1692
    %v1694 = vand.u32 %v1547, 4294901760
    %v1695 = vsub.f32 %v1547, %v1694
    %1696 = vmatmul.f32.gmra.mxu0 %v1695
    %v1697 = vpop.f32.mrf.mxu0
    %v1698 = vadd.f32 %v1653, %v1697
    %1699 = vdwg.mxu0
    %1700 = vmatpush.msra.mxu0 0.0
    %1701 = vmatpush.msra.mxu0 0.0
    %1702 = vmatpush.msra.mxu0 0.0
    %1703 = vmatpush.msra.mxu0 0.0
    %1704 = vmatpush.msra.mxu0 0.0
    %1705 = vmatpush.msra.mxu0 0.0
    %1706 = vmatpush.msra.mxu0 0.0
    %1707 = vmatpush.msra.mxu0 0.0
    %1708 = vmatpush.msra.mxu0 0.0
    %1709 = vmatpush.msra.mxu0 0.0
    %1710 = vmatpush.msra.mxu0 0.0
    %1711 = vmatpush.msra.mxu0 0.0
    %v1712 = vand.u32 %v1532, 4294901760
    %1713 = vmatpush.msra.mxu0 %v1712
    %v1714 = vand.u32 %v1530, 4294901760
    %1715 = vmatpush.msra.mxu0 %v1714
    %v1716 = vand.u32 %v1528, 4294901760
    %1717 = vmatpush.msra.mxu0 %v1716
    %v1718 = vand.u32 %v1526, 4294901760
    %1719 = vmatpush.msra.mxu0 %v1718
    %v1720 = vand.u32 %v1538, 4294901760
    %v1721 = vsub.f32 %v1538, %v1720
    %v1722 = vand.u32 %v1721, 4294901760
    %1723 = vmatmul.f32.gmra.mxu0 %v1722
    %v1724 = vpop.f32.mrf.mxu0
    %v1725 = vadd.f32 %v1683, %v1724
    %v1726 = vand.u32 %v1541, 4294901760
    %v1727 = vsub.f32 %v1541, %v1726
    %v1728 = vand.u32 %v1727, 4294901760
    %1729 = vmatmul.f32.gmra.mxu0 %v1728
    %v1730 = vpop.f32.mrf.mxu0
    %v1731 = vadd.f32 %v1688, %v1730
    %v1732 = vand.u32 %v1544, 4294901760
    %v1733 = vsub.f32 %v1544, %v1732
    %v1734 = vand.u32 %v1733, 4294901760
    %1735 = vmatmul.f32.gmra.mxu0 %v1734
    %v1736 = vpop.f32.mrf.mxu0
    %v1737 = vadd.f32 %v1693, %v1736
    %v1738 = vand.u32 %v1547, 4294901760
    %v1739 = vsub.f32 %v1547, %v1738
    %v1740 = vand.u32 %v1739, 4294901760
    %1741 = vmatmul.f32.gmra.mxu0 %v1740
    %v1742 = vpop.f32.mrf.mxu0
    %v1743 = vadd.f32 %v1698, %v1742
    %1744 = vdwg.mxu0
    %1745 = vmatpush.msra.mxu0 0.0
    %1746 = vmatpush.msra.mxu0 0.0
    %1747 = vmatpush.msra.mxu0 0.0
    %1748 = vmatpush.msra.mxu0 0.0
    %1749 = vmatpush.msra.mxu0 0.0
    %1750 = vmatpush.msra.mxu0 0.0
    %1751 = vmatpush.msra.mxu0 0.0
    %1752 = vmatpush.msra.mxu0 0.0
    %1753 = vmatpush.msra.mxu0 0.0
    %1754 = vmatpush.msra.mxu0 0.0
    %1755 = vmatpush.msra.mxu0 0.0
    %1756 = vmatpush.msra.mxu0 0.0
    %v1757 = vand.u32 %v1532, 4294901760
    %v1758 = vsub.f32 %v1532, %v1757
    %v1759 = vand.u32 %v1758, 4294901760
    %1760 = vmatpush.msra.mxu0 %v1759
    %v1761 = vand.u32 %v1530, 4294901760
    %v1762 = vsub.f32 %v1530, %v1761
    %v1763 = vand.u32 %v1762, 4294901760
    %1764 = vmatpush.msra.mxu0 %v1763
    %v1765 = vand.u32 %v1528, 4294901760
    %v1766 = vsub.f32 %v1528, %v1765
    %v1767 = vand.u32 %v1766, 4294901760
    %1768 = vmatpush.msra.mxu0 %v1767
    %v1769 = vand.u32 %v1526, 4294901760
    %v1770 = vsub.f32 %v1526, %v1769
    %v1771 = vand.u32 %v1770, 4294901760
    %1772 = vmatpush.msra.mxu0 %v1771
    %v1773 = vand.u32 %v1538, 4294901760
    %1774 = vmatmul.f32.gmra.mxu0 %v1773
    %v1775 = vpop.f32.mrf.mxu0
    %v1776 = vadd.f32 %v1725, %v1775
    %v1777 = vand.u32 %v1541, 4294901760
    %1778 = vmatmul.f32.gmra.mxu0 %v1777
    %v1779 = vpop.f32.mrf.mxu0
    %v1780 = vadd.f32 %v1731, %v1779
    %v1781 = vand.u32 %v1544, 4294901760
    %1782 = vmatmul.f32.gmra.mxu0 %v1781
    %v1783 = vpop.f32.mrf.mxu0
    %v1784 = vadd.f32 %v1737, %v1783
    %v1785 = vand.u32 %v1547, 4294901760
    %1786 = vmatmul.f32.gmra.mxu0 %v1785
    %v1787 = vpop.f32.mrf.mxu0
    %v1788 = vadd.f32 %v1743, %v1787
    %1789 = vdwg.mxu0
    %1790 = vmatpush.msra.mxu0 0.0
    %1791 = vmatpush.msra.mxu0 0.0
    %1792 = vmatpush.msra.mxu0 0.0
    %1793 = vmatpush.msra.mxu0 0.0
    %1794 = vmatpush.msra.mxu0 0.0
    %1795 = vmatpush.msra.mxu0 0.0
    %1796 = vmatpush.msra.mxu0 0.0
    %1797 = vmatpush.msra.mxu0 0.0
    %1798 = vmatpush.msra.mxu0 0.0
    %1799 = vmatpush.msra.mxu0 0.0
    %1800 = vmatpush.msra.mxu0 0.0
    %1801 = vmatpush.msra.mxu0 0.0
    %v1802 = vand.u32 %v1532, 4294901760
    %1803 = vmatpush.msra.mxu0 %v1802
    %v1804 = vand.u32 %v1530, 4294901760
    %1805 = vmatpush.msra.mxu0 %v1804
    %v1806 = vand.u32 %v1528, 4294901760
    %1807 = vmatpush.msra.mxu0 %v1806
    %v1808 = vand.u32 %v1526, 4294901760
    %1809 = vmatpush.msra.mxu0 %v1808
    %v1810 = vand.u32 %v1538, 4294901760
    %1811 = vmatmul.f32.gmra.mxu0 %v1810
    %v1812 = vpop.f32.mrf.mxu0
    %v1813 = vadd.f32 %v1776, %v1812
    %v1814 = vand.u32 %v1541, 4294901760
    %1815 = vmatmul.f32.gmra.mxu0 %v1814
    %v1816 = vpop.f32.mrf.mxu0
    %v1817 = vadd.f32 %v1780, %v1816
    %v1818 = vand.u32 %v1544, 4294901760
    %1819 = vmatmul.f32.gmra.mxu0 %v1818
    %v1820 = vpop.f32.mrf.mxu0
    %v1821 = vadd.f32 %v1784, %v1820
    %v1822 = vand.u32 %v1547, 4294901760
    %1823 = vmatmul.f32.gmra.mxu0 %v1822
    %v1824 = vpop.f32.mrf.mxu0
    %v1825 = vadd.f32 %v1788, %v1824
    %1826 = vdwg.mxu0
    %1827 = vrot.lane.b32.xlu0 %v329, 112
    %v1828 = vpop.permute.xlu0 %1827
    %1829 = vrot.lane.b32.xlu0 %v333, 112
    %v1830 = vpop.permute.xlu0 %1829
    %1831 = vrot.lane.b32.xlu0 %v337, 112
    %v1832 = vpop.permute.xlu0 %1831
    %1833 = vrot.lane.b32.xlu0 %v341, 112
    %v1834 = vpop.permute.xlu0 %1833
    %1835 = vrot.lane.b32.xlu0 %v329, 80
    %v1836 = vpop.permute.xlu0 %1835
    %1837 = vrot.lane.b32.xlu0 %v333, 80
    %v1838 = vpop.permute.xlu0 %1837
    %1839 = vrot.lane.b32.xlu0 %v337, 80
    %v1840 = vpop.permute.xlu0 %1839
    %1841 = vrot.lane.b32.xlu0 %v341, 80
    %v1842 = vpop.permute.xlu0 %1841
    %v1843 = vsel %vm418, %v1828, 0
    %v1845 = vsel %vm418, %v1830, 0
    %v1847 = vsel %vm418, %v1832, 0
    %v1849 = vsel %vm418, %v1834, 0
    %v1851 = vsel %vm418, %v1836, 0
    %v1853 = vsel %vm418, %v1838, 0
    %v1855 = vsel %vm418, %v1840, 0
    %v1857 = vsel %vm418, %v1842, 0
    %1859 = vmatpush.xpose.msra.mxu0 0.0
    %1860 = vmatpush.xpose.msra.mxu0 0.0
    %1861 = vmatpush.xpose.msra.mxu0 0.0
    %1862 = vmatpush.xpose.msra.mxu0 0.0
    %1863 = vmatpush.xpose.msra.mxu0 0.0
    %1864 = vmatpush.xpose.msra.mxu0 0.0
    %1865 = vmatpush.xpose.msra.mxu0 0.0
    %1866 = vmatpush.xpose.msra.mxu0 0.0
    %1867 = vmatpush.xpose.msra.mxu0 0.0
    %1868 = vmatpush.xpose.msra.mxu0 0.0
    %1869 = vmatpush.xpose.msra.mxu0 0.0
    %1870 = vmatpush.xpose.msra.mxu0 0.0
    %v1871 = vand.u32 %v1857, 4294901760
    %1872 = vmatpush.xpose.msra.mxu0 %v1871
    %v1873 = vand.u32 %v1855, 4294901760
    %1874 = vmatpush.xpose.msra.mxu0 %v1873
    %v1875 = vand.u32 %v1853, 4294901760
    %1876 = vmatpush.xpose.msra.mxu0 %v1875
    %v1877 = vand.u32 %v1851, 4294901760
    %1878 = vmatpush.xpose.msra.mxu0 %v1877
    %v1879 = vand.u32 %v1843, 4294901760
    %v1880 = vsub.f32 %v1843, %v1879
    %v1881 = vand.u32 %v1880, 4294901760
    %v1882 = vsub.f32 %v1880, %v1881
    %v1883 = vand.u32 %v1882, 4294901760
    %1884 = vmatmul.f32.gmra.mxu0 %v1883
    %v1885 = vpop.f32.mrf.mxu0
    %v1886 = vadd.f32 %v402, %v1885
    %v1887 = vand.u32 %v1845, 4294901760
    %v1888 = vsub.f32 %v1845, %v1887
    %v1889 = vand.u32 %v1888, 4294901760
    %v1890 = vsub.f32 %v1888, %v1889
    %v1891 = vand.u32 %v1890, 4294901760
    %1892 = vmatmul.f32.gmra.mxu0 %v1891
    %v1893 = vpop.f32.mrf.mxu0
    %v1894 = vadd.f32 %v403, %v1893
    %v1895 = vand.u32 %v1847, 4294901760
    %v1896 = vsub.f32 %v1847, %v1895
    %v1897 = vand.u32 %v1896, 4294901760
    %v1898 = vsub.f32 %v1896, %v1897
    %v1899 = vand.u32 %v1898, 4294901760
    %1900 = vmatmul.f32.gmra.mxu0 %v1899
    %v1901 = vpop.f32.mrf.mxu0
    %v1902 = vadd.f32 %v404, %v1901
    %v1903 = vand.u32 %v1849, 4294901760
    %v1904 = vsub.f32 %v1849, %v1903
    %v1905 = vand.u32 %v1904, 4294901760
    %v1906 = vsub.f32 %v1904, %v1905
    %v1907 = vand.u32 %v1906, 4294901760
    %1908 = vmatmul.f32.gmra.mxu0 %v1907
    %v1909 = vpop.f32.mrf.mxu0
    %v1910 = vadd.f32 %v405, %v1909
    %1911 = vdwg.mxu0
    %1912 = vmatpush.xpose.msra.mxu0 0.0
    %1913 = vmatpush.xpose.msra.mxu0 0.0
    %1914 = vmatpush.xpose.msra.mxu0 0.0
    %1915 = vmatpush.xpose.msra.mxu0 0.0
    %1916 = vmatpush.xpose.msra.mxu0 0.0
    %1917 = vmatpush.xpose.msra.mxu0 0.0
    %1918 = vmatpush.xpose.msra.mxu0 0.0
    %1919 = vmatpush.xpose.msra.mxu0 0.0
    %1920 = vmatpush.xpose.msra.mxu0 0.0
    %1921 = vmatpush.xpose.msra.mxu0 0.0
    %1922 = vmatpush.xpose.msra.mxu0 0.0
    %1923 = vmatpush.xpose.msra.mxu0 0.0
    %v1924 = vand.u32 %v1857, 4294901760
    %v1925 = vsub.f32 %v1857, %v1924
    %v1926 = vand.u32 %v1925, 4294901760
    %v1927 = vsub.f32 %v1925, %v1926
    %v1928 = vand.u32 %v1927, 4294901760
    %1929 = vmatpush.xpose.msra.mxu0 %v1928
    %v1930 = vand.u32 %v1855, 4294901760
    %v1931 = vsub.f32 %v1855, %v1930
    %v1932 = vand.u32 %v1931, 4294901760
    %v1933 = vsub.f32 %v1931, %v1932
    %v1934 = vand.u32 %v1933, 4294901760
    %1935 = vmatpush.xpose.msra.mxu0 %v1934
    %v1936 = vand.u32 %v1853, 4294901760
    %v1937 = vsub.f32 %v1853, %v1936
    %v1938 = vand.u32 %v1937, 4294901760
    %v1939 = vsub.f32 %v1937, %v1938
    %v1940 = vand.u32 %v1939, 4294901760
    %1941 = vmatpush.xpose.msra.mxu0 %v1940
    %v1942 = vand.u32 %v1851, 4294901760
    %v1943 = vsub.f32 %v1851, %v1942
    %v1944 = vand.u32 %v1943, 4294901760
    %v1945 = vsub.f32 %v1943, %v1944
    %v1946 = vand.u32 %v1945, 4294901760
    %1947 = vmatpush.xpose.msra.mxu0 %v1946
    %v1948 = vand.u32 %v1843, 4294901760
    %1949 = vmatmul.f32.gmra.mxu0 %v1948
    %v1950 = vpop.f32.mrf.mxu0
    %v1951 = vadd.f32 %v1886, %v1950
    %v1952 = vand.u32 %v1845, 4294901760
    %1953 = vmatmul.f32.gmra.mxu0 %v1952
    %v1954 = vpop.f32.mrf.mxu0
    %v1955 = vadd.f32 %v1894, %v1954
    %v1956 = vand.u32 %v1847, 4294901760
    %1957 = vmatmul.f32.gmra.mxu0 %v1956
    %v1958 = vpop.f32.mrf.mxu0
    %v1959 = vadd.f32 %v1902, %v1958
    %v1960 = vand.u32 %v1849, 4294901760
    %1961 = vmatmul.f32.gmra.mxu0 %v1960
    %v1962 = vpop.f32.mrf.mxu0
    %v1963 = vadd.f32 %v1910, %v1962
    %1964 = vdwg.mxu0
    %1965 = vmatpush.xpose.msra.mxu0 0.0
    %1966 = vmatpush.xpose.msra.mxu0 0.0
    %1967 = vmatpush.xpose.msra.mxu0 0.0
    %1968 = vmatpush.xpose.msra.mxu0 0.0
    %1969 = vmatpush.xpose.msra.mxu0 0.0
    %1970 = vmatpush.xpose.msra.mxu0 0.0
    %1971 = vmatpush.xpose.msra.mxu0 0.0
    %1972 = vmatpush.xpose.msra.mxu0 0.0
    %1973 = vmatpush.xpose.msra.mxu0 0.0
    %1974 = vmatpush.xpose.msra.mxu0 0.0
    %1975 = vmatpush.xpose.msra.mxu0 0.0
    %1976 = vmatpush.xpose.msra.mxu0 0.0
    %v1977 = vand.u32 %v1857, 4294901760
    %v1978 = vsub.f32 %v1857, %v1977
    %1979 = vmatpush.xpose.msra.mxu0 %v1978
    %v1980 = vand.u32 %v1855, 4294901760
    %v1981 = vsub.f32 %v1855, %v1980
    %1982 = vmatpush.xpose.msra.mxu0 %v1981
    %v1983 = vand.u32 %v1853, 4294901760
    %v1984 = vsub.f32 %v1853, %v1983
    %1985 = vmatpush.xpose.msra.mxu0 %v1984
    %v1986 = vand.u32 %v1851, 4294901760
    %v1987 = vsub.f32 %v1851, %v1986
    %1988 = vmatpush.xpose.msra.mxu0 %v1987
    %v1989 = vand.u32 %v1843, 4294901760
    %v1990 = vsub.f32 %v1843, %v1989
    %1991 = vmatmul.f32.gmra.mxu0 %v1990
    %v1992 = vpop.f32.mrf.mxu0
    %v1993 = vadd.f32 %v1951, %v1992
    %v1994 = vand.u32 %v1845, 4294901760
    %v1995 = vsub.f32 %v1845, %v1994
    %1996 = vmatmul.f32.gmra.mxu0 %v1995
    %v1997 = vpop.f32.mrf.mxu0
    %v1998 = vadd.f32 %v1955, %v1997
    %v1999 = vand.u32 %v1847, 4294901760
    %v2000 = vsub.f32 %v1847, %v1999
    %2001 = vmatmul.f32.gmra.mxu0 %v2000
    %v2002 = vpop.f32.mrf.mxu0
    %v2003 = vadd.f32 %v1959, %v2002
    %v2004 = vand.u32 %v1849, 4294901760
    %v2005 = vsub.f32 %v1849, %v2004
    %2006 = vmatmul.f32.gmra.mxu0 %v2005
    %v2007 = vpop.f32.mrf.mxu0
    %v2008 = vadd.f32 %v1963, %v2007
    %2009 = vdwg.mxu0
    %2010 = vmatpush.xpose.msra.mxu0 0.0
    %2011 = vmatpush.xpose.msra.mxu0 0.0
    %2012 = vmatpush.xpose.msra.mxu0 0.0
    %2013 = vmatpush.xpose.msra.mxu0 0.0
    %2014 = vmatpush.xpose.msra.mxu0 0.0
    %2015 = vmatpush.xpose.msra.mxu0 0.0
    %2016 = vmatpush.xpose.msra.mxu0 0.0
    %2017 = vmatpush.xpose.msra.mxu0 0.0
    %2018 = vmatpush.xpose.msra.mxu0 0.0
    %2019 = vmatpush.xpose.msra.mxu0 0.0
    %2020 = vmatpush.xpose.msra.mxu0 0.0
    %2021 = vmatpush.xpose.msra.mxu0 0.0
    %v2022 = vand.u32 %v1857, 4294901760
    %2023 = vmatpush.xpose.msra.mxu0 %v2022
    %v2024 = vand.u32 %v1855, 4294901760
    %2025 = vmatpush.xpose.msra.mxu0 %v2024
    %v2026 = vand.u32 %v1853, 4294901760
    %2027 = vmatpush.xpose.msra.mxu0 %v2026
    %v2028 = vand.u32 %v1851, 4294901760
    %2029 = vmatpush.xpose.msra.mxu0 %v2028
    %v2030 = vand.u32 %v1843, 4294901760
    %v2031 = vsub.f32 %v1843, %v2030
    %v2032 = vand.u32 %v2031, 4294901760
    %2033 = vmatmul.f32.gmra.mxu0 %v2032
    %v2034 = vpop.f32.mrf.mxu0
    %v2035 = vadd.f32 %v1993, %v2034
    %v2036 = vand.u32 %v1845, 4294901760
    %v2037 = vsub.f32 %v1845, %v2036
    %v2038 = vand.u32 %v2037, 4294901760
    %2039 = vmatmul.f32.gmra.mxu0 %v2038
    %v2040 = vpop.f32.mrf.mxu0
    %v2041 = vadd.f32 %v1998, %v2040
    %v2042 = vand.u32 %v1847, 4294901760
    %v2043 = vsub.f32 %v1847, %v2042
    %v2044 = vand.u32 %v2043, 4294901760
    %2045 = vmatmul.f32.gmra.mxu0 %v2044
    %v2046 = vpop.f32.mrf.mxu0
    %v2047 = vadd.f32 %v2003, %v2046
    %v2048 = vand.u32 %v1849, 4294901760
    %v2049 = vsub.f32 %v1849, %v2048
    %v2050 = vand.u32 %v2049, 4294901760
    %2051 = vmatmul.f32.gmra.mxu0 %v2050
    %v2052 = vpop.f32.mrf.mxu0
    %v2053 = vadd.f32 %v2008, %v2052
    %2054 = vdwg.mxu0
    %2055 = vmatpush.xpose.msra.mxu0 0.0
    %2056 = vmatpush.xpose.msra.mxu0 0.0
    %2057 = vmatpush.xpose.msra.mxu0 0.0
    %2058 = vmatpush.xpose.msra.mxu0 0.0
    %2059 = vmatpush.xpose.msra.mxu0 0.0
    %2060 = vmatpush.xpose.msra.mxu0 0.0
    %2061 = vmatpush.xpose.msra.mxu0 0.0
    %2062 = vmatpush.xpose.msra.mxu0 0.0
    %2063 = vmatpush.xpose.msra.mxu0 0.0
    %2064 = vmatpush.xpose.msra.mxu0 0.0
    %2065 = vmatpush.xpose.msra.mxu0 0.0
    %2066 = vmatpush.xpose.msra.mxu0 0.0
    %v2067 = vand.u32 %v1857, 4294901760
    %v2068 = vsub.f32 %v1857, %v2067
    %v2069 = vand.u32 %v2068, 4294901760
    %2070 = vmatpush.xpose.msra.mxu0 %v2069
    %v2071 = vand.u32 %v1855, 4294901760
    %v2072 = vsub.f32 %v1855, %v2071
    %v2073 = vand.u32 %v2072, 4294901760
    %2074 = vmatpush.xpose.msra.mxu0 %v2073
    %v2075 = vand.u32 %v1853, 4294901760
    %v2076 = vsub.f32 %v1853, %v2075
    %v2077 = vand.u32 %v2076, 4294901760
    %2078 = vmatpush.xpose.msra.mxu0 %v2077
    %v2079 = vand.u32 %v1851, 4294901760
    %v2080 = vsub.f32 %v1851, %v2079
    %v2081 = vand.u32 %v2080, 4294901760
    %2082 = vmatpush.xpose.msra.mxu0 %v2081
    %v2083 = vand.u32 %v1843, 4294901760
    %2084 = vmatmul.f32.gmra.mxu0 %v2083
    %v2085 = vpop.f32.mrf.mxu0
    %v2086 = vadd.f32 %v2035, %v2085
    %v2087 = vand.u32 %v1845, 4294901760
    %2088 = vmatmul.f32.gmra.mxu0 %v2087
    %v2089 = vpop.f32.mrf.mxu0
    %v2090 = vadd.f32 %v2041, %v2089
    %v2091 = vand.u32 %v1847, 4294901760
    %2092 = vmatmul.f32.gmra.mxu0 %v2091
    %v2093 = vpop.f32.mrf.mxu0
    %v2094 = vadd.f32 %v2047, %v2093
    %v2095 = vand.u32 %v1849, 4294901760
    %2096 = vmatmul.f32.gmra.mxu0 %v2095
    %v2097 = vpop.f32.mrf.mxu0
    %v2098 = vadd.f32 %v2053, %v2097
    %2099 = vdwg.mxu0
    %2100 = vmatpush.xpose.msra.mxu0 0.0
    %2101 = vmatpush.xpose.msra.mxu0 0.0
    %2102 = vmatpush.xpose.msra.mxu0 0.0
    %2103 = vmatpush.xpose.msra.mxu0 0.0
    %2104 = vmatpush.xpose.msra.mxu0 0.0
    %2105 = vmatpush.xpose.msra.mxu0 0.0
    %2106 = vmatpush.xpose.msra.mxu0 0.0
    %2107 = vmatpush.xpose.msra.mxu0 0.0
    %2108 = vmatpush.xpose.msra.mxu0 0.0
    %2109 = vmatpush.xpose.msra.mxu0 0.0
    %2110 = vmatpush.xpose.msra.mxu0 0.0
    %2111 = vmatpush.xpose.msra.mxu0 0.0
    %v2112 = vand.u32 %v1857, 4294901760
    %2113 = vmatpush.xpose.msra.mxu0 %v2112
    %v2114 = vand.u32 %v1855, 4294901760
    %2115 = vmatpush.xpose.msra.mxu0 %v2114
    %v2116 = vand.u32 %v1853, 4294901760
    %2117 = vmatpush.xpose.msra.mxu0 %v2116
    %v2118 = vand.u32 %v1851, 4294901760
    %2119 = vmatpush.xpose.msra.mxu0 %v2118
    %v2120 = vand.u32 %v1843, 4294901760
    %2121 = vmatmul.f32.gmra.mxu0 %v2120
    %v2122 = vpop.f32.mrf.mxu0
    %v2123 = vadd.f32 %v2086, %v2122
    %v2124 = vand.u32 %v1845, 4294901760
    %2125 = vmatmul.f32.gmra.mxu0 %v2124
    %v2126 = vpop.f32.mrf.mxu0
    %v2127 = vadd.f32 %v2090, %v2126
    %v2128 = vand.u32 %v1847, 4294901760
    %2129 = vmatmul.f32.gmra.mxu0 %v2128
    %v2130 = vpop.f32.mrf.mxu0
    %v2131 = vadd.f32 %v2094, %v2130
    %v2132 = vand.u32 %v1849, 4294901760
    %2133 = vmatmul.f32.gmra.mxu0 %v2132
    %v2134 = vpop.f32.mrf.mxu0
    %v2135 = vadd.f32 %v2098, %v2134
    %2136 = vdwg.mxu0
    %v2137 = vsel %vm52, %v2123, -inf
    %2138 = vmax.xlane.f32.xlu0 %v2137
    %v2139 = vpop.xlane.xlu0 %2138
    %v2140 = vsel %vm52, %v2127, -inf
    %2141 = vmax.xlane.f32.xlu0 %v2140
    %v2142 = vpop.xlane.xlu0 %2141
    %v2143 = vsel %vm52, %v2131, -inf
    %2144 = vmax.xlane.f32.xlu0 %v2143
    %v2145 = vpop.xlane.xlu0 %2144
    %v2146 = vsel %vm52, %v2135, -inf
    %2147 = vmax.xlane.f32.xlu0 %v2146
    %v2148 = vpop.xlane.xlu0 %2147
    %v2149 = vsub.f32 %v2123, %v2139
    %v2150 = vsub.f32 %v2127, %v2142
    %v2151 = vsub.f32 %v2131, %v2145
    %v2152 = vsub.f32 %v2135, %v2148
    %v2153 = vmul.f32 %v2149, 1.442695
    %v2154 = vpow.pop %v2153
    %v2155 = vmul.f32 %v2150, 1.442695
    %v2156 = vpow.pop %v2155
    %v2157 = vmul.f32 %v2151, 1.442695
    %v2158 = vpow.pop %v2157
    %v2159 = vmul.f32 %v2152, 1.442695
    %v2160 = vpow.pop %v2159
    %v2161 = vsel %vm52, %v2154, 0.0
    %2162 = vadd.xlane.f32.xlu0 %v2161
    %v2163 = vpop.xlane.xlu0 %2162
    %v2164 = vsel %vm52, %v2156, 0.0
    %2165 = vadd.xlane.f32.xlu0 %v2164
    %v2166 = vpop.xlane.xlu0 %2165
    %v2167 = vsel %vm52, %v2158, 0.0
    %2168 = vadd.xlane.f32.xlu0 %v2167
    %v2169 = vpop.xlane.xlu0 %2168
    %v2170 = vsel %vm52, %v2160, 0.0
    %2171 = vadd.xlane.f32.xlu0 %v2170
    %v2172 = vpop.xlane.xlu0 %2171
    %v2173 = vrcp.pop %v2163
    %v2174 = vmul.f32 %v2163, %v2173
    %v2175 = vsub.f32 1.0, %v2174
    %v2176 = vmul.f32 %v2173, %v2175
    %v2177 = vadd.f32 %v2173, %v2176
    %vm2178 = vweird.f32 %v2163
    %vm2179 = vweird.f32 %v2173
    %vm2180 = vmor %vm2178, %vm2179
    %v2181 = vsel %vm2180, %v2173, %v2177
    %v2182 = vand.u32 2147483647, %v2163
    %vm2183 = vcmp.eq.f32.partialorder %v2182, 8.507059e+37
    %v2184 = vand.u32 %v2163, 2147483648
    %v2185 = vor.u32 1.1754944e-38, %v2184
    %v2186 = vsel %vm2183, %v2185, %v2181
    %v2187 = vmul.f32 1.0, %v2186
    %v2188 = vrcp.pop %v2166
    %v2189 = vmul.f32 %v2166, %v2188
    %v2190 = vsub.f32 1.0, %v2189
    %v2191 = vmul.f32 %v2188, %v2190
    %v2192 = vadd.f32 %v2188, %v2191
    %vm2193 = vweird.f32 %v2166
    %vm2194 = vweird.f32 %v2188
    %vm2195 = vmor %vm2193, %vm2194
    %v2196 = vsel %vm2195, %v2188, %v2192
    %v2197 = vand.u32 2147483647, %v2166
    %vm2198 = vcmp.eq.f32.partialorder %v2197, 8.507059e+37
    %v2199 = vand.u32 %v2166, 2147483648
    %v2200 = vor.u32 1.1754944e-38, %v2199
    %v2201 = vsel %vm2198, %v2200, %v2196
    %v2202 = vmul.f32 1.0, %v2201
    %v2203 = vrcp.pop %v2169
    %v2204 = vmul.f32 %v2169, %v2203
    %v2205 = vsub.f32 1.0, %v2204
    %v2206 = vmul.f32 %v2203, %v2205
    %v2207 = vadd.f32 %v2203, %v2206
    %vm2208 = vweird.f32 %v2169
    %vm2209 = vweird.f32 %v2203
    %vm2210 = vmor %vm2208, %vm2209
    %v2211 = vsel %vm2210, %v2203, %v2207
    %v2212 = vand.u32 2147483647, %v2169
    %vm2213 = vcmp.eq.f32.partialorder %v2212, 8.507059e+37
    %v2214 = vand.u32 %v2169, 2147483648
    %v2215 = vor.u32 1.1754944e-38, %v2214
    %v2216 = vsel %vm2213, %v2215, %v2211
    %v2217 = vmul.f32 1.0, %v2216
    %v2218 = vrcp.pop %v2172
    %v2219 = vmul.f32 %v2172, %v2218
    %v2220 = vsub.f32 1.0, %v2219
    %v2221 = vmul.f32 %v2218, %v2220
    %v2222 = vadd.f32 %v2218, %v2221
    %vm2223 = vweird.f32 %v2172
    %vm2224 = vweird.f32 %v2218
    %vm2225 = vmor %vm2223, %vm2224
    %v2226 = vsel %vm2225, %v2218, %v2222
    %v2227 = vand.u32 2147483647, %v2172
    %vm2228 = vcmp.eq.f32.partialorder %v2227, 8.507059e+37
    %v2229 = vand.u32 %v2172, 2147483648
    %v2230 = vor.u32 1.1754944e-38, %v2229
    %v2231 = vsel %vm2228, %v2230, %v2226
    %v2232 = vmul.f32 1.0, %v2231
    %v2233 = vmul.f32 %v2154, %v2187
    %v2234 = vmul.f32 %v2156, %v2202
    %v2235 = vmul.f32 %v2158, %v2217
    %v2236 = vmul.f32 %v2160, %v2232
    %2237 = vrot.lane.b32.xlu0 %v329, 48
    %v2238 = vpop.permute.xlu0 %2237
    %2239 = vrot.lane.b32.xlu0 %v333, 48
    %v2240 = vpop.permute.xlu0 %2239
    %2241 = vrot.lane.b32.xlu0 %v337, 48
    %v2242 = vpop.permute.xlu0 %2241
    %2243 = vrot.lane.b32.xlu0 %v341, 48
    %v2244 = vpop.permute.xlu0 %2243
    %v2250 = vsel %vm52, %v2233, 0
    %v2253 = vsel %vm52, %v2234, 0
    %v2256 = vsel %vm52, %v2235, 0
    %v2259 = vsel %vm52, %v2236, 0
    %2261 = vmatpush.msra.mxu0 0.0
    %2262 = vmatpush.msra.mxu0 0.0
    %2263 = vmatpush.msra.mxu0 0.0
    %2264 = vmatpush.msra.mxu0 0.0
    %2265 = vmatpush.msra.mxu0 0.0
    %2266 = vmatpush.msra.mxu0 0.0
    %2267 = vmatpush.msra.mxu0 0.0
    %2268 = vmatpush.msra.mxu0 0.0
    %2269 = vmatpush.msra.mxu0 0.0
    %2270 = vmatpush.msra.mxu0 0.0
    %2271 = vmatpush.msra.mxu0 0.0
    %2272 = vmatpush.msra.mxu0 0.0
    %v2273 = vand.u32 %v2244, 4294901760
    %2274 = vmatpush.msra.mxu0 %v2273
    %v2275 = vand.u32 %v2242, 4294901760
    %2276 = vmatpush.msra.mxu0 %v2275
    %v2277 = vand.u32 %v2240, 4294901760
    %2278 = vmatpush.msra.mxu0 %v2277
    %v2279 = vand.u32 %v2238, 4294901760
    %2280 = vmatpush.msra.mxu0 %v2279
    %v2281 = vand.u32 %v2250, 4294901760
    %v2282 = vsub.f32 %v2250, %v2281
    %v2283 = vand.u32 %v2282, 4294901760
    %v2284 = vsub.f32 %v2282, %v2283
    %v2285 = vand.u32 %v2284, 4294901760
    %2286 = vmatmul.f32.gmra.mxu0 %v2285
    %v2287 = vpop.f32.mrf.mxu0
    %v2288 = vadd.f32 0.0, %v2287
    %v2289 = vand.u32 %v2253, 4294901760
    %v2290 = vsub.f32 %v2253, %v2289
    %v2291 = vand.u32 %v2290, 4294901760
    %v2292 = vsub.f32 %v2290, %v2291
    %v2293 = vand.u32 %v2292, 4294901760
    %2294 = vmatmul.f32.gmra.mxu0 %v2293
    %v2295 = vpop.f32.mrf.mxu0
    %v2296 = vadd.f32 0.0, %v2295
    %v2297 = vand.u32 %v2256, 4294901760
    %v2298 = vsub.f32 %v2256, %v2297
    %v2299 = vand.u32 %v2298, 4294901760
    %v2300 = vsub.f32 %v2298, %v2299
    %v2301 = vand.u32 %v2300, 4294901760
    %2302 = vmatmul.f32.gmra.mxu0 %v2301
    %v2303 = vpop.f32.mrf.mxu0
    %v2304 = vadd.f32 0.0, %v2303
    %v2305 = vand.u32 %v2259, 4294901760
    %v2306 = vsub.f32 %v2259, %v2305
    %v2307 = vand.u32 %v2306, 4294901760
    %v2308 = vsub.f32 %v2306, %v2307
    %v2309 = vand.u32 %v2308, 4294901760
    %2310 = vmatmul.f32.gmra.mxu0 %v2309
    %v2311 = vpop.f32.mrf.mxu0
    %v2312 = vadd.f32 0.0, %v2311
    %2313 = vdwg.mxu0
    %2314 = vmatpush.msra.mxu0 0.0
    %2315 = vmatpush.msra.mxu0 0.0
    %2316 = vmatpush.msra.mxu0 0.0
    %2317 = vmatpush.msra.mxu0 0.0
    %2318 = vmatpush.msra.mxu0 0.0
    %2319 = vmatpush.msra.mxu0 0.0
    %2320 = vmatpush.msra.mxu0 0.0
    %2321 = vmatpush.msra.mxu0 0.0
    %2322 = vmatpush.msra.mxu0 0.0
    %2323 = vmatpush.msra.mxu0 0.0
    %2324 = vmatpush.msra.mxu0 0.0
    %2325 = vmatpush.msra.mxu0 0.0
    %v2326 = vand.u32 %v2244, 4294901760
    %v2327 = vsub.f32 %v2244, %v2326
    %v2328 = vand.u32 %v2327, 4294901760
    %v2329 = vsub.f32 %v2327, %v2328
    %v2330 = vand.u32 %v2329, 4294901760
    %2331 = vmatpush.msra.mxu0 %v2330
    %v2332 = vand.u32 %v2242, 4294901760
    %v2333 = vsub.f32 %v2242, %v2332
    %v2334 = vand.u32 %v2333, 4294901760
    %v2335 = vsub.f32 %v2333, %v2334
    %v2336 = vand.u32 %v2335, 4294901760
    %2337 = vmatpush.msra.mxu0 %v2336
    %v2338 = vand.u32 %v2240, 4294901760
    %v2339 = vsub.f32 %v2240, %v2338
    %v2340 = vand.u32 %v2339, 4294901760
    %v2341 = vsub.f32 %v2339, %v2340
    %v2342 = vand.u32 %v2341, 4294901760
    %2343 = vmatpush.msra.mxu0 %v2342
    %v2344 = vand.u32 %v2238, 4294901760
    %v2345 = vsub.f32 %v2238, %v2344
    %v2346 = vand.u32 %v2345, 4294901760
    %v2347 = vsub.f32 %v2345, %v2346
    %v2348 = vand.u32 %v2347, 4294901760
    %2349 = vmatpush.msra.mxu0 %v2348
    %v2350 = vand.u32 %v2250, 4294901760
    %2351 = vmatmul.f32.gmra.mxu0 %v2350
    %v2352 = vpop.f32.mrf.mxu0
    %v2353 = vadd.f32 %v2288, %v2352
    %v2354 = vand.u32 %v2253, 4294901760
    %2355 = vmatmul.f32.gmra.mxu0 %v2354
    %v2356 = vpop.f32.mrf.mxu0
    %v2357 = vadd.f32 %v2296, %v2356
    %v2358 = vand.u32 %v2256, 4294901760
    %2359 = vmatmul.f32.gmra.mxu0 %v2358
    %v2360 = vpop.f32.mrf.mxu0
    %v2361 = vadd.f32 %v2304, %v2360
    %v2362 = vand.u32 %v2259, 4294901760
    %2363 = vmatmul.f32.gmra.mxu0 %v2362
    %v2364 = vpop.f32.mrf.mxu0
    %v2365 = vadd.f32 %v2312, %v2364
    %2366 = vdwg.mxu0
    %2367 = vmatpush.msra.mxu0 0.0
    %2368 = vmatpush.msra.mxu0 0.0
    %2369 = vmatpush.msra.mxu0 0.0
    %2370 = vmatpush.msra.mxu0 0.0
    %2371 = vmatpush.msra.mxu0 0.0
    %2372 = vmatpush.msra.mxu0 0.0
    %2373 = vmatpush.msra.mxu0 0.0
    %2374 = vmatpush.msra.mxu0 0.0
    %2375 = vmatpush.msra.mxu0 0.0
    %2376 = vmatpush.msra.mxu0 0.0
    %2377 = vmatpush.msra.mxu0 0.0
    %2378 = vmatpush.msra.mxu0 0.0
    %v2379 = vand.u32 %v2244, 4294901760
    %v2380 = vsub.f32 %v2244, %v2379
    %2381 = vmatpush.msra.mxu0 %v2380
    %v2382 = vand.u32 %v2242, 4294901760
    %v2383 = vsub.f32 %v2242, %v2382
    %2384 = vmatpush.msra.mxu0 %v2383
    %v2385 = vand.u32 %v2240, 4294901760
    %v2386 = vsub.f32 %v2240, %v2385
    %2387 = vmatpush.msra.mxu0 %v2386
    %v2388 = vand.u32 %v2238, 4294901760
    %v2389 = vsub.f32 %v2238, %v2388
    %2390 = vmatpush.msra.mxu0 %v2389
    %v2391 = vand.u32 %v2250, 4294901760
    %v2392 = vsub.f32 %v2250, %v2391
    %2393 = vmatmul.f32.gmra.mxu0 %v2392
    %v2394 = vpop.f32.mrf.mxu0
    %v2395 = vadd.f32 %v2353, %v2394
    %v2396 = vand.u32 %v2253, 4294901760
    %v2397 = vsub.f32 %v2253, %v2396
    %2398 = vmatmul.f32.gmra.mxu0 %v2397
    %v2399 = vpop.f32.mrf.mxu0
    %v2400 = vadd.f32 %v2357, %v2399
    %v2401 = vand.u32 %v2256, 4294901760
    %v2402 = vsub.f32 %v2256, %v2401
    %2403 = vmatmul.f32.gmra.mxu0 %v2402
    %v2404 = vpop.f32.mrf.mxu0
    %v2405 = vadd.f32 %v2361, %v2404
    %v2406 = vand.u32 %v2259, 4294901760
    %v2407 = vsub.f32 %v2259, %v2406
    %2408 = vmatmul.f32.gmra.mxu0 %v2407
    %v2409 = vpop.f32.mrf.mxu0
    %v2410 = vadd.f32 %v2365, %v2409
    %2411 = vdwg.mxu0
    %2412 = vmatpush.msra.mxu0 0.0
    %2413 = vmatpush.msra.mxu0 0.0
    %2414 = vmatpush.msra.mxu0 0.0
    %2415 = vmatpush.msra.mxu0 0.0
    %2416 = vmatpush.msra.mxu0 0.0
    %2417 = vmatpush.msra.mxu0 0.0
    %2418 = vmatpush.msra.mxu0 0.0
    %2419 = vmatpush.msra.mxu0 0.0
    %2420 = vmatpush.msra.mxu0 0.0
    %2421 = vmatpush.msra.mxu0 0.0
    %2422 = vmatpush.msra.mxu0 0.0
    %2423 = vmatpush.msra.mxu0 0.0
    %v2424 = vand.u32 %v2244, 4294901760
    %2425 = vmatpush.msra.mxu0 %v2424
    %v2426 = vand.u32 %v2242, 4294901760
    %2427 = vmatpush.msra.mxu0 %v2426
    %v2428 = vand.u32 %v2240, 4294901760
    %2429 = vmatpush.msra.mxu0 %v2428
    %v2430 = vand.u32 %v2238, 4294901760
    %2431 = vmatpush.msra.mxu0 %v2430
    %v2432 = vand.u32 %v2250, 4294901760
    %v2433 = vsub.f32 %v2250, %v2432
    %v2434 = vand.u32 %v2433, 4294901760
    %2435 = vmatmul.f32.gmra.mxu0 %v2434
    %v2436 = vpop.f32.mrf.mxu0
    %v2437 = vadd.f32 %v2395, %v2436
    %v2438 = vand.u32 %v2253, 4294901760
    %v2439 = vsub.f32 %v2253, %v2438
    %v2440 = vand.u32 %v2439, 4294901760
    %2441 = vmatmul.f32.gmra.mxu0 %v2440
    %v2442 = vpop.f32.mrf.mxu0
    %v2443 = vadd.f32 %v2400, %v2442
    %v2444 = vand.u32 %v2256, 4294901760
    %v2445 = vsub.f32 %v2256, %v2444
    %v2446 = vand.u32 %v2445, 4294901760
    %2447 = vmatmul.f32.gmra.mxu0 %v2446
    %v2448 = vpop.f32.mrf.mxu0
    %v2449 = vadd.f32 %v2405, %v2448
    %v2450 = vand.u32 %v2259, 4294901760
    %v2451 = vsub.f32 %v2259, %v2450
    %v2452 = vand.u32 %v2451, 4294901760
    %2453 = vmatmul.f32.gmra.mxu0 %v2452
    %v2454 = vpop.f32.mrf.mxu0
    %v2455 = vadd.f32 %v2410, %v2454
    %2456 = vdwg.mxu0
    %2457 = vmatpush.msra.mxu0 0.0
    %2458 = vmatpush.msra.mxu0 0.0
    %2459 = vmatpush.msra.mxu0 0.0
    %2460 = vmatpush.msra.mxu0 0.0
    %2461 = vmatpush.msra.mxu0 0.0
    %2462 = vmatpush.msra.mxu0 0.0
    %2463 = vmatpush.msra.mxu0 0.0
    %2464 = vmatpush.msra.mxu0 0.0
    %2465 = vmatpush.msra.mxu0 0.0
    %2466 = vmatpush.msra.mxu0 0.0
    %2467 = vmatpush.msra.mxu0 0.0
    %2468 = vmatpush.msra.mxu0 0.0
    %v2469 = vand.u32 %v2244, 4294901760
    %v2470 = vsub.f32 %v2244, %v2469
    %v2471 = vand.u32 %v2470, 4294901760
    %2472 = vmatpush.msra.mxu0 %v2471
    %v2473 = vand.u32 %v2242, 4294901760
    %v2474 = vsub.f32 %v2242, %v2473
    %v2475 = vand.u32 %v2474, 4294901760
    %2476 = vmatpush.msra.mxu0 %v2475
    %v2477 = vand.u32 %v2240, 4294901760
    %v2478 = vsub.f32 %v2240, %v2477
    %v2479 = vand.u32 %v2478, 4294901760
    %2480 = vmatpush.msra.mxu0 %v2479
    %v2481 = vand.u32 %v2238, 4294901760
    %v2482 = vsub.f32 %v2238, %v2481
    %v2483 = vand.u32 %v2482, 4294901760
    %2484 = vmatpush.msra.mxu0 %v2483
    %v2485 = vand.u32 %v2250, 4294901760
    %2486 = vmatmul.f32.gmra.mxu0 %v2485
    %v2487 = vpop.f32.mrf.mxu0
    %v2488 = vadd.f32 %v2437, %v2487
    %v2489 = vand.u32 %v2253, 4294901760
    %2490 = vmatmul.f32.gmra.mxu0 %v2489
    %v2491 = vpop.f32.mrf.mxu0
    %v2492 = vadd.f32 %v2443, %v2491
    %v2493 = vand.u32 %v2256, 4294901760
    %2494 = vmatmul.f32.gmra.mxu0 %v2493
    %v2495 = vpop.f32.mrf.mxu0
    %v2496 = vadd.f32 %v2449, %v2495
    %v2497 = vand.u32 %v2259, 4294901760
    %2498 = vmatmul.f32.gmra.mxu0 %v2497
    %v2499 = vpop.f32.mrf.mxu0
    %v2500 = vadd.f32 %v2455, %v2499
    %2501 = vdwg.mxu0
    %2502 = vmatpush.msra.mxu0 0.0
    %2503 = vmatpush.msra.mxu0 0.0
    %2504 = vmatpush.msra.mxu0 0.0
    %2505 = vmatpush.msra.mxu0 0.0
    %2506 = vmatpush.msra.mxu0 0.0
    %2507 = vmatpush.msra.mxu0 0.0
    %2508 = vmatpush.msra.mxu0 0.0
    %2509 = vmatpush.msra.mxu0 0.0
    %2510 = vmatpush.msra.mxu0 0.0
    %2511 = vmatpush.msra.mxu0 0.0
    %2512 = vmatpush.msra.mxu0 0.0
    %2513 = vmatpush.msra.mxu0 0.0
    %v2514 = vand.u32 %v2244, 4294901760
    %2515 = vmatpush.msra.mxu0 %v2514
    %v2516 = vand.u32 %v2242, 4294901760
    %2517 = vmatpush.msra.mxu0 %v2516
    %v2518 = vand.u32 %v2240, 4294901760
    %2519 = vmatpush.msra.mxu0 %v2518
    %v2520 = vand.u32 %v2238, 4294901760
    %2521 = vmatpush.msra.mxu0 %v2520
    %v2522 = vand.u32 %v2250, 4294901760
    %2523 = vmatmul.f32.gmra.mxu0 %v2522
    %v2524 = vpop.f32.mrf.mxu0
    %v2525 = vadd.f32 %v2488, %v2524
    %v2526 = vand.u32 %v2253, 4294901760
    %2527 = vmatmul.f32.gmra.mxu0 %v2526
    %v2528 = vpop.f32.mrf.mxu0
    %v2529 = vadd.f32 %v2492, %v2528
    %v2530 = vand.u32 %v2256, 4294901760
    %2531 = vmatmul.f32.gmra.mxu0 %v2530
    %v2532 = vpop.f32.mrf.mxu0
    %v2533 = vadd.f32 %v2496, %v2532
    %v2534 = vand.u32 %v2259, 4294901760
    %2535 = vmatmul.f32.gmra.mxu0 %v2534
    %v2536 = vpop.f32.mrf.mxu0
    %v2537 = vadd.f32 %v2500, %v2536
    %2538 = vdwg.mxu0
    %2539 = vrot.lane.b32.xlu0 %v329, 104
    %v2540 = vpop.permute.xlu0 %2539
    %2541 = vrot.lane.b32.xlu0 %v333, 104
    %v2542 = vpop.permute.xlu0 %2541
    %2543 = vrot.lane.b32.xlu0 %v337, 104
    %v2544 = vpop.permute.xlu0 %2543
    %2545 = vrot.lane.b32.xlu0 %v341, 104
    %v2546 = vpop.permute.xlu0 %2545
    %2547 = vrot.lane.b32.xlu0 %v329, 72
    %v2548 = vpop.permute.xlu0 %2547
    %2549 = vrot.lane.b32.xlu0 %v333, 72
    %v2550 = vpop.permute.xlu0 %2549
    %2551 = vrot.lane.b32.xlu0 %v337, 72
    %v2552 = vpop.permute.xlu0 %2551
    %2553 = vrot.lane.b32.xlu0 %v341, 72
    %v2554 = vpop.permute.xlu0 %2553
    %v2555 = vsel %vm418, %v2540, 0
    %v2557 = vsel %vm418, %v2542, 0
    %v2559 = vsel %vm418, %v2544, 0
    %v2561 = vsel %vm418, %v2546, 0
    %v2563 = vsel %vm418, %v2548, 0
    %v2565 = vsel %vm418, %v2550, 0
    %v2567 = vsel %vm418, %v2552, 0
    %v2569 = vsel %vm418, %v2554, 0
    %2571 = vmatpush.xpose.msra.mxu0 0.0
    %2572 = vmatpush.xpose.msra.mxu0 0.0
    %2573 = vmatpush.xpose.msra.mxu0 0.0
    %2574 = vmatpush.xpose.msra.mxu0 0.0
    %2575 = vmatpush.xpose.msra.mxu0 0.0
    %2576 = vmatpush.xpose.msra.mxu0 0.0
    %2577 = vmatpush.xpose.msra.mxu0 0.0
    %2578 = vmatpush.xpose.msra.mxu0 0.0
    %2579 = vmatpush.xpose.msra.mxu0 0.0
    %2580 = vmatpush.xpose.msra.mxu0 0.0
    %2581 = vmatpush.xpose.msra.mxu0 0.0
    %2582 = vmatpush.xpose.msra.mxu0 0.0
    %v2583 = vand.u32 %v2569, 4294901760
    %2584 = vmatpush.xpose.msra.mxu0 %v2583
    %v2585 = vand.u32 %v2567, 4294901760
    %2586 = vmatpush.xpose.msra.mxu0 %v2585
    %v2587 = vand.u32 %v2565, 4294901760
    %2588 = vmatpush.xpose.msra.mxu0 %v2587
    %v2589 = vand.u32 %v2563, 4294901760
    %2590 = vmatpush.xpose.msra.mxu0 %v2589
    %v2591 = vand.u32 %v2555, 4294901760
    %v2592 = vsub.f32 %v2555, %v2591
    %v2593 = vand.u32 %v2592, 4294901760
    %v2594 = vsub.f32 %v2592, %v2593
    %v2595 = vand.u32 %v2594, 4294901760
    %2596 = vmatmul.f32.gmra.mxu0 %v2595
    %v2597 = vpop.f32.mrf.mxu0
    %v2598 = vadd.f32 %v402, %v2597
    %v2599 = vand.u32 %v2557, 4294901760
    %v2600 = vsub.f32 %v2557, %v2599
    %v2601 = vand.u32 %v2600, 4294901760
    %v2602 = vsub.f32 %v2600, %v2601
    %v2603 = vand.u32 %v2602, 4294901760
    %2604 = vmatmul.f32.gmra.mxu0 %v2603
    %v2605 = vpop.f32.mrf.mxu0
    %v2606 = vadd.f32 %v403, %v2605
    %v2607 = vand.u32 %v2559, 4294901760
    %v2608 = vsub.f32 %v2559, %v2607
    %v2609 = vand.u32 %v2608, 4294901760
    %v2610 = vsub.f32 %v2608, %v2609
    %v2611 = vand.u32 %v2610, 4294901760
    %2612 = vmatmul.f32.gmra.mxu0 %v2611
    %v2613 = vpop.f32.mrf.mxu0
    %v2614 = vadd.f32 %v404, %v2613
    %v2615 = vand.u32 %v2561, 4294901760
    %v2616 = vsub.f32 %v2561, %v2615
    %v2617 = vand.u32 %v2616, 4294901760
    %v2618 = vsub.f32 %v2616, %v2617
    %v2619 = vand.u32 %v2618, 4294901760
    %2620 = vmatmul.f32.gmra.mxu0 %v2619
    %v2621 = vpop.f32.mrf.mxu0
    %v2622 = vadd.f32 %v405, %v2621
    %2623 = vdwg.mxu0
    %2624 = vmatpush.xpose.msra.mxu0 0.0
    %2625 = vmatpush.xpose.msra.mxu0 0.0
    %2626 = vmatpush.xpose.msra.mxu0 0.0
    %2627 = vmatpush.xpose.msra.mxu0 0.0
    %2628 = vmatpush.xpose.msra.mxu0 0.0
    %2629 = vmatpush.xpose.msra.mxu0 0.0
    %2630 = vmatpush.xpose.msra.mxu0 0.0
    %2631 = vmatpush.xpose.msra.mxu0 0.0
    %2632 = vmatpush.xpose.msra.mxu0 0.0
    %2633 = vmatpush.xpose.msra.mxu0 0.0
    %2634 = vmatpush.xpose.msra.mxu0 0.0
    %2635 = vmatpush.xpose.msra.mxu0 0.0
    %v2636 = vand.u32 %v2569, 4294901760
    %v2637 = vsub.f32 %v2569, %v2636
    %v2638 = vand.u32 %v2637, 4294901760
    %v2639 = vsub.f32 %v2637, %v2638
    %v2640 = vand.u32 %v2639, 4294901760
    %2641 = vmatpush.xpose.msra.mxu0 %v2640
    %v2642 = vand.u32 %v2567, 4294901760
    %v2643 = vsub.f32 %v2567, %v2642
    %v2644 = vand.u32 %v2643, 4294901760
    %v2645 = vsub.f32 %v2643, %v2644
    %v2646 = vand.u32 %v2645, 4294901760
    %2647 = vmatpush.xpose.msra.mxu0 %v2646
    %v2648 = vand.u32 %v2565, 4294901760
    %v2649 = vsub.f32 %v2565, %v2648
    %v2650 = vand.u32 %v2649, 4294901760
    %v2651 = vsub.f32 %v2649, %v2650
    %v2652 = vand.u32 %v2651, 4294901760
    %2653 = vmatpush.xpose.msra.mxu0 %v2652
    %v2654 = vand.u32 %v2563, 4294901760
    %v2655 = vsub.f32 %v2563, %v2654
    %v2656 = vand.u32 %v2655, 4294901760
    %v2657 = vsub.f32 %v2655, %v2656
    %v2658 = vand.u32 %v2657, 4294901760
    %2659 = vmatpush.xpose.msra.mxu0 %v2658
    %v2660 = vand.u32 %v2555, 4294901760
    %2661 = vmatmul.f32.gmra.mxu0 %v2660
    %v2662 = vpop.f32.mrf.mxu0
    %v2663 = vadd.f32 %v2598, %v2662
    %v2664 = vand.u32 %v2557, 4294901760
    %2665 = vmatmul.f32.gmra.mxu0 %v2664
    %v2666 = vpop.f32.mrf.mxu0
    %v2667 = vadd.f32 %v2606, %v2666
    %v2668 = vand.u32 %v2559, 4294901760
    %2669 = vmatmul.f32.gmra.mxu0 %v2668
    %v2670 = vpop.f32.mrf.mxu0
    %v2671 = vadd.f32 %v2614, %v2670
    %v2672 = vand.u32 %v2561, 4294901760
    %2673 = vmatmul.f32.gmra.mxu0 %v2672
    %v2674 = vpop.f32.mrf.mxu0
    %v2675 = vadd.f32 %v2622, %v2674
    %2676 = vdwg.mxu0
    %2677 = vmatpush.xpose.msra.mxu0 0.0
    %2678 = vmatpush.xpose.msra.mxu0 0.0
    %2679 = vmatpush.xpose.msra.mxu0 0.0
    %2680 = vmatpush.xpose.msra.mxu0 0.0
    %2681 = vmatpush.xpose.msra.mxu0 0.0
    %2682 = vmatpush.xpose.msra.mxu0 0.0
    %2683 = vmatpush.xpose.msra.mxu0 0.0
    %2684 = vmatpush.xpose.msra.mxu0 0.0
    %2685 = vmatpush.xpose.msra.mxu0 0.0
    %2686 = vmatpush.xpose.msra.mxu0 0.0
    %2687 = vmatpush.xpose.msra.mxu0 0.0
    %2688 = vmatpush.xpose.msra.mxu0 0.0
    %v2689 = vand.u32 %v2569, 4294901760
    %v2690 = vsub.f32 %v2569, %v2689
    %2691 = vmatpush.xpose.msra.mxu0 %v2690
    %v2692 = vand.u32 %v2567, 4294901760
    %v2693 = vsub.f32 %v2567, %v2692
    %2694 = vmatpush.xpose.msra.mxu0 %v2693
    %v2695 = vand.u32 %v2565, 4294901760
    %v2696 = vsub.f32 %v2565, %v2695
    %2697 = vmatpush.xpose.msra.mxu0 %v2696
    %v2698 = vand.u32 %v2563, 4294901760
    %v2699 = vsub.f32 %v2563, %v2698
    %2700 = vmatpush.xpose.msra.mxu0 %v2699
    %v2701 = vand.u32 %v2555, 4294901760
    %v2702 = vsub.f32 %v2555, %v2701
    %2703 = vmatmul.f32.gmra.mxu0 %v2702
    %v2704 = vpop.f32.mrf.mxu0
    %v2705 = vadd.f32 %v2663, %v2704
    %v2706 = vand.u32 %v2557, 4294901760
    %v2707 = vsub.f32 %v2557, %v2706
    %2708 = vmatmul.f32.gmra.mxu0 %v2707
    %v2709 = vpop.f32.mrf.mxu0
    %v2710 = vadd.f32 %v2667, %v2709
    %v2711 = vand.u32 %v2559, 4294901760
    %v2712 = vsub.f32 %v2559, %v2711
    %2713 = vmatmul.f32.gmra.mxu0 %v2712
    %v2714 = vpop.f32.mrf.mxu0
    %v2715 = vadd.f32 %v2671, %v2714
    %v2716 = vand.u32 %v2561, 4294901760
    %v2717 = vsub.f32 %v2561, %v2716
    %2718 = vmatmul.f32.gmra.mxu0 %v2717
    %v2719 = vpop.f32.mrf.mxu0
    %v2720 = vadd.f32 %v2675, %v2719
    %2721 = vdwg.mxu0
    %2722 = vmatpush.xpose.msra.mxu0 0.0
    %2723 = vmatpush.xpose.msra.mxu0 0.0
    %2724 = vmatpush.xpose.msra.mxu0 0.0
    %2725 = vmatpush.xpose.msra.mxu0 0.0
    %2726 = vmatpush.xpose.msra.mxu0 0.0
    %2727 = vmatpush.xpose.msra.mxu0 0.0
    %2728 = vmatpush.xpose.msra.mxu0 0.0
    %2729 = vmatpush.xpose.msra.mxu0 0.0
    %2730 = vmatpush.xpose.msra.mxu0 0.0
    %2731 = vmatpush.xpose.msra.mxu0 0.0
    %2732 = vmatpush.xpose.msra.mxu0 0.0
    %2733 = vmatpush.xpose.msra.mxu0 0.0
    %v2734 = vand.u32 %v2569, 4294901760
    %2735 = vmatpush.xpose.msra.mxu0 %v2734
    %v2736 = vand.u32 %v2567, 4294901760
    %2737 = vmatpush.xpose.msra.mxu0 %v2736
    %v2738 = vand.u32 %v2565, 4294901760
    %2739 = vmatpush.xpose.msra.mxu0 %v2738
    %v2740 = vand.u32 %v2563, 4294901760
    %2741 = vmatpush.xpose.msra.mxu0 %v2740
    %v2742 = vand.u32 %v2555, 4294901760
    %v2743 = vsub.f32 %v2555, %v2742
    %v2744 = vand.u32 %v2743, 4294901760
    %2745 = vmatmul.f32.gmra.mxu0 %v2744
    %v2746 = vpop.f32.mrf.mxu0
    %v2747 = vadd.f32 %v2705, %v2746
    %v2748 = vand.u32 %v2557, 4294901760
    %v2749 = vsub.f32 %v2557, %v2748
    %v2750 = vand.u32 %v2749, 4294901760
    %2751 = vmatmul.f32.gmra.mxu0 %v2750
    %v2752 = vpop.f32.mrf.mxu0
    %v2753 = vadd.f32 %v2710, %v2752
    %v2754 = vand.u32 %v2559, 4294901760
    %v2755 = vsub.f32 %v2559, %v2754
    %v2756 = vand.u32 %v2755, 4294901760
    %2757 = vmatmul.f32.gmra.mxu0 %v2756
    %v2758 = vpop.f32.mrf.mxu0
    %v2759 = vadd.f32 %v2715, %v2758
    %v2760 = vand.u32 %v2561, 4294901760
    %v2761 = vsub.f32 %v2561, %v2760
    %v2762 = vand.u32 %v2761, 4294901760
    %2763 = vmatmul.f32.gmra.mxu0 %v2762
    %v2764 = vpop.f32.mrf.mxu0
    %v2765 = vadd.f32 %v2720, %v2764
    %2766 = vdwg.mxu0
    %2767 = vmatpush.xpose.msra.mxu0 0.0
    %2768 = vmatpush.xpose.msra.mxu0 0.0
    %2769 = vmatpush.xpose.msra.mxu0 0.0
    %2770 = vmatpush.xpose.msra.mxu0 0.0
    %2771 = vmatpush.xpose.msra.mxu0 0.0
    %2772 = vmatpush.xpose.msra.mxu0 0.0
    %2773 = vmatpush.xpose.msra.mxu0 0.0
    %2774 = vmatpush.xpose.msra.mxu0 0.0
    %2775 = vmatpush.xpose.msra.mxu0 0.0
    %2776 = vmatpush.xpose.msra.mxu0 0.0
    %2777 = vmatpush.xpose.msra.mxu0 0.0
    %2778 = vmatpush.xpose.msra.mxu0 0.0
    %v2779 = vand.u32 %v2569, 4294901760
    %v2780 = vsub.f32 %v2569, %v2779
    %v2781 = vand.u32 %v2780, 4294901760
    %2782 = vmatpush.xpose.msra.mxu0 %v2781
    %v2783 = vand.u32 %v2567, 4294901760
    %v2784 = vsub.f32 %v2567, %v2783
    %v2785 = vand.u32 %v2784, 4294901760
    %2786 = vmatpush.xpose.msra.mxu0 %v2785
    %v2787 = vand.u32 %v2565, 4294901760
    %v2788 = vsub.f32 %v2565, %v2787
    %v2789 = vand.u32 %v2788, 4294901760
    %2790 = vmatpush.xpose.msra.mxu0 %v2789
    %v2791 = vand.u32 %v2563, 4294901760
    %v2792 = vsub.f32 %v2563, %v2791
    %v2793 = vand.u32 %v2792, 4294901760
    %2794 = vmatpush.xpose.msra.mxu0 %v2793
    %v2795 = vand.u32 %v2555, 4294901760
    %2796 = vmatmul.f32.gmra.mxu0 %v2795
    %v2797 = vpop.f32.mrf.mxu0
    %v2798 = vadd.f32 %v2747, %v2797
    %v2799 = vand.u32 %v2557, 4294901760
    %2800 = vmatmul.f32.gmra.mxu0 %v2799
    %v2801 = vpop.f32.mrf.mxu0
    %v2802 = vadd.f32 %v2753, %v2801
    %v2803 = vand.u32 %v2559, 4294901760
    %2804 = vmatmul.f32.gmra.mxu0 %v2803
    %v2805 = vpop.f32.mrf.mxu0
    %v2806 = vadd.f32 %v2759, %v2805
    %v2807 = vand.u32 %v2561, 4294901760
    %2808 = vmatmul.f32.gmra.mxu0 %v2807
    %v2809 = vpop.f32.mrf.mxu0
    %v2810 = vadd.f32 %v2765, %v2809
    %2811 = vdwg.mxu0
    %2812 = vmatpush.xpose.msra.mxu0 0.0
    %2813 = vmatpush.xpose.msra.mxu0 0.0
    %2814 = vmatpush.xpose.msra.mxu0 0.0
    %2815 = vmatpush.xpose.msra.mxu0 0.0
    %2816 = vmatpush.xpose.msra.mxu0 0.0
    %2817 = vmatpush.xpose.msra.mxu0 0.0
    %2818 = vmatpush.xpose.msra.mxu0 0.0
    %2819 = vmatpush.xpose.msra.mxu0 0.0
    %2820 = vmatpush.xpose.msra.mxu0 0.0
    %2821 = vmatpush.xpose.msra.mxu0 0.0
    %2822 = vmatpush.xpose.msra.mxu0 0.0
    %2823 = vmatpush.xpose.msra.mxu0 0.0
    %v2824 = vand.u32 %v2569, 4294901760
    %2825 = vmatpush.xpose.msra.mxu0 %v2824
    %v2826 = vand.u32 %v2567, 4294901760
    %2827 = vmatpush.xpose.msra.mxu0 %v2826
    %v2828 = vand.u32 %v2565, 4294901760
    %2829 = vmatpush.xpose.msra.mxu0 %v2828
    %v2830 = vand.u32 %v2563, 4294901760
    %2831 = vmatpush.xpose.msra.mxu0 %v2830
    %v2832 = vand.u32 %v2555, 4294901760
    %2833 = vmatmul.f32.gmra.mxu0 %v2832
    %v2834 = vpop.f32.mrf.mxu0
    %v2835 = vadd.f32 %v2798, %v2834
    %v2836 = vand.u32 %v2557, 4294901760
    %2837 = vmatmul.f32.gmra.mxu0 %v2836
    %v2838 = vpop.f32.mrf.mxu0
    %v2839 = vadd.f32 %v2802, %v2838
    %v2840 = vand.u32 %v2559, 4294901760
    %2841 = vmatmul.f32.gmra.mxu0 %v2840
    %v2842 = vpop.f32.mrf.mxu0
    %v2843 = vadd.f32 %v2806, %v2842
    %v2844 = vand.u32 %v2561, 4294901760
    %2845 = vmatmul.f32.gmra.mxu0 %v2844
    %v2846 = vpop.f32.mrf.mxu0
    %v2847 = vadd.f32 %v2810, %v2846
    %2848 = vdwg.mxu0
    %v2849 = vsel %vm52, %v2835, -inf
    %2850 = vmax.xlane.f32.xlu0 %v2849
    %v2851 = vpop.xlane.xlu0 %2850
    %v2852 = vsel %vm52, %v2839, -inf
    %2853 = vmax.xlane.f32.xlu0 %v2852
    %v2854 = vpop.xlane.xlu0 %2853
    %v2855 = vsel %vm52, %v2843, -inf
    %2856 = vmax.xlane.f32.xlu0 %v2855
    %v2857 = vpop.xlane.xlu0 %2856
    %v2858 = vsel %vm52, %v2847, -inf
    %2859 = vmax.xlane.f32.xlu0 %v2858
    %v2860 = vpop.xlane.xlu0 %2859
    %v2861 = vsub.f32 %v2835, %v2851
    %v2862 = vsub.f32 %v2839, %v2854
    %v2863 = vsub.f32 %v2843, %v2857
    %v2864 = vsub.f32 %v2847, %v2860
    %v2865 = vmul.f32 %v2861, 1.442695
    %v2866 = vpow.pop %v2865
    %v2867 = vmul.f32 %v2862, 1.442695
    %v2868 = vpow.pop %v2867
    %v2869 = vmul.f32 %v2863, 1.442695
    %v2870 = vpow.pop %v2869
    %v2871 = vmul.f32 %v2864, 1.442695
    %v2872 = vpow.pop %v2871
    %v2873 = vsel %vm52, %v2866, 0.0
    %2874 = vadd.xlane.f32.xlu0 %v2873
    %v2875 = vpop.xlane.xlu0 %2874
    %v2876 = vsel %vm52, %v2868, 0.0
    %2877 = vadd.xlane.f32.xlu0 %v2876
    %v2878 = vpop.xlane.xlu0 %2877
    %v2879 = vsel %vm52, %v2870, 0.0
    %2880 = vadd.xlane.f32.xlu0 %v2879
    %v2881 = vpop.xlane.xlu0 %2880
    %v2882 = vsel %vm52, %v2872, 0.0
    %2883 = vadd.xlane.f32.xlu0 %v2882
    %v2884 = vpop.xlane.xlu0 %2883
    %v2885 = vrcp.pop %v2875
    %v2886 = vmul.f32 %v2875, %v2885
    %v2887 = vsub.f32 1.0, %v2886
    %v2888 = vmul.f32 %v2885, %v2887
    %v2889 = vadd.f32 %v2885, %v2888
    %vm2890 = vweird.f32 %v2875
    %vm2891 = vweird.f32 %v2885
    %vm2892 = vmor %vm2890, %vm2891
    %v2893 = vsel %vm2892, %v2885, %v2889
    %v2894 = vand.u32 2147483647, %v2875
    %vm2895 = vcmp.eq.f32.partialorder %v2894, 8.507059e+37
    %v2896 = vand.u32 %v2875, 2147483648
    %v2897 = vor.u32 1.1754944e-38, %v2896
    %v2898 = vsel %vm2895, %v2897, %v2893
    %v2899 = vmul.f32 1.0, %v2898
    %v2900 = vrcp.pop %v2878
    %v2901 = vmul.f32 %v2878, %v2900
    %v2902 = vsub.f32 1.0, %v2901
    %v2903 = vmul.f32 %v2900, %v2902
    %v2904 = vadd.f32 %v2900, %v2903
    %vm2905 = vweird.f32 %v2878
    %vm2906 = vweird.f32 %v2900
    %vm2907 = vmor %vm2905, %vm2906
    %v2908 = vsel %vm2907, %v2900, %v2904
    %v2909 = vand.u32 2147483647, %v2878
    %vm2910 = vcmp.eq.f32.partialorder %v2909, 8.507059e+37
    %v2911 = vand.u32 %v2878, 2147483648
    %v2912 = vor.u32 1.1754944e-38, %v2911
    %v2913 = vsel %vm2910, %v2912, %v2908
    %v2914 = vmul.f32 1.0, %v2913
    %v2915 = vrcp.pop %v2881
    %v2916 = vmul.f32 %v2881, %v2915
    %v2917 = vsub.f32 1.0, %v2916
    %v2918 = vmul.f32 %v2915, %v2917
    %v2919 = vadd.f32 %v2915, %v2918
    %vm2920 = vweird.f32 %v2881
    %vm2921 = vweird.f32 %v2915
    %vm2922 = vmor %vm2920, %vm2921
    %v2923 = vsel %vm2922, %v2915, %v2919
    %v2924 = vand.u32 2147483647, %v2881
    %vm2925 = vcmp.eq.f32.partialorder %v2924, 8.507059e+37
    %v2926 = vand.u32 %v2881, 2147483648
    %v2927 = vor.u32 1.1754944e-38, %v2926
    %v2928 = vsel %vm2925, %v2927, %v2923
    %v2929 = vmul.f32 1.0, %v2928
    %v2930 = vrcp.pop %v2884
    %v2931 = vmul.f32 %v2884, %v2930
    %v2932 = vsub.f32 1.0, %v2931
    %v2933 = vmul.f32 %v2930, %v2932
    %v2934 = vadd.f32 %v2930, %v2933
    %vm2935 = vweird.f32 %v2884
    %vm2936 = vweird.f32 %v2930
    %vm2937 = vmor %vm2935, %vm2936
    %v2938 = vsel %vm2937, %v2930, %v2934
    %v2939 = vand.u32 2147483647, %v2884
    %vm2940 = vcmp.eq.f32.partialorder %v2939, 8.507059e+37
    %v2941 = vand.u32 %v2884, 2147483648
    %v2942 = vor.u32 1.1754944e-38, %v2941
    %v2943 = vsel %vm2940, %v2942, %v2938
    %v2944 = vmul.f32 1.0, %v2943
    %v2945 = vmul.f32 %v2866, %v2899
    %v2946 = vmul.f32 %v2868, %v2914
    %v2947 = vmul.f32 %v2870, %v2929
    %v2948 = vmul.f32 %v2872, %v2944
    %2949 = vrot.lane.b32.xlu0 %v329, 40
    %v2950 = vpop.permute.xlu0 %2949
    %2951 = vrot.lane.b32.xlu0 %v333, 40
    %v2952 = vpop.permute.xlu0 %2951
    %2953 = vrot.lane.b32.xlu0 %v337, 40
    %v2954 = vpop.permute.xlu0 %2953
    %2955 = vrot.lane.b32.xlu0 %v341, 40
    %v2956 = vpop.permute.xlu0 %2955
    %v2962 = vsel %vm52, %v2945, 0
    %v2965 = vsel %vm52, %v2946, 0
    %v2968 = vsel %vm52, %v2947, 0
    %v2971 = vsel %vm52, %v2948, 0
    %2973 = vmatpush.msra.mxu0 0.0
    %2974 = vmatpush.msra.mxu0 0.0
    %2975 = vmatpush.msra.mxu0 0.0
    %2976 = vmatpush.msra.mxu0 0.0
    %2977 = vmatpush.msra.mxu0 0.0
    %2978 = vmatpush.msra.mxu0 0.0
    %2979 = vmatpush.msra.mxu0 0.0
    %2980 = vmatpush.msra.mxu0 0.0
    %2981 = vmatpush.msra.mxu0 0.0
    %2982 = vmatpush.msra.mxu0 0.0
    %2983 = vmatpush.msra.mxu0 0.0
    %2984 = vmatpush.msra.mxu0 0.0
    %v2985 = vand.u32 %v2956, 4294901760
    %2986 = vmatpush.msra.mxu0 %v2985
    %v2987 = vand.u32 %v2954, 4294901760
    %2988 = vmatpush.msra.mxu0 %v2987
    %v2989 = vand.u32 %v2952, 4294901760
    %2990 = vmatpush.msra.mxu0 %v2989
    %v2991 = vand.u32 %v2950, 4294901760
    %2992 = vmatpush.msra.mxu0 %v2991
    %v2993 = vand.u32 %v2962, 4294901760
    %v2994 = vsub.f32 %v2962, %v2993
    %v2995 = vand.u32 %v2994, 4294901760
    %v2996 = vsub.f32 %v2994, %v2995
    %v2997 = vand.u32 %v2996, 4294901760
    %2998 = vmatmul.f32.gmra.mxu0 %v2997
    %v2999 = vpop.f32.mrf.mxu0
    %v3000 = vadd.f32 0.0, %v2999
    %v3001 = vand.u32 %v2965, 4294901760
    %v3002 = vsub.f32 %v2965, %v3001
    %v3003 = vand.u32 %v3002, 4294901760
    %v3004 = vsub.f32 %v3002, %v3003
    %v3005 = vand.u32 %v3004, 4294901760
    %3006 = vmatmul.f32.gmra.mxu0 %v3005
    %v3007 = vpop.f32.mrf.mxu0
    %v3008 = vadd.f32 0.0, %v3007
    %v3009 = vand.u32 %v2968, 4294901760
    %v3010 = vsub.f32 %v2968, %v3009
    %v3011 = vand.u32 %v3010, 4294901760
    %v3012 = vsub.f32 %v3010, %v3011
    %v3013 = vand.u32 %v3012, 4294901760
    %3014 = vmatmul.f32.gmra.mxu0 %v3013
    %v3015 = vpop.f32.mrf.mxu0
    %v3016 = vadd.f32 0.0, %v3015
    %v3017 = vand.u32 %v2971, 4294901760
    %v3018 = vsub.f32 %v2971, %v3017
    %v3019 = vand.u32 %v3018, 4294901760
    %v3020 = vsub.f32 %v3018, %v3019
    %v3021 = vand.u32 %v3020, 4294901760
    %3022 = vmatmul.f32.gmra.mxu0 %v3021
    %v3023 = vpop.f32.mrf.mxu0
    %v3024 = vadd.f32 0.0, %v3023
    %3025 = vdwg.mxu0
    %3026 = vmatpush.msra.mxu0 0.0
    %3027 = vmatpush.msra.mxu0 0.0
    %3028 = vmatpush.msra.mxu0 0.0
    %3029 = vmatpush.msra.mxu0 0.0
    %3030 = vmatpush.msra.mxu0 0.0
    %3031 = vmatpush.msra.mxu0 0.0
    %3032 = vmatpush.msra.mxu0 0.0
    %3033 = vmatpush.msra.mxu0 0.0
    %3034 = vmatpush.msra.mxu0 0.0
    %3035 = vmatpush.msra.mxu0 0.0
    %3036 = vmatpush.msra.mxu0 0.0
    %3037 = vmatpush.msra.mxu0 0.0
    %v3038 = vand.u32 %v2956, 4294901760
    %v3039 = vsub.f32 %v2956, %v3038
    %v3040 = vand.u32 %v3039, 4294901760
    %v3041 = vsub.f32 %v3039, %v3040
    %v3042 = vand.u32 %v3041, 4294901760
    %3043 = vmatpush.msra.mxu0 %v3042
    %v3044 = vand.u32 %v2954, 4294901760
    %v3045 = vsub.f32 %v2954, %v3044
    %v3046 = vand.u32 %v3045, 4294901760
    %v3047 = vsub.f32 %v3045, %v3046
    %v3048 = vand.u32 %v3047, 4294901760
    %3049 = vmatpush.msra.mxu0 %v3048
    %v3050 = vand.u32 %v2952, 4294901760
    %v3051 = vsub.f32 %v2952, %v3050
    %v3052 = vand.u32 %v3051, 4294901760
    %v3053 = vsub.f32 %v3051, %v3052
    %v3054 = vand.u32 %v3053, 4294901760
    %3055 = vmatpush.msra.mxu0 %v3054
    %v3056 = vand.u32 %v2950, 4294901760
    %v3057 = vsub.f32 %v2950, %v3056
    %v3058 = vand.u32 %v3057, 4294901760
    %v3059 = vsub.f32 %v3057, %v3058
    %v3060 = vand.u32 %v3059, 4294901760
    %3061 = vmatpush.msra.mxu0 %v3060
    %v3062 = vand.u32 %v2962, 4294901760
    %3063 = vmatmul.f32.gmra.mxu0 %v3062
    %v3064 = vpop.f32.mrf.mxu0
    %v3065 = vadd.f32 %v3000, %v3064
    %v3066 = vand.u32 %v2965, 4294901760
    %3067 = vmatmul.f32.gmra.mxu0 %v3066
    %v3068 = vpop.f32.mrf.mxu0
    %v3069 = vadd.f32 %v3008, %v3068
    %v3070 = vand.u32 %v2968, 4294901760
    %3071 = vmatmul.f32.gmra.mxu0 %v3070
    %v3072 = vpop.f32.mrf.mxu0
    %v3073 = vadd.f32 %v3016, %v3072
    %v3074 = vand.u32 %v2971, 4294901760
    %3075 = vmatmul.f32.gmra.mxu0 %v3074
    %v3076 = vpop.f32.mrf.mxu0
    %v3077 = vadd.f32 %v3024, %v3076
    %3078 = vdwg.mxu0
    %3079 = vmatpush.msra.mxu0 0.0
    %3080 = vmatpush.msra.mxu0 0.0
    %3081 = vmatpush.msra.mxu0 0.0
    %3082 = vmatpush.msra.mxu0 0.0
    %3083 = vmatpush.msra.mxu0 0.0
    %3084 = vmatpush.msra.mxu0 0.0
    %3085 = vmatpush.msra.mxu0 0.0
    %3086 = vmatpush.msra.mxu0 0.0
    %3087 = vmatpush.msra.mxu0 0.0
    %3088 = vmatpush.msra.mxu0 0.0
    %3089 = vmatpush.msra.mxu0 0.0
    %3090 = vmatpush.msra.mxu0 0.0
    %v3091 = vand.u32 %v2956, 4294901760
    %v3092 = vsub.f32 %v2956, %v3091
    %3093 = vmatpush.msra.mxu0 %v3092
    %v3094 = vand.u32 %v2954, 4294901760
    %v3095 = vsub.f32 %v2954, %v3094
    %3096 = vmatpush.msra.mxu0 %v3095
    %v3097 = vand.u32 %v2952, 4294901760
    %v3098 = vsub.f32 %v2952, %v3097
    %3099 = vmatpush.msra.mxu0 %v3098
    %v3100 = vand.u32 %v2950, 4294901760
    %v3101 = vsub.f32 %v2950, %v3100
    %3102 = vmatpush.msra.mxu0 %v3101
    %v3103 = vand.u32 %v2962, 4294901760
    %v3104 = vsub.f32 %v2962, %v3103
    %3105 = vmatmul.f32.gmra.mxu0 %v3104
    %v3106 = vpop.f32.mrf.mxu0
    %v3107 = vadd.f32 %v3065, %v3106
    %v3108 = vand.u32 %v2965, 4294901760
    %v3109 = vsub.f32 %v2965, %v3108
    %3110 = vmatmul.f32.gmra.mxu0 %v3109
    %v3111 = vpop.f32.mrf.mxu0
    %v3112 = vadd.f32 %v3069, %v3111
    %v3113 = vand.u32 %v2968, 4294901760
    %v3114 = vsub.f32 %v2968, %v3113
    %3115 = vmatmul.f32.gmra.mxu0 %v3114
    %v3116 = vpop.f32.mrf.mxu0
    %v3117 = vadd.f32 %v3073, %v3116
    %v3118 = vand.u32 %v2971, 4294901760
    %v3119 = vsub.f32 %v2971, %v3118
    %3120 = vmatmul.f32.gmra.mxu0 %v3119
    %v3121 = vpop.f32.mrf.mxu0
    %v3122 = vadd.f32 %v3077, %v3121
    %3123 = vdwg.mxu0
    %3124 = vmatpush.msra.mxu0 0.0
    %3125 = vmatpush.msra.mxu0 0.0
    %3126 = vmatpush.msra.mxu0 0.0
    %3127 = vmatpush.msra.mxu0 0.0
    %3128 = vmatpush.msra.mxu0 0.0
    %3129 = vmatpush.msra.mxu0 0.0
    %3130 = vmatpush.msra.mxu0 0.0
    %3131 = vmatpush.msra.mxu0 0.0
    %3132 = vmatpush.msra.mxu0 0.0
    %3133 = vmatpush.msra.mxu0 0.0
    %3134 = vmatpush.msra.mxu0 0.0
    %3135 = vmatpush.msra.mxu0 0.0
    %v3136 = vand.u32 %v2956, 4294901760
    %3137 = vmatpush.msra.mxu0 %v3136
    %v3138 = vand.u32 %v2954, 4294901760
    %3139 = vmatpush.msra.mxu0 %v3138
    %v3140 = vand.u32 %v2952, 4294901760
    %3141 = vmatpush.msra.mxu0 %v3140
    %v3142 = vand.u32 %v2950, 4294901760
    %3143 = vmatpush.msra.mxu0 %v3142
    %v3144 = vand.u32 %v2962, 4294901760
    %v3145 = vsub.f32 %v2962, %v3144
    %v3146 = vand.u32 %v3145, 4294901760
    %3147 = vmatmul.f32.gmra.mxu0 %v3146
    %v3148 = vpop.f32.mrf.mxu0
    %v3149 = vadd.f32 %v3107, %v3148
    %v3150 = vand.u32 %v2965, 4294901760
    %v3151 = vsub.f32 %v2965, %v3150
    %v3152 = vand.u32 %v3151, 4294901760
    %3153 = vmatmul.f32.gmra.mxu0 %v3152
    %v3154 = vpop.f32.mrf.mxu0
    %v3155 = vadd.f32 %v3112, %v3154
    %v3156 = vand.u32 %v2968, 4294901760
    %v3157 = vsub.f32 %v2968, %v3156
    %v3158 = vand.u32 %v3157, 4294901760
    %3159 = vmatmul.f32.gmra.mxu0 %v3158
    %v3160 = vpop.f32.mrf.mxu0
    %v3161 = vadd.f32 %v3117, %v3160
    %v3162 = vand.u32 %v2971, 4294901760
    %v3163 = vsub.f32 %v2971, %v3162
    %v3164 = vand.u32 %v3163, 4294901760
    %3165 = vmatmul.f32.gmra.mxu0 %v3164
    %v3166 = vpop.f32.mrf.mxu0
    %v3167 = vadd.f32 %v3122, %v3166
    %3168 = vdwg.mxu0
    %3169 = vmatpush.msra.mxu0 0.0
    %3170 = vmatpush.msra.mxu0 0.0
    %3171 = vmatpush.msra.mxu0 0.0
    %3172 = vmatpush.msra.mxu0 0.0
    %3173 = vmatpush.msra.mxu0 0.0
    %3174 = vmatpush.msra.mxu0 0.0
    %3175 = vmatpush.msra.mxu0 0.0
    %3176 = vmatpush.msra.mxu0 0.0
    %3177 = vmatpush.msra.mxu0 0.0
    %3178 = vmatpush.msra.mxu0 0.0
    %3179 = vmatpush.msra.mxu0 0.0
    %3180 = vmatpush.msra.mxu0 0.0
    %v3181 = vand.u32 %v2956, 4294901760
    %v3182 = vsub.f32 %v2956, %v3181
    %v3183 = vand.u32 %v3182, 4294901760
    %3184 = vmatpush.msra.mxu0 %v3183
    %v3185 = vand.u32 %v2954, 4294901760
    %v3186 = vsub.f32 %v2954, %v3185
    %v3187 = vand.u32 %v3186, 4294901760
    %3188 = vmatpush.msra.mxu0 %v3187
    %v3189 = vand.u32 %v2952, 4294901760
    %v3190 = vsub.f32 %v2952, %v3189
    %v3191 = vand.u32 %v3190, 4294901760
    %3192 = vmatpush.msra.mxu0 %v3191
    %v3193 = vand.u32 %v2950, 4294901760
    %v3194 = vsub.f32 %v2950, %v3193
    %v3195 = vand.u32 %v3194, 4294901760
    %3196 = vmatpush.msra.mxu0 %v3195
    %v3197 = vand.u32 %v2962, 4294901760
    %3198 = vmatmul.f32.gmra.mxu0 %v3197
    %v3199 = vpop.f32.mrf.mxu0
    %v3200 = vadd.f32 %v3149, %v3199
    %v3201 = vand.u32 %v2965, 4294901760
    %3202 = vmatmul.f32.gmra.mxu0 %v3201
    %v3203 = vpop.f32.mrf.mxu0
    %v3204 = vadd.f32 %v3155, %v3203
    %v3205 = vand.u32 %v2968, 4294901760
    %3206 = vmatmul.f32.gmra.mxu0 %v3205
    %v3207 = vpop.f32.mrf.mxu0
    %v3208 = vadd.f32 %v3161, %v3207
    %v3209 = vand.u32 %v2971, 4294901760
    %3210 = vmatmul.f32.gmra.mxu0 %v3209
    %v3211 = vpop.f32.mrf.mxu0
    %v3212 = vadd.f32 %v3167, %v3211
    %3213 = vdwg.mxu0
    %3214 = vmatpush.msra.mxu0 0.0
    %3215 = vmatpush.msra.mxu0 0.0
    %3216 = vmatpush.msra.mxu0 0.0
    %3217 = vmatpush.msra.mxu0 0.0
    %3218 = vmatpush.msra.mxu0 0.0
    %3219 = vmatpush.msra.mxu0 0.0
    %3220 = vmatpush.msra.mxu0 0.0
    %3221 = vmatpush.msra.mxu0 0.0
    %3222 = vmatpush.msra.mxu0 0.0
    %3223 = vmatpush.msra.mxu0 0.0
    %3224 = vmatpush.msra.mxu0 0.0
    %3225 = vmatpush.msra.mxu0 0.0
    %v3226 = vand.u32 %v2956, 4294901760
    %3227 = vmatpush.msra.mxu0 %v3226
    %v3228 = vand.u32 %v2954, 4294901760
    %3229 = vmatpush.msra.mxu0 %v3228
    %v3230 = vand.u32 %v2952, 4294901760
    %3231 = vmatpush.msra.mxu0 %v3230
    %v3232 = vand.u32 %v2950, 4294901760
    %3233 = vmatpush.msra.mxu0 %v3232
    %v3234 = vand.u32 %v2962, 4294901760
    %3235 = vmatmul.f32.gmra.mxu0 %v3234
    %v3236 = vpop.f32.mrf.mxu0
    %v3237 = vadd.f32 %v3200, %v3236
    %v3238 = vand.u32 %v2965, 4294901760
    %3239 = vmatmul.f32.gmra.mxu0 %v3238
    %v3240 = vpop.f32.mrf.mxu0
    %v3241 = vadd.f32 %v3204, %v3240
    %v3242 = vand.u32 %v2968, 4294901760
    %3243 = vmatmul.f32.gmra.mxu0 %v3242
    %v3244 = vpop.f32.mrf.mxu0
    %v3245 = vadd.f32 %v3208, %v3244
    %v3246 = vand.u32 %v2971, 4294901760
    %3247 = vmatmul.f32.gmra.mxu0 %v3246
    %v3248 = vpop.f32.mrf.mxu0
    %v3249 = vadd.f32 %v3212, %v3248
    %3250 = vdwg.mxu0
    %3255 = vrot.lane.b32.xlu0 %v1813, 8
    %v3256 = vpop.permute.xlu0 %3255
    %3257 = vrot.lane.b32.xlu0 %v1817, 8
    %v3258 = vpop.permute.xlu0 %3257
    %3259 = vrot.lane.b32.xlu0 %v1821, 8
    %v3260 = vpop.permute.xlu0 %3259
    %3261 = vrot.lane.b32.xlu0 %v1825, 8
    %v3262 = vpop.permute.xlu0 %3261
    %3271 = vrot.lane.b32.xlu0 %v2525, 16
    %v3272 = vpop.permute.xlu0 %3271
    %3273 = vrot.lane.b32.xlu0 %v2529, 16
    %v3274 = vpop.permute.xlu0 %3273
    %3275 = vrot.lane.b32.xlu0 %v2533, 16
    %v3276 = vpop.permute.xlu0 %3275
    %3277 = vrot.lane.b32.xlu0 %v2537, 16
    %v3278 = vpop.permute.xlu0 %3277
    %3287 = vrot.lane.b32.xlu0 %v3237, 24
    %v3288 = vpop.permute.xlu0 %3287
    %3289 = vrot.lane.b32.xlu0 %v3241, 24
    %v3290 = vpop.permute.xlu0 %3289
    %3291 = vrot.lane.b32.xlu0 %v3245, 24
    %v3292 = vpop.permute.xlu0 %3291
    %3293 = vrot.lane.b32.xlu0 %v3249, 24
    %v3294 = vpop.permute.xlu0 %3293
    %v3299 = vsel %vm418, %v1101, %v3256
    %v3300 = vsel %vm418, %v1105, %v3258
    %v3301 = vsel %vm418, %v1109, %v3260
    %v3302 = vsel %vm418, %v1113, %v3262
    %vm3303 = vcmask 130048
    %v3304 = vsel %vm3303, %v3299, %v3272
    %v3305 = vsel %vm3303, %v3300, %v3274
    %v3306 = vsel %vm3303, %v3301, %v3276
    %v3307 = vsel %vm3303, %v3302, %v3278
    %vm3308 = vcmask 195584
    %v3309 = vsel %vm3308, %v3304, %v3288
    %v3310 = vsel %vm3308, %v3305, %v3290
    %v3311 = vsel %vm3308, %v3306, %v3292
    %v3312 = vsel %vm3308, %v3307, %v3294
    %3313 = vst.msk [vmem:[#allocation7] sm:$0xff] %vm52, %v3309
    %3314 = vst.msk [vmem:[#allocation7 + $0x8] sm:$0xff] %vm52, %v3310
    %3315 = vst.msk [vmem:[#allocation7 + $0x10] sm:$0xff] %vm52, %v3311
    %3316 = vst.msk [vmem:[#allocation7 + $0x18] sm:$0xff] %vm52, %v3312
    // Predicated region
    $region18: #{tpu_custom_call.1} parent=1 // pred_check
      _
    $region19: #{tpu_custom_call.1} parent=1 // pred_check_branch
      %3318 = sbr.rel (0) target = $region21
    $region20: #{tpu_custom_call.1} parent=1 // pred_region
      %3320 = vsyncadd [#allocation4], 0
      %s3321 = sshll.u32 [#allocation7], 4
      %s3322 = int_to_ptr.vmem [resolvable:$true] %s3321
      %s3323 = sshll.u32 %s2, 4
      %s3324 = int_to_ptr.hbm [resolvable:$true] %s3323
      %3329 = dma.vmem_to_hbm [thread:$0]  %s3322, 512, %s3324, [#allocation4], 128, 128, 8
    $region21: #{tpu_custom_call.1} parent=1 // pred_fallthru
      _
    // Predicated region
    $region22: #{tpu_custom_call.1} parent=1 // pred_check
      _
    $region23: #{tpu_custom_call.1} parent=1 // pred_check_branch
      %3331 = sbr.rel (0) target = $region25
    $region24: #{tpu_custom_call.1} parent=1 // pred_region
      %3333 = dma.done [#allocation4], 512
    $region25: #{tpu_custom_call.1} parent=1 // pred_fallthru
      _
    %3334 = vsyncpa [#allocation3], 1
    %3335 = vsyncpa [#allocation6], 1
    %3336 = vsyncpa [#allocation4], 1

</llo_original>
